<compile_context>
chip_gen: v6e
topology: v6e:2x2x1
jax: 0.10.0
libtpu: 0.0.40
codegen_flags: <defaults>
</compile_context>

<pallas_src>
from functools import partial

import jax
import jax.numpy as jnp
from jax.experimental import pallas as pl
from jax.experimental.pallas import tpu as pltpu

LN_EPS = 1e-5   # PyTorch nn.LayerNorm default eps
BN_EPS = 1e-5   # PyTorch nn.BatchNorm1d default eps


# --------------------------------------------------------------------------- #
# LayerNorm helpers
# --------------------------------------------------------------------------- #
def _layernorm_cols(x, g, b):
    """LayerNorm over the feature (sublane) axis of a (D, tm) tile.

    x: (D, tm) f32 with the batch on the 128-lane axis; g, b: (D, 1) columns.
    """
    mu = jnp.mean(x, axis=0, keepdims=True)
    xc = x - mu
    var = jnp.mean(xc * xc, axis=0, keepdims=True)
    return xc * jax.lax.rsqrt(var + LN_EPS) * g + b


def _layernorm_rows(x, g, b):
    """Row-layout LayerNorm (used only by the pure-JAX reference)."""
    mu = jnp.mean(x, axis=-1, keepdims=True)
    xc = x - mu
    var = jnp.mean(xc * xc, axis=-1, keepdims=True)
    return xc * jax.lax.rsqrt(var + LN_EPS) * g + b


# --------------------------------------------------------------------------- #
# Kernel (transposed layout: batch on lanes)
# --------------------------------------------------------------------------- #
def transformer_regressor_kernel(
    xT_ref,                                  # (D, tm)   f32 input columns
    wvo_ref, w1_ref, w2_ref,                 # bf16 (L,D,D) (L,F,D) (L,D,F)
    colD_ref,                                # (L, D, 8) f32 packed per-layer columns
    b1c_ref,                                 # (L, F, 1) f32
    wl_ref, blc_ref,                         # (OP, D) bf16, (OP, 1) f32 (BN folded)
    outT_ref,                                # (OP, tm)
    *, num_layers,
):
    x = xT_ref[...].astype(jnp.float32)      # (D, tm), batch on the 128-lane axis

    for l in range(num_layers):
        c = colD_ref[l]                      # (D, 8) f32: packed per-layer columns
        bvo, b2 = c[:, 0:1], c[:, 1:2]
        g1, be1 = c[:, 2:3], c[:, 3:4]
        g2, be2 = c[:, 4:5], c[:, 5:6]

        # self-attention with seq_len == 1 == out_proj(v_proj(x)), pre-folded:
        #   attn^T = (Wo Wv) @ x^T + (bv Wo^T + bo)^T
        attn = jnp.dot(wvo_ref[l], x.astype(jnp.bfloat16),
                       preferred_element_type=jnp.float32) + bvo
        x = _layernorm_cols(x + attn, g1, be1)        # dropout1 = identity (eval)

        # feed-forward: linear2(relu(linear1(x)))     (dropouts identity in eval)
        h = jnp.maximum(
            jnp.dot(w1_ref[l], x.astype(jnp.bfloat16),
                    preferred_element_type=jnp.float32) + b1c_ref[l],
            0.0,
        )
        ff = jnp.dot(w2_ref[l], h.astype(jnp.bfloat16),
                     preferred_element_type=jnp.float32) + b2
        x = _layernorm_cols(x + ff, g2, be2)

    # BatchNorm1d (eval) folded into the final Linear; output is (OP, tm).
    y = jnp.dot(wl_ref[...], x.astype(jnp.bfloat16),
                preferred_element_type=jnp.float32) + blc_ref[...]
    outT_ref[...] = y.astype(outT_ref.dtype)


# --------------------------------------------------------------------------- #
# Wrapper-side parameter folding / packing (done ONCE, outside the call path)
# --------------------------------------------------------------------------- #
def prepare_params(p):
    """Fold Wv@Wo, fold BN into the final Linear, transpose for the lane-dense
    layout, pack small vectors into column slabs, cast weights to bf16."""
    L, D, _ = p["wvT"].shape
    F = p["w1T"].shape[2]
    O = p["wlT"].shape[1]

    # fold V-proj + out-proj (exact for seq_len == 1); transpose for W @ x^T
    wvoT = jnp.einsum("lij,ljk->lik", p["wvT"], p["woT"])               # (L, D, D)
    wvo = jnp.swapaxes(wvoT, 1, 2)                                      # (L, D, D)
    bvo = jnp.einsum("lrj,ljk->lrk", p["bv"], p["woT"]) + p["bo"]       # (L, 1, D)

    def col(v):                                                         # (L,1,K)->(L,K,1)
        return jnp.swapaxes(v, 1, 2)

    # pack the six per-layer (D,) vectors as columns of one (L, D, 8) slab
    colD = jnp.concatenate(
        [col(bvo), col(p["b2"]), col(p["ln1_g"]), col(p["ln1_b"]),
         col(p["ln2_g"]), col(p["ln2_b"]), jnp.zeros((L, D, 2), jnp.float32)],
        axis=2,
    )                                                                   # (L, D, 8)

    w1 = jnp.swapaxes(p["w1T"], 1, 2)                                   # (L, F, D)
    w2 = jnp.swapaxes(p["w2T"], 1, 2)                                   # (L, D, F)
    b1c = col(p["b1"])                                                  # (L, F, 1)

    # fold eval-mode BatchNorm into the final Linear (exact algebra)
    scale = p["bn_g"] / jnp.sqrt(p["bn_var"] + BN_EPS)                  # (1, D)
    wl_f = p["wlT"] * scale.reshape(D, 1)                               # (D, O)
    bl_f = (p["bn_b"] - p["bn_mean"] * scale) @ p["wlT"] + p["bl"]      # (1, O)

    # transposed final Linear, output rows padded up to a multiple of 8 sublanes
    OP = max(8, ((O + 7) // 8) * 8)
    wl = jnp.pad(wl_f.T, ((0, OP - O), (0, 0)))                         # (OP, D)
    blc = jnp.pad(bl_f.T, ((0, OP - O), (0, 0)))                        # (OP, 1)

    folded = dict(
        wvo=wvo.astype(jnp.bfloat16),
        w1=w1.astype(jnp.bfloat16),
        w2=w2.astype(jnp.bfloat16),
        colD=colD.astype(jnp.float32),
        b1c=b1c.astype(jnp.float32),
        wl=wl.astype(jnp.bfloat16),
        blc=blc.astype(jnp.float32),
    )
    meta = dict(D=D, F=F, O=O, OP=OP)
    return folded, meta


def _pick_tiling(N):
    """Choose (padded_N, tm) with the batch on the 128-lane axis.

    The lane-axis tile must be a multiple of 128 or the full (padded) batch, so
    small batches use one full-extent tile; larger batches use 128/256-lane
    tiles (batch padded up), giving >= 2 grid steps so both v7x TensorCores
    receive work via dimension_semantics=("parallel",).
    """
    if N < 256:
        return N, N
    tm = 256 if N >= 1024 else 128
    Np = -(-N // tm) * tm
    return Np, tm


def _vmem_capacity_bytes():
    """Generation-aware VMEM capacity (64 MiB v7x, 128 MiB v5e/v6e)."""
    try:
        return int(pltpu.get_tpu_info().vmem_capacity_bytes)
    except Exception:
        return 64 << 20   # conservative fallback: v7x per-TensorCore VMEM


# --------------------------------------------------------------------------- #
# Jitted forward
# --------------------------------------------------------------------------- #
def _forward(x, fp, *, num_layers, D, F, O, OP):
    N = x.shape[0]
    Np, tm = _pick_tiling(N)
    grid = (Np // tm,)

    # batch on the lane axis: pad rows then transpose to (D, Np)
    xT = jnp.pad(x, ((0, Np - N), (0, 0))).T

    def const_spec(arr):
        nd = arr.ndim
        return pl.BlockSpec(arr.shape, lambda i, _nd=nd: (0,) * _nd)

    order = ("wvo", "w1", "w2", "colD", "b1c", "wl", "blc")
    in_specs = [pl.BlockSpec((D, tm), lambda i: (0, i))]
    in_specs += [const_spec(fp[k]) for k in order]
    args = [xT] + [fp[k] for k in order]

    L = num_layers
    weight_bytes = sum(int(a.size) * a.dtype.itemsize for a in args[1:])
    flops = int(2 * Np * L * (D * D + 2 * D * F) + 2 * Np * D * OP)
    bytes_accessed = int(xT.size * xT.dtype.itemsize + weight_bytes
                         + OP * Np * xT.dtype.itemsize)
    cost = pl.CostEstimate(flops=flops, transcendentals=int(2 * Np * L),
                           bytes_accessed=bytes_accessed)

    # VMEM accounting: the default pipeliner double-buffers EVERY input and the
    # output, so count 2x for all of them, plus f32 activation headroom and
    # compiler-internal scratch slack. Clamp to 85% of this generation's VMEM.
    vmem_needed = (2 * weight_bytes
                   + 2 * D * tm * x.dtype.itemsize
                   + 2 * OP * tm * x.dtype.itemsize
                   + 6 * max(D, F) * tm * 4
                   + (2 << 20))
    vmem_limit = int(min(max(vmem_needed, 8 << 20),
                         (85 * _vmem_capacity_bytes()) // 100))

    outT = pl.pallas_call(
        partial(transformer_regressor_kernel, num_layers=num_layers),
        out_shape=jax.ShapeDtypeStruct((OP, Np), x.dtype),
        grid=grid,
        in_specs=in_specs,
        out_specs=pl.BlockSpec((OP, tm), lambda i: (0, i)),
        compiler_params=pltpu.CompilerParams(
            dimension_semantics=("parallel",),
            vmem_limit_bytes=vmem_limit),
        cost_estimate=cost,
    )(*args)

    # strip sublane/lane padding and return to row layout (N, O)
    return outT[:O, :N].T


def make_transformer_regressor(raw_params, *, num_layers):
    """Fold / pack parameters ONCE and return a jitted forward(x) callable."""
    fp, meta = prepare_params(raw_params)          # runs eagerly, one time
    fwd = jax.jit(partial(_forward, num_layers=num_layers, **meta))

    def forward(x):
        return fwd(x, fp)

    return forward


# --------------------------------------------------------------------------- #
# Synthetic parameters + pure-JAX reference
# --------------------------------------------------------------------------- #
def init_params(key, D, O, F, L):
    """Deterministic synthetic parameters (shapes match the PyTorch module)."""
    ks = jax.random.split(key, 18)

    def nrm(k, shape, scale=0.1):
        return scale * jax.random.normal(k, shape, dtype=jnp.float32)

    return dict(
        # per-layer self-attention (only V / out_proj matter when seq_len == 1)
        wvT=nrm(ks[0], (L, D, D)),
        bv=nrm(ks[1], (L, 1, D)),
        woT=nrm(ks[2], (L, D, D)),
        bo=nrm(ks[3], (L, 1, D)),
        ln1_g=1.0 + nrm(ks[4], (L, 1, D)),
        ln1_b=nrm(ks[5], (L, 1, D)),
        # per-layer feed-forward
        w1T=nrm(ks[6], (L, D, F)),
        b1=nrm(ks[7], (L, 1, F)),
        w2T=nrm(ks[8], (L, F, D)),
        b2=nrm(ks[9], (L, 1, D)),
        ln2_g=1.0 + nrm(ks[10], (L, 1, D)),
        ln2_b=nrm(ks[11], (L, 1, D)),
        # BatchNorm1d (eval): running stats + affine
        bn_mean=nrm(ks[12], (1, D)),
        bn_var=1.0 + 0.1 * jnp.abs(jax.random.normal(ks[13], (1, D), jnp.float32)),
        bn_g=1.0 + nrm(ks[14], (1, D)),
        bn_b=nrm(ks[15], (1, D)),
        # final Linear(D -> O)
        wlT=nrm(ks[16], (D, O)),
        bl=nrm(ks[17], (1, O)),
    )


def reference(x, p, *, num_layers):
    """Pure-JAX f32 reference (unfused, row layout, mirrors the PyTorch module)."""
    x = x.astype(jnp.float32)
    for l in range(num_layers):
        v = x @ p["wvT"][l] + p["bv"][l]
        attn = v @ p["woT"][l] + p["bo"][l]
        x = _layernorm_rows(x + attn, p["ln1_g"][l], p["ln1_b"][l])
        h = jnp.maximum(x @ p["w1T"][l] + p["b1"][l], 0.0)
        ff = h @ p["w2T"][l] + p["b2"][l]
        x = _layernorm_rows(x + ff, p["ln2_g"][l], p["ln2_b"][l])
    x = (x - p["bn_mean"]) / jnp.sqrt(p["bn_var"] + BN_EPS) * p["bn_g"] + p["bn_b"]
    return x @ p["wlT"] + p["bl"]


if __name__ == "__main__":
    # small shapes consistent with the module: input_dim=32, output_dim=8,
    # dim_feedforward=64, num_layers=6.  nhead is irrelevant to the output when
    # seq_len == 1 (softmax over a single key is exactly 1 for every head).
    D, O, F, L = 32, 8, 64, 6

    key = jax.random.PRNGKey(0)
    kx, kp, kx2 = jax.random.split(key, 3)
    params = init_params(kp, D, O, F, L)

    forward = make_transformer_regressor(params, num_layers=L)

    # 1) small batch: single full-extent lane tile (grid = 1)
    N = 16
    x = jax.random.normal(kx, (N, D), dtype=jnp.float32)
    out = jax.block_until_ready(forward(x))
    ref = reference(x, params, num_layers=L)
    assert out.shape == (N, O), out.shape
    # bf16 MXU inputs (f32 accumulate) => loosened tolerance vs f32 reference.
    assert jnp.allclose(out, ref, rtol=5e-2, atol=5e-2), \
        float(jnp.max(jnp.abs(out - ref)))

    # 2) larger batch: exercises the lane-dense multi-step grid
    #    (128-lane tiles, >= 2 grid steps -> both TensorCores on v7x)
    N2 = 384
    x2 = jax.random.normal(kx2, (N2, D), dtype=jnp.float32)
    out2 = jax.block_until_ready(forward(x2))
    ref2 = reference(x2, params, num_layers=L)
    assert out2.shape == (N2, O), out2.shape
    assert jnp.allclose(out2, ref2, rtol=5e-2, atol=5e-2), \
        float(jnp.max(jnp.abs(out2 - ref2)))

    print("KERNEL_OK")
</pallas_src>

<mosaic_0001>
module attributes {stable_mosaic.version = 11 : i64} {
  func.func @transformer_regressor_kernel(%arg0: i32, %arg1: memref<32x16xf32, #tpu.memory_space<vmem>>, %arg2: memref<6x32x32xbf16, #tpu.memory_space<vmem>>, %arg3: memref<6x64x32xbf16, #tpu.memory_space<vmem>>, %arg4: memref<6x32x64xbf16, #tpu.memory_space<vmem>>, %arg5: memref<6x32x8xf32, #tpu.memory_space<vmem>>, %arg6: memref<6x64x1xf32, #tpu.memory_space<vmem>>, %arg7: memref<8x32xbf16, #tpu.memory_space<vmem>>, %arg8: memref<8x1xf32, #tpu.memory_space<vmem>>, %arg9: memref<8x16xf32, #tpu.memory_space<vmem>>) attributes {dimension_semantics = [#tpu.dimension_semantics<parallel>], iteration_bounds = array<i64: 1>, scalar_prefetch = 0 : i64, scratch_operands = 0 : i64, tpu.core_type = #tpu.core_type<tc>, window_params = [{transform_indices = @transform_0, window_bounds = array<i64: 32, 16>}, {pipeline_mode = #tpu.pipeline_mode<synchronous>, transform_indices = @transform_1, window_bounds = array<i64: 6, 32, 32>}, {pipeline_mode = #tpu.pipeline_mode<synchronous>, transform_indices = @transform_2, window_bounds = array<i64: 6, 64, 32>}, {pipeline_mode = #tpu.pipeline_mode<synchronous>, transform_indices = @transform_3, window_bounds = array<i64: 6, 32, 64>}, {pipeline_mode = #tpu.pipeline_mode<synchronous>, transform_indices = @transform_4, window_bounds = array<i64: 6, 32, 8>}, {pipeline_mode = #tpu.pipeline_mode<synchronous>, transform_indices = @transform_5, window_bounds = array<i64: 6, 64, 1>}, {pipeline_mode = #tpu.pipeline_mode<synchronous>, transform_indices = @transform_6, window_bounds = array<i64: 8, 32>}, {pipeline_mode = #tpu.pipeline_mode<synchronous>, transform_indices = @transform_7, window_bounds = array<i64: 8, 1>}, {transform_indices = @transform_8, window_bounds = array<i64: 8, 16>}]} {
    %c0 = arith.constant 0 : index
    %c0_0 = arith.constant 0 : index
    %0 = vector.load %arg1[%c0, %c0_0] : memref<32x16xf32, #tpu.memory_space<vmem>>, vector<32x16xf32>
    %c0_1 = arith.constant 0 : index
    %c0_2 = arith.constant 0 : index
    %c0_3 = arith.constant 0 : index
    %1 = vector.load %arg5[%c0_1, %c0_2, %c0_3] : memref<6x32x8xf32, #tpu.memory_space<vmem>>, vector<1x32x8xf32>
    %2 = vector.shape_cast %1 : vector<1x32x8xf32> to vector<32x8xf32>
    %3 = vector.extract_strided_slice %2 {offsets = [0, 0], sizes = [32, 1], strides = [1, 1]} : vector<32x8xf32> to vector<32x1xf32>
    %4 = vector.extract_strided_slice %2 {offsets = [0, 1], sizes = [32, 1], strides = [1, 1]} : vector<32x8xf32> to vector<32x1xf32>
    %5 = vector.extract_strided_slice %2 {offsets = [0, 2], sizes = [32, 1], strides = [1, 1]} : vector<32x8xf32> to vector<32x1xf32>
    %6 = vector.extract_strided_slice %2 {offsets = [0, 3], sizes = [32, 1], strides = [1, 1]} : vector<32x8xf32> to vector<32x1xf32>
    %7 = vector.extract_strided_slice %2 {offsets = [0, 4], sizes = [32, 1], strides = [1, 1]} : vector<32x8xf32> to vector<32x1xf32>
    %8 = vector.extract_strided_slice %2 {offsets = [0, 5], sizes = [32, 1], strides = [1, 1]} : vector<32x8xf32> to vector<32x1xf32>
    %c0_4 = arith.constant 0 : index
    %c0_5 = arith.constant 0 : index
    %c0_6 = arith.constant 0 : index
    %9 = vector.load %arg2[%c0_4, %c0_5, %c0_6] : memref<6x32x32xbf16, #tpu.memory_space<vmem>>, vector<1x32x32xbf16>
    %10 = vector.shape_cast %9 : vector<1x32x32xbf16> to vector<32x32xbf16>
    %11 = arith.truncf %0 : vector<32x16xf32> to vector<32x16xbf16>
    %cst = arith.constant dense<0.000000e+00> : vector<32x16xf32>
    %12 = tpu.matmul %10, %11, %cst {dimension_numbers = #tpu.dot_dimension_numbers<[1], [0], [0], [1], [0, 0, 1, 1], [], []>} : vector<32x32xbf16>, vector<32x16xbf16>, vector<32x16xf32> -> vector<32x16xf32>
    %13 = vector.broadcast %3 : vector<32x1xf32> to vector<32x16xf32>
    %14 = arith.addf %12, %13 : vector<32x16xf32>
    %15 = arith.addf %0, %14 : vector<32x16xf32>
    %cst_7 = arith.constant dense<0.000000e+00> : vector<16xf32>
    %16 = vector.multi_reduction <add>, %15, %cst_7 [0] : vector<32x16xf32> to vector<16xf32>
    %17 = vector.shape_cast %16 : vector<16xf32> to vector<1x16xf32>
    %cst_8 = arith.constant 3.200000e+01 : f32
    %18 = vector.broadcast %cst_8 : f32 to vector<1x16xf32>
    %19 = arith.divf %17, %18 : vector<1x16xf32>
    %20 = vector.broadcast %19 : vector<1x16xf32> to vector<32x16xf32>
    %21 = arith.subf %15, %20 : vector<32x16xf32>
    %22 = arith.mulf %21, %21 : vector<32x16xf32>
    %cst_9 = arith.constant dense<0.000000e+00> : vector<16xf32>
    %23 = vector.multi_reduction <add>, %22, %cst_9 [0] : vector<32x16xf32> to vector<16xf32>
    %24 = vector.shape_cast %23 : vector<16xf32> to vector<1x16xf32>
    %cst_10 = arith.constant 3.200000e+01 : f32
    %25 = vector.broadcast %cst_10 : f32 to vector<1x16xf32>
    %26 = arith.divf %24, %25 : vector<1x16xf32>
    %cst_11 = arith.constant 9.99999974E-6 : f32
    %27 = vector.broadcast %cst_11 : f32 to vector<1x16xf32>
    %28 = arith.addf %26, %27 : vector<1x16xf32>
    %29 = math.rsqrt %28 : vector<1x16xf32>
    %30 = vector.broadcast %29 : vector<1x16xf32> to vector<32x16xf32>
    %31 = arith.mulf %21, %30 : vector<32x16xf32>
    %32 = vector.broadcast %5 : vector<32x1xf32> to vector<32x16xf32>
    %33 = arith.mulf %31, %32 : vector<32x16xf32>
    %34 = vector.broadcast %6 : vector<32x1xf32> to vector<32x16xf32>
    %35 = arith.addf %33, %34 : vector<32x16xf32>
    %c0_12 = arith.constant 0 : index
    %c0_13 = arith.constant 0 : index
    %c0_14 = arith.constant 0 : index
    %36 = vector.load %arg3[%c0_12, %c0_13, %c0_14] : memref<6x64x32xbf16, #tpu.memory_space<vmem>>, vector<1x64x32xbf16>
    %37 = vector.shape_cast %36 : vector<1x64x32xbf16> to vector<64x32xbf16>
    %38 = arith.truncf %35 : vector<32x16xf32> to vector<32x16xbf16>
    %cst_15 = arith.constant dense<0.000000e+00> : vector<64x16xf32>
    %39 = tpu.matmul %37, %38, %cst_15 {dimension_numbers = #tpu.dot_dimension_numbers<[1], [0], [0], [1], [0, 0, 1, 1], [], []>} : vector<64x32xbf16>, vector<32x16xbf16>, vector<64x16xf32> -> vector<64x16xf32>
    %c0_16 = arith.constant 0 : index
    %c0_17 = arith.constant 0 : index
    %c0_18 = arith.constant 0 : index
    %40 = vector.load %arg6[%c0_16, %c0_17, %c0_18] : memref<6x64x1xf32, #tpu.memory_space<vmem>>, vector<1x64x1xf32>
    %41 = vector.shape_cast %40 : vector<1x64x1xf32> to vector<64x1xf32>
    %42 = vector.broadcast %41 : vector<64x1xf32> to vector<64x16xf32>
    %43 = arith.addf %39, %42 : vector<64x16xf32>
    %cst_19 = arith.constant 0.000000e+00 : f32
    %44 = vector.broadcast %cst_19 : f32 to vector<64x16xf32>
    %45 = arith.maximumf %43, %44 : vector<64x16xf32>
    %c0_20 = arith.constant 0 : index
    %c0_21 = arith.constant 0 : index
    %c0_22 = arith.constant 0 : index
    %46 = vector.load %arg4[%c0_20, %c0_21, %c0_22] : memref<6x32x64xbf16, #tpu.memory_space<vmem>>, vector<1x32x64xbf16>
    %47 = vector.shape_cast %46 : vector<1x32x64xbf16> to vector<32x64xbf16>
    %48 = arith.truncf %45 : vector<64x16xf32> to vector<64x16xbf16>
    %cst_23 = arith.constant dense<0.000000e+00> : vector<32x16xf32>
    %49 = tpu.matmul %47, %48, %cst_23 {dimension_numbers = #tpu.dot_dimension_numbers<[1], [0], [0], [1], [0, 0, 1, 1], [], []>} : vector<32x64xbf16>, vector<64x16xbf16>, vector<32x16xf32> -> vector<32x16xf32>
    %50 = vector.broadcast %4 : vector<32x1xf32> to vector<32x16xf32>
    %51 = arith.addf %49, %50 : vector<32x16xf32>
    %52 = arith.addf %35, %51 : vector<32x16xf32>
    %cst_24 = arith.constant dense<0.000000e+00> : vector<16xf32>
    %53 = vector.multi_reduction <add>, %52, %cst_24 [0] : vector<32x16xf32> to vector<16xf32>
    %54 = vector.shape_cast %53 : vector<16xf32> to vector<1x16xf32>
    %cst_25 = arith.constant 3.200000e+01 : f32
    %55 = vector.broadcast %cst_25 : f32 to vector<1x16xf32>
    %56 = arith.divf %54, %55 : vector<1x16xf32>
    %57 = vector.broadcast %56 : vector<1x16xf32> to vector<32x16xf32>
    %58 = arith.subf %52, %57 : vector<32x16xf32>
    %59 = arith.mulf %58, %58 : vector<32x16xf32>
    %cst_26 = arith.constant dense<0.000000e+00> : vector<16xf32>
    %60 = vector.multi_reduction <add>, %59, %cst_26 [0] : vector<32x16xf32> to vector<16xf32>
    %61 = vector.shape_cast %60 : vector<16xf32> to vector<1x16xf32>
    %cst_27 = arith.constant 3.200000e+01 : f32
    %62 = vector.broadcast %cst_27 : f32 to vector<1x16xf32>
    %63 = arith.divf %61, %62 : vector<1x16xf32>
    %cst_28 = arith.constant 9.99999974E-6 : f32
    %64 = vector.broadcast %cst_28 : f32 to vector<1x16xf32>
    %65 = arith.addf %63, %64 : vector<1x16xf32>
    %66 = math.rsqrt %65 : vector<1x16xf32>
    %67 = vector.broadcast %66 : vector<1x16xf32> to vector<32x16xf32>
    %68 = arith.mulf %58, %67 : vector<32x16xf32>
    %69 = vector.broadcast %7 : vector<32x1xf32> to vector<32x16xf32>
    %70 = arith.mulf %68, %69 : vector<32x16xf32>
    %71 = vector.broadcast %8 : vector<32x1xf32> to vector<32x16xf32>
    %72 = arith.addf %70, %71 : vector<32x16xf32>
    %c1 = arith.constant 1 : index
    %c0_29 = arith.constant 0 : index
    %c0_30 = arith.constant 0 : index
    %73 = vector.load %arg5[%c1, %c0_29, %c0_30] : memref<6x32x8xf32, #tpu.memory_space<vmem>>, vector<1x32x8xf32>
    %74 = vector.shape_cast %73 : vector<1x32x8xf32> to vector<32x8xf32>
    %75 = vector.extract_strided_slice %74 {offsets = [0, 0], sizes = [32, 1], strides = [1, 1]} : vector<32x8xf32> to vector<32x1xf32>
    %76 = vector.extract_strided_slice %74 {offsets = [0, 1], sizes = [32, 1], strides = [1, 1]} : vector<32x8xf32> to vector<32x1xf32>
    %77 = vector.extract_strided_slice %74 {offsets = [0, 2], sizes = [32, 1], strides = [1, 1]} : vector<32x8xf32> to vector<32x1xf32>
    %78 = vector.extract_strided_slice %74 {offsets = [0, 3], sizes = [32, 1], strides = [1, 1]} : vector<32x8xf32> to vector<32x1xf32>
    %79 = vector.extract_strided_slice %74 {offsets = [0, 4], sizes = [32, 1], strides = [1, 1]} : vector<32x8xf32> to vector<32x1xf32>
    %80 = vector.extract_strided_slice %74 {offsets = [0, 5], sizes = [32, 1], strides = [1, 1]} : vector<32x8xf32> to vector<32x1xf32>
    %c1_31 = arith.constant 1 : index
    %c0_32 = arith.constant 0 : index
    %c0_33 = arith.constant 0 : index
    %81 = vector.load %arg2[%c1_31, %c0_32, %c0_33] : memref<6x32x32xbf16, #tpu.memory_space<vmem>>, vector<1x32x32xbf16>
    %82 = vector.shape_cast %81 : vector<1x32x32xbf16> to vector<32x32xbf16>
    %83 = arith.truncf %72 : vector<32x16xf32> to vector<32x16xbf16>
    %cst_34 = arith.constant dense<0.000000e+00> : vector<32x16xf32>
    %84 = tpu.matmul %82, %83, %cst_34 {dimension_numbers = #tpu.dot_dimension_numbers<[1], [0], [0], [1], [0, 0, 1, 1], [], []>} : vector<32x32xbf16>, vector<32x16xbf16>, vector<32x16xf32> -> vector<32x16xf32>
    %85 = vector.broadcast %75 : vector<32x1xf32> to vector<32x16xf32>
    %86 = arith.addf %84, %85 : vector<32x16xf32>
    %87 = arith.addf %72, %86 : vector<32x16xf32>
    %cst_35 = arith.constant dense<0.000000e+00> : vector<16xf32>
    %88 = vector.multi_reduction <add>, %87, %cst_35 [0] : vector<32x16xf32> to vector<16xf32>
    %89 = vector.shape_cast %88 : vector<16xf32> to vector<1x16xf32>
    %cst_36 = arith.constant 3.200000e+01 : f32
    %90 = vector.broadcast %cst_36 : f32 to vector<1x16xf32>
    %91 = arith.divf %89, %90 : vector<1x16xf32>
    %92 = vector.broadcast %91 : vector<1x16xf32> to vector<32x16xf32>
    %93 = arith.subf %87, %92 : vector<32x16xf32>
    %94 = arith.mulf %93, %93 : vector<32x16xf32>
    %cst_37 = arith.constant dense<0.000000e+00> : vector<16xf32>
    %95 = vector.multi_reduction <add>, %94, %cst_37 [0] : vector<32x16xf32> to vector<16xf32>
    %96 = vector.shape_cast %95 : vector<16xf32> to vector<1x16xf32>
    %cst_38 = arith.constant 3.200000e+01 : f32
    %97 = vector.broadcast %cst_38 : f32 to vector<1x16xf32>
    %98 = arith.divf %96, %97 : vector<1x16xf32>
    %cst_39 = arith.constant 9.99999974E-6 : f32
    %99 = vector.broadcast %cst_39 : f32 to vector<1x16xf32>
    %100 = arith.addf %98, %99 : vector<1x16xf32>
    %101 = math.rsqrt %100 : vector<1x16xf32>
    %102 = vector.broadcast %101 : vector<1x16xf32> to vector<32x16xf32>
    %103 = arith.mulf %93, %102 : vector<32x16xf32>
    %104 = vector.broadcast %77 : vector<32x1xf32> to vector<32x16xf32>
    %105 = arith.mulf %103, %104 : vector<32x16xf32>
    %106 = vector.broadcast %78 : vector<32x1xf32> to vector<32x16xf32>
    %107 = arith.addf %105, %106 : vector<32x16xf32>
    %c1_40 = arith.constant 1 : index
    %c0_41 = arith.constant 0 : index
    %c0_42 = arith.constant 0 : index
    %108 = vector.load %arg3[%c1_40, %c0_41, %c0_42] : memref<6x64x32xbf16, #tpu.memory_space<vmem>>, vector<1x64x32xbf16>
    %109 = vector.shape_cast %108 : vector<1x64x32xbf16> to vector<64x32xbf16>
    %110 = arith.truncf %107 : vector<32x16xf32> to vector<32x16xbf16>
    %cst_43 = arith.constant dense<0.000000e+00> : vector<64x16xf32>
    %111 = tpu.matmul %109, %110, %cst_43 {dimension_numbers = #tpu.dot_dimension_numbers<[1], [0], [0], [1], [0, 0, 1, 1], [], []>} : vector<64x32xbf16>, vector<32x16xbf16>, vector<64x16xf32> -> vector<64x16xf32>
    %c1_44 = arith.constant 1 : index
    %c0_45 = arith.constant 0 : index
    %c0_46 = arith.constant 0 : index
    %112 = vector.load %arg6[%c1_44, %c0_45, %c0_46] : memref<6x64x1xf32, #tpu.memory_space<vmem>>, vector<1x64x1xf32>
    %113 = vector.shape_cast %112 : vector<1x64x1xf32> to vector<64x1xf32>
    %114 = vector.broadcast %113 : vector<64x1xf32> to vector<64x16xf32>
    %115 = arith.addf %111, %114 : vector<64x16xf32>
    %cst_47 = arith.constant 0.000000e+00 : f32
    %116 = vector.broadcast %cst_47 : f32 to vector<64x16xf32>
    %117 = arith.maximumf %115, %116 : vector<64x16xf32>
    %c1_48 = arith.constant 1 : index
    %c0_49 = arith.constant 0 : index
    %c0_50 = arith.constant 0 : index
    %118 = vector.load %arg4[%c1_48, %c0_49, %c0_50] : memref<6x32x64xbf16, #tpu.memory_space<vmem>>, vector<1x32x64xbf16>
    %119 = vector.shape_cast %118 : vector<1x32x64xbf16> to vector<32x64xbf16>
    %120 = arith.truncf %117 : vector<64x16xf32> to vector<64x16xbf16>
    %cst_51 = arith.constant dense<0.000000e+00> : vector<32x16xf32>
    %121 = tpu.matmul %119, %120, %cst_51 {dimension_numbers = #tpu.dot_dimension_numbers<[1], [0], [0], [1], [0, 0, 1, 1], [], []>} : vector<32x64xbf16>, vector<64x16xbf16>, vector<32x16xf32> -> vector<32x16xf32>
    %122 = vector.broadcast %76 : vector<32x1xf32> to vector<32x16xf32>
    %123 = arith.addf %121, %122 : vector<32x16xf32>
    %124 = arith.addf %107, %123 : vector<32x16xf32>
    %cst_52 = arith.constant dense<0.000000e+00> : vector<16xf32>
    %125 = vector.multi_reduction <add>, %124, %cst_52 [0] : vector<32x16xf32> to vector<16xf32>
    %126 = vector.shape_cast %125 : vector<16xf32> to vector<1x16xf32>
    %cst_53 = arith.constant 3.200000e+01 : f32
    %127 = vector.broadcast %cst_53 : f32 to vector<1x16xf32>
    %128 = arith.divf %126, %127 : vector<1x16xf32>
    %129 = vector.broadcast %128 : vector<1x16xf32> to vector<32x16xf32>
    %130 = arith.subf %124, %129 : vector<32x16xf32>
    %131 = arith.mulf %130, %130 : vector<32x16xf32>
    %cst_54 = arith.constant dense<0.000000e+00> : vector<16xf32>
    %132 = vector.multi_reduction <add>, %131, %cst_54 [0] : vector<32x16xf32> to vector<16xf32>
    %133 = vector.shape_cast %132 : vector<16xf32> to vector<1x16xf32>
    %cst_55 = arith.constant 3.200000e+01 : f32
    %134 = vector.broadcast %cst_55 : f32 to vector<1x16xf32>
    %135 = arith.divf %133, %134 : vector<1x16xf32>
    %cst_56 = arith.constant 9.99999974E-6 : f32
    %136 = vector.broadcast %cst_56 : f32 to vector<1x16xf32>
    %137 = arith.addf %135, %136 : vector<1x16xf32>
    %138 = math.rsqrt %137 : vector<1x16xf32>
    %139 = vector.broadcast %138 : vector<1x16xf32> to vector<32x16xf32>
    %140 = arith.mulf %130, %139 : vector<32x16xf32>
    %141 = vector.broadcast %79 : vector<32x1xf32> to vector<32x16xf32>
    %142 = arith.mulf %140, %141 : vector<32x16xf32>
    %143 = vector.broadcast %80 : vector<32x1xf32> to vector<32x16xf32>
    %144 = arith.addf %142, %143 : vector<32x16xf32>
    %c2 = arith.constant 2 : index
    %c0_57 = arith.constant 0 : index
    %c0_58 = arith.constant 0 : index
    %145 = vector.load %arg5[%c2, %c0_57, %c0_58] : memref<6x32x8xf32, #tpu.memory_space<vmem>>, vector<1x32x8xf32>
    %146 = vector.shape_cast %145 : vector<1x32x8xf32> to vector<32x8xf32>
    %147 = vector.extract_strided_slice %146 {offsets = [0, 0], sizes = [32, 1], strides = [1, 1]} : vector<32x8xf32> to vector<32x1xf32>
    %148 = vector.extract_strided_slice %146 {offsets = [0, 1], sizes = [32, 1], strides = [1, 1]} : vector<32x8xf32> to vector<32x1xf32>
    %149 = vector.extract_strided_slice %146 {offsets = [0, 2], sizes = [32, 1], strides = [1, 1]} : vector<32x8xf32> to vector<32x1xf32>
    %150 = vector.extract_strided_slice %146 {offsets = [0, 3], sizes = [32, 1], strides = [1, 1]} : vector<32x8xf32> to vector<32x1xf32>
    %151 = vector.extract_strided_slice %146 {offsets = [0, 4], sizes = [32, 1], strides = [1, 1]} : vector<32x8xf32> to vector<32x1xf32>
    %152 = vector.extract_strided_slice %146 {offsets = [0, 5], sizes = [32, 1], strides = [1, 1]} : vector<32x8xf32> to vector<32x1xf32>
    %c2_59 = arith.constant 2 : index
    %c0_60 = arith.constant 0 : index
    %c0_61 = arith.constant 0 : index
    %153 = vector.load %arg2[%c2_59, %c0_60, %c0_61] : memref<6x32x32xbf16, #tpu.memory_space<vmem>>, vector<1x32x32xbf16>
    %154 = vector.shape_cast %153 : vector<1x32x32xbf16> to vector<32x32xbf16>
    %155 = arith.truncf %144 : vector<32x16xf32> to vector<32x16xbf16>
    %cst_62 = arith.constant dense<0.000000e+00> : vector<32x16xf32>
    %156 = tpu.matmul %154, %155, %cst_62 {dimension_numbers = #tpu.dot_dimension_numbers<[1], [0], [0], [1], [0, 0, 1, 1], [], []>} : vector<32x32xbf16>, vector<32x16xbf16>, vector<32x16xf32> -> vector<32x16xf32>
    %157 = vector.broadcast %147 : vector<32x1xf32> to vector<32x16xf32>
    %158 = arith.addf %156, %157 : vector<32x16xf32>
    %159 = arith.addf %144, %158 : vector<32x16xf32>
    %cst_63 = arith.constant dense<0.000000e+00> : vector<16xf32>
    %160 = vector.multi_reduction <add>, %159, %cst_63 [0] : vector<32x16xf32> to vector<16xf32>
    %161 = vector.shape_cast %160 : vector<16xf32> to vector<1x16xf32>
    %cst_64 = arith.constant 3.200000e+01 : f32
    %162 = vector.broadcast %cst_64 : f32 to vector<1x16xf32>
    %163 = arith.divf %161, %162 : vector<1x16xf32>
    %164 = vector.broadcast %163 : vector<1x16xf32> to vector<32x16xf32>
    %165 = arith.subf %159, %164 : vector<32x16xf32>
    %166 = arith.mulf %165, %165 : vector<32x16xf32>
    %cst_65 = arith.constant dense<0.000000e+00> : vector<16xf32>
    %167 = vector.multi_reduction <add>, %166, %cst_65 [0] : vector<32x16xf32> to vector<16xf32>
    %168 = vector.shape_cast %167 : vector<16xf32> to vector<1x16xf32>
    %cst_66 = arith.constant 3.200000e+01 : f32
    %169 = vector.broadcast %cst_66 : f32 to vector<1x16xf32>
    %170 = arith.divf %168, %169 : vector<1x16xf32>
    %cst_67 = arith.constant 9.99999974E-6 : f32
    %171 = vector.broadcast %cst_67 : f32 to vector<1x16xf32>
    %172 = arith.addf %170, %171 : vector<1x16xf32>
    %173 = math.rsqrt %172 : vector<1x16xf32>
    %174 = vector.broadcast %173 : vector<1x16xf32> to vector<32x16xf32>
    %175 = arith.mulf %165, %174 : vector<32x16xf32>
    %176 = vector.broadcast %149 : vector<32x1xf32> to vector<32x16xf32>
    %177 = arith.mulf %175, %176 : vector<32x16xf32>
    %178 = vector.broadcast %150 : vector<32x1xf32> to vector<32x16xf32>
    %179 = arith.addf %177, %178 : vector<32x16xf32>
    %c2_68 = arith.constant 2 : index
    %c0_69 = arith.constant 0 : index
    %c0_70 = arith.constant 0 : index
    %180 = vector.load %arg3[%c2_68, %c0_69, %c0_70] : memref<6x64x32xbf16, #tpu.memory_space<vmem>>, vector<1x64x32xbf16>
    %181 = vector.shape_cast %180 : vector<1x64x32xbf16> to vector<64x32xbf16>
    %182 = arith.truncf %179 : vector<32x16xf32> to vector<32x16xbf16>
    %cst_71 = arith.constant dense<0.000000e+00> : vector<64x16xf32>
    %183 = tpu.matmul %181, %182, %cst_71 {dimension_numbers = #tpu.dot_dimension_numbers<[1], [0], [0], [1], [0, 0, 1, 1], [], []>} : vector<64x32xbf16>, vector<32x16xbf16>, vector<64x16xf32> -> vector<64x16xf32>
    %c2_72 = arith.constant 2 : index
    %c0_73 = arith.constant 0 : index
    %c0_74 = arith.constant 0 : index
    %184 = vector.load %arg6[%c2_72, %c0_73, %c0_74] : memref<6x64x1xf32, #tpu.memory_space<vmem>>, vector<1x64x1xf32>
    %185 = vector.shape_cast %184 : vector<1x64x1xf32> to vector<64x1xf32>
    %186 = vector.broadcast %185 : vector<64x1xf32> to vector<64x16xf32>
    %187 = arith.addf %183, %186 : vector<64x16xf32>
    %cst_75 = arith.constant 0.000000e+00 : f32
    %188 = vector.broadcast %cst_75 : f32 to vector<64x16xf32>
    %189 = arith.maximumf %187, %188 : vector<64x16xf32>
    %c2_76 = arith.constant 2 : index
    %c0_77 = arith.constant 0 : index
    %c0_78 = arith.constant 0 : index
    %190 = vector.load %arg4[%c2_76, %c0_77, %c0_78] : memref<6x32x64xbf16, #tpu.memory_space<vmem>>, vector<1x32x64xbf16>
    %191 = vector.shape_cast %190 : vector<1x32x64xbf16> to vector<32x64xbf16>
    %192 = arith.truncf %189 : vector<64x16xf32> to vector<64x16xbf16>
    %cst_79 = arith.constant dense<0.000000e+00> : vector<32x16xf32>
    %193 = tpu.matmul %191, %192, %cst_79 {dimension_numbers = #tpu.dot_dimension_numbers<[1], [0], [0], [1], [0, 0, 1, 1], [], []>} : vector<32x64xbf16>, vector<64x16xbf16>, vector<32x16xf32> -> vector<32x16xf32>
    %194 = vector.broadcast %148 : vector<32x1xf32> to vector<32x16xf32>
    %195 = arith.addf %193, %194 : vector<32x16xf32>
    %196 = arith.addf %179, %195 : vector<32x16xf32>
    %cst_80 = arith.constant dense<0.000000e+00> : vector<16xf32>
    %197 = vector.multi_reduction <add>, %196, %cst_80 [0] : vector<32x16xf32> to vector<16xf32>
    %198 = vector.shape_cast %197 : vector<16xf32> to vector<1x16xf32>
    %cst_81 = arith.constant 3.200000e+01 : f32
    %199 = vector.broadcast %cst_81 : f32 to vector<1x16xf32>
    %200 = arith.divf %198, %199 : vector<1x16xf32>
    %201 = vector.broadcast %200 : vector<1x16xf32> to vector<32x16xf32>
    %202 = arith.subf %196, %201 : vector<32x16xf32>
    %203 = arith.mulf %202, %202 : vector<32x16xf32>
    %cst_82 = arith.constant dense<0.000000e+00> : vector<16xf32>
    %204 = vector.multi_reduction <add>, %203, %cst_82 [0] : vector<32x16xf32> to vector<16xf32>
    %205 = vector.shape_cast %204 : vector<16xf32> to vector<1x16xf32>
    %cst_83 = arith.constant 3.200000e+01 : f32
    %206 = vector.broadcast %cst_83 : f32 to vector<1x16xf32>
    %207 = arith.divf %205, %206 : vector<1x16xf32>
    %cst_84 = arith.constant 9.99999974E-6 : f32
    %208 = vector.broadcast %cst_84 : f32 to vector<1x16xf32>
    %209 = arith.addf %207, %208 : vector<1x16xf32>
    %210 = math.rsqrt %209 : vector<1x16xf32>
    %211 = vector.broadcast %210 : vector<1x16xf32> to vector<32x16xf32>
    %212 = arith.mulf %202, %211 : vector<32x16xf32>
    %213 = vector.broadcast %151 : vector<32x1xf32> to vector<32x16xf32>
    %214 = arith.mulf %212, %213 : vector<32x16xf32>
    %215 = vector.broadcast %152 : vector<32x1xf32> to vector<32x16xf32>
    %216 = arith.addf %214, %215 : vector<32x16xf32>
    %c3 = arith.constant 3 : index
    %c0_85 = arith.constant 0 : index
    %c0_86 = arith.constant 0 : index
    %217 = vector.load %arg5[%c3, %c0_85, %c0_86] : memref<6x32x8xf32, #tpu.memory_space<vmem>>, vector<1x32x8xf32>
    %218 = vector.shape_cast %217 : vector<1x32x8xf32> to vector<32x8xf32>
    %219 = vector.extract_strided_slice %218 {offsets = [0, 0], sizes = [32, 1], strides = [1, 1]} : vector<32x8xf32> to vector<32x1xf32>
    %220 = vector.extract_strided_slice %218 {offsets = [0, 1], sizes = [32, 1], strides = [1, 1]} : vector<32x8xf32> to vector<32x1xf32>
    %221 = vector.extract_strided_slice %218 {offsets = [0, 2], sizes = [32, 1], strides = [1, 1]} : vector<32x8xf32> to vector<32x1xf32>
    %222 = vector.extract_strided_slice %218 {offsets = [0, 3], sizes = [32, 1], strides = [1, 1]} : vector<32x8xf32> to vector<32x1xf32>
    %223 = vector.extract_strided_slice %218 {offsets = [0, 4], sizes = [32, 1], strides = [1, 1]} : vector<32x8xf32> to vector<32x1xf32>
    %224 = vector.extract_strided_slice %218 {offsets = [0, 5], sizes = [32, 1], strides = [1, 1]} : vector<32x8xf32> to vector<32x1xf32>
    %c3_87 = arith.constant 3 : index
    %c0_88 = arith.constant 0 : index
    %c0_89 = arith.constant 0 : index
    %225 = vector.load %arg2[%c3_87, %c0_88, %c0_89] : memref<6x32x32xbf16, #tpu.memory_space<vmem>>, vector<1x32x32xbf16>
    %226 = vector.shape_cast %225 : vector<1x32x32xbf16> to vector<32x32xbf16>
    %227 = arith.truncf %216 : vector<32x16xf32> to vector<32x16xbf16>
    %cst_90 = arith.constant dense<0.000000e+00> : vector<32x16xf32>
    %228 = tpu.matmul %226, %227, %cst_90 {dimension_numbers = #tpu.dot_dimension_numbers<[1], [0], [0], [1], [0, 0, 1, 1], [], []>} : vector<32x32xbf16>, vector<32x16xbf16>, vector<32x16xf32> -> vector<32x16xf32>
    %229 = vector.broadcast %219 : vector<32x1xf32> to vector<32x16xf32>
    %230 = arith.addf %228, %229 : vector<32x16xf32>
    %231 = arith.addf %216, %230 : vector<32x16xf32>
    %cst_91 = arith.constant dense<0.000000e+00> : vector<16xf32>
    %232 = vector.multi_reduction <add>, %231, %cst_91 [0] : vector<32x16xf32> to vector<16xf32>
    %233 = vector.shape_cast %232 : vector<16xf32> to vector<1x16xf32>
    %cst_92 = arith.constant 3.200000e+01 : f32
    %234 = vector.broadcast %cst_92 : f32 to vector<1x16xf32>
    %235 = arith.divf %233, %234 : vector<1x16xf32>
    %236 = vector.broadcast %235 : vector<1x16xf32> to vector<32x16xf32>
    %237 = arith.subf %231, %236 : vector<32x16xf32>
    %238 = arith.mulf %237, %237 : vector<32x16xf32>
    %cst_93 = arith.constant dense<0.000000e+00> : vector<16xf32>
    %239 = vector.multi_reduction <add>, %238, %cst_93 [0] : vector<32x16xf32> to vector<16xf32>
    %240 = vector.shape_cast %239 : vector<16xf32> to vector<1x16xf32>
    %cst_94 = arith.constant 3.200000e+01 : f32
    %241 = vector.broadcast %cst_94 : f32 to vector<1x16xf32>
    %242 = arith.divf %240, %241 : vector<1x16xf32>
    %cst_95 = arith.constant 9.99999974E-6 : f32
    %243 = vector.broadcast %cst_95 : f32 to vector<1x16xf32>
    %244 = arith.addf %242, %243 : vector<1x16xf32>
    %245 = math.rsqrt %244 : vector<1x16xf32>
    %246 = vector.broadcast %245 : vector<1x16xf32> to vector<32x16xf32>
    %247 = arith.mulf %237, %246 : vector<32x16xf32>
    %248 = vector.broadcast %221 : vector<32x1xf32> to vector<32x16xf32>
    %249 = arith.mulf %247, %248 : vector<32x16xf32>
    %250 = vector.broadcast %222 : vector<32x1xf32> to vector<32x16xf32>
    %251 = arith.addf %249, %250 : vector<32x16xf32>
    %c3_96 = arith.constant 3 : index
    %c0_97 = arith.constant 0 : index
    %c0_98 = arith.constant 0 : index
    %252 = vector.load %arg3[%c3_96, %c0_97, %c0_98] : memref<6x64x32xbf16, #tpu.memory_space<vmem>>, vector<1x64x32xbf16>
    %253 = vector.shape_cast %252 : vector<1x64x32xbf16> to vector<64x32xbf16>
    %254 = arith.truncf %251 : vector<32x16xf32> to vector<32x16xbf16>
    %cst_99 = arith.constant dense<0.000000e+00> : vector<64x16xf32>
    %255 = tpu.matmul %253, %254, %cst_99 {dimension_numbers = #tpu.dot_dimension_numbers<[1], [0], [0], [1], [0, 0, 1, 1], [], []>} : vector<64x32xbf16>, vector<32x16xbf16>, vector<64x16xf32> -> vector<64x16xf32>
    %c3_100 = arith.constant 3 : index
    %c0_101 = arith.constant 0 : index
    %c0_102 = arith.constant 0 : index
    %256 = vector.load %arg6[%c3_100, %c0_101, %c0_102] : memref<6x64x1xf32, #tpu.memory_space<vmem>>, vector<1x64x1xf32>
    %257 = vector.shape_cast %256 : vector<1x64x1xf32> to vector<64x1xf32>
    %258 = vector.broadcast %257 : vector<64x1xf32> to vector<64x16xf32>
    %259 = arith.addf %255, %258 : vector<64x16xf32>
    %cst_103 = arith.constant 0.000000e+00 : f32
    %260 = vector.broadcast %cst_103 : f32 to vector<64x16xf32>
    %261 = arith.maximumf %259, %260 : vector<64x16xf32>
    %c3_104 = arith.constant 3 : index
    %c0_105 = arith.constant 0 : index
    %c0_106 = arith.constant 0 : index
    %262 = vector.load %arg4[%c3_104, %c0_105, %c0_106] : memref<6x32x64xbf16, #tpu.memory_space<vmem>>, vector<1x32x64xbf16>
    %263 = vector.shape_cast %262 : vector<1x32x64xbf16> to vector<32x64xbf16>
    %264 = arith.truncf %261 : vector<64x16xf32> to vector<64x16xbf16>
    %cst_107 = arith.constant dense<0.000000e+00> : vector<32x16xf32>
    %265 = tpu.matmul %263, %264, %cst_107 {dimension_numbers = #tpu.dot_dimension_numbers<[1], [0], [0], [1], [0, 0, 1, 1], [], []>} : vector<32x64xbf16>, vector<64x16xbf16>, vector<32x16xf32> -> vector<32x16xf32>
    %266 = vector.broadcast %220 : vector<32x1xf32> to vector<32x16xf32>
    %267 = arith.addf %265, %266 : vector<32x16xf32>
    %268 = arith.addf %251, %267 : vector<32x16xf32>
    %cst_108 = arith.constant dense<0.000000e+00> : vector<16xf32>
    %269 = vector.multi_reduction <add>, %268, %cst_108 [0] : vector<32x16xf32> to vector<16xf32>
    %270 = vector.shape_cast %269 : vector<16xf32> to vector<1x16xf32>
    %cst_109 = arith.constant 3.200000e+01 : f32
    %271 = vector.broadcast %cst_109 : f32 to vector<1x16xf32>
    %272 = arith.divf %270, %271 : vector<1x16xf32>
    %273 = vector.broadcast %272 : vector<1x16xf32> to vector<32x16xf32>
    %274 = arith.subf %268, %273 : vector<32x16xf32>
    %275 = arith.mulf %274, %274 : vector<32x16xf32>
    %cst_110 = arith.constant dense<0.000000e+00> : vector<16xf32>
    %276 = vector.multi_reduction <add>, %275, %cst_110 [0] : vector<32x16xf32> to vector<16xf32>
    %277 = vector.shape_cast %276 : vector<16xf32> to vector<1x16xf32>
    %cst_111 = arith.constant 3.200000e+01 : f32
    %278 = vector.broadcast %cst_111 : f32 to vector<1x16xf32>
    %279 = arith.divf %277, %278 : vector<1x16xf32>
    %cst_112 = arith.constant 9.99999974E-6 : f32
    %280 = vector.broadcast %cst_112 : f32 to vector<1x16xf32>
    %281 = arith.addf %279, %280 : vector<1x16xf32>
    %282 = math.rsqrt %281 : vector<1x16xf32>
    %283 = vector.broadcast %282 : vector<1x16xf32> to vector<32x16xf32>
    %284 = arith.mulf %274, %283 : vector<32x16xf32>
    %285 = vector.broadcast %223 : vector<32x1xf32> to vector<32x16xf32>
    %286 = arith.mulf %284, %285 : vector<32x16xf32>
    %287 = vector.broadcast %224 : vector<32x1xf32> to vector<32x16xf32>
    %288 = arith.addf %286, %287 : vector<32x16xf32>
    %c4 = arith.constant 4 : index
    %c0_113 = arith.constant 0 : index
    %c0_114 = arith.constant 0 : index
    %289 = vector.load %arg5[%c4, %c0_113, %c0_114] : memref<6x32x8xf32, #tpu.memory_space<vmem>>, vector<1x32x8xf32>
    %290 = vector.shape_cast %289 : vector<1x32x8xf32> to vector<32x8xf32>
    %291 = vector.extract_strided_slice %290 {offsets = [0, 0], sizes = [32, 1], strides = [1, 1]} : vector<32x8xf32> to vector<32x1xf32>
    %292 = vector.extract_strided_slice %290 {offsets = [0, 1], sizes = [32, 1], strides = [1, 1]} : vector<32x8xf32> to vector<32x1xf32>
    %293 = vector.extract_strided_slice %290 {offsets = [0, 2], sizes = [32, 1], strides = [1, 1]} : vector<32x8xf32> to vector<32x1xf32>
    %294 = vector.extract_strided_slice %290 {offsets = [0, 3], sizes = [32, 1], strides = [1, 1]} : vector<32x8xf32> to vector<32x1xf32>
    %295 = vector.extract_strided_slice %290 {offsets = [0, 4], sizes = [32, 1], strides = [1, 1]} : vector<32x8xf32> to vector<32x1xf32>
    %296 = vector.extract_strided_slice %290 {offsets = [0, 5], sizes = [32, 1], strides = [1, 1]} : vector<32x8xf32> to vector<32x1xf32>
    %c4_115 = arith.constant 4 : index
    %c0_116 = arith.constant 0 : index
    %c0_117 = arith.constant 0 : index
    %297 = vector.load %arg2[%c4_115, %c0_116, %c0_117] : memref<6x32x32xbf16, #tpu.memory_space<vmem>>, vector<1x32x32xbf16>
    %298 = vector.shape_cast %297 : vector<1x32x32xbf16> to vector<32x32xbf16>
    %299 = arith.truncf %288 : vector<32x16xf32> to vector<32x16xbf16>
    %cst_118 = arith.constant dense<0.000000e+00> : vector<32x16xf32>
    %300 = tpu.matmul %298, %299, %cst_118 {dimension_numbers = #tpu.dot_dimension_numbers<[1], [0], [0], [1], [0, 0, 1, 1], [], []>} : vector<32x32xbf16>, vector<32x16xbf16>, vector<32x16xf32> -> vector<32x16xf32>
    %301 = vector.broadcast %291 : vector<32x1xf32> to vector<32x16xf32>
    %302 = arith.addf %300, %301 : vector<32x16xf32>
    %303 = arith.addf %288, %302 : vector<32x16xf32>
    %cst_119 = arith.constant dense<0.000000e+00> : vector<16xf32>
    %304 = vector.multi_reduction <add>, %303, %cst_119 [0] : vector<32x16xf32> to vector<16xf32>
    %305 = vector.shape_cast %304 : vector<16xf32> to vector<1x16xf32>
    %cst_120 = arith.constant 3.200000e+01 : f32
    %306 = vector.broadcast %cst_120 : f32 to vector<1x16xf32>
    %307 = arith.divf %305, %306 : vector<1x16xf32>
    %308 = vector.broadcast %307 : vector<1x16xf32> to vector<32x16xf32>
    %309 = arith.subf %303, %308 : vector<32x16xf32>
    %310 = arith.mulf %309, %309 : vector<32x16xf32>
    %cst_121 = arith.constant dense<0.000000e+00> : vector<16xf32>
    %311 = vector.multi_reduction <add>, %310, %cst_121 [0] : vector<32x16xf32> to vector<16xf32>
    %312 = vector.shape_cast %311 : vector<16xf32> to vector<1x16xf32>
    %cst_122 = arith.constant 3.200000e+01 : f32
    %313 = vector.broadcast %cst_122 : f32 to vector<1x16xf32>
    %314 = arith.divf %312, %313 : vector<1x16xf32>
    %cst_123 = arith.constant 9.99999974E-6 : f32
    %315 = vector.broadcast %cst_123 : f32 to vector<1x16xf32>
    %316 = arith.addf %314, %315 : vector<1x16xf32>
    %317 = math.rsqrt %316 : vector<1x16xf32>
    %318 = vector.broadcast %317 : vector<1x16xf32> to vector<32x16xf32>
    %319 = arith.mulf %309, %318 : vector<32x16xf32>
    %320 = vector.broadcast %293 : vector<32x1xf32> to vector<32x16xf32>
    %321 = arith.mulf %319, %320 : vector<32x16xf32>
    %322 = vector.broadcast %294 : vector<32x1xf32> to vector<32x16xf32>
    %323 = arith.addf %321, %322 : vector<32x16xf32>
    %c4_124 = arith.constant 4 : index
    %c0_125 = arith.constant 0 : index
    %c0_126 = arith.constant 0 : index
    %324 = vector.load %arg3[%c4_124, %c0_125, %c0_126] : memref<6x64x32xbf16, #tpu.memory_space<vmem>>, vector<1x64x32xbf16>
    %325 = vector.shape_cast %324 : vector<1x64x32xbf16> to vector<64x32xbf16>
    %326 = arith.truncf %323 : vector<32x16xf32> to vector<32x16xbf16>
    %cst_127 = arith.constant dense<0.000000e+00> : vector<64x16xf32>
    %327 = tpu.matmul %325, %326, %cst_127 {dimension_numbers = #tpu.dot_dimension_numbers<[1], [0], [0], [1], [0, 0, 1, 1], [], []>} : vector<64x32xbf16>, vector<32x16xbf16>, vector<64x16xf32> -> vector<64x16xf32>
    %c4_128 = arith.constant 4 : index
    %c0_129 = arith.constant 0 : index
    %c0_130 = arith.constant 0 : index
    %328 = vector.load %arg6[%c4_128, %c0_129, %c0_130] : memref<6x64x1xf32, #tpu.memory_space<vmem>>, vector<1x64x1xf32>
    %329 = vector.shape_cast %328 : vector<1x64x1xf32> to vector<64x1xf32>
    %330 = vector.broadcast %329 : vector<64x1xf32> to vector<64x16xf32>
    %331 = arith.addf %327, %330 : vector<64x16xf32>
    %cst_131 = arith.constant 0.000000e+00 : f32
    %332 = vector.broadcast %cst_131 : f32 to vector<64x16xf32>
    %333 = arith.maximumf %331, %332 : vector<64x16xf32>
    %c4_132 = arith.constant 4 : index
    %c0_133 = arith.constant 0 : index
    %c0_134 = arith.constant 0 : index
    %334 = vector.load %arg4[%c4_132, %c0_133, %c0_134] : memref<6x32x64xbf16, #tpu.memory_space<vmem>>, vector<1x32x64xbf16>
    %335 = vector.shape_cast %334 : vector<1x32x64xbf16> to vector<32x64xbf16>
    %336 = arith.truncf %333 : vector<64x16xf32> to vector<64x16xbf16>
    %cst_135 = arith.constant dense<0.000000e+00> : vector<32x16xf32>
    %337 = tpu.matmul %335, %336, %cst_135 {dimension_numbers = #tpu.dot_dimension_numbers<[1], [0], [0], [1], [0, 0, 1, 1], [], []>} : vector<32x64xbf16>, vector<64x16xbf16>, vector<32x16xf32> -> vector<32x16xf32>
    %338 = vector.broadcast %292 : vector<32x1xf32> to vector<32x16xf32>
    %339 = arith.addf %337, %338 : vector<32x16xf32>
    %340 = arith.addf %323, %339 : vector<32x16xf32>
    %cst_136 = arith.constant dense<0.000000e+00> : vector<16xf32>
    %341 = vector.multi_reduction <add>, %340, %cst_136 [0] : vector<32x16xf32> to vector<16xf32>
    %342 = vector.shape_cast %341 : vector<16xf32> to vector<1x16xf32>
    %cst_137 = arith.constant 3.200000e+01 : f32
    %343 = vector.broadcast %cst_137 : f32 to vector<1x16xf32>
    %344 = arith.divf %342, %343 : vector<1x16xf32>
    %345 = vector.broadcast %344 : vector<1x16xf32> to vector<32x16xf32>
    %346 = arith.subf %340, %345 : vector<32x16xf32>
    %347 = arith.mulf %346, %346 : vector<32x16xf32>
    %cst_138 = arith.constant dense<0.000000e+00> : vector<16xf32>
    %348 = vector.multi_reduction <add>, %347, %cst_138 [0] : vector<32x16xf32> to vector<16xf32>
    %349 = vector.shape_cast %348 : vector<16xf32> to vector<1x16xf32>
    %cst_139 = arith.constant 3.200000e+01 : f32
    %350 = vector.broadcast %cst_139 : f32 to vector<1x16xf32>
    %351 = arith.divf %349, %350 : vector<1x16xf32>
    %cst_140 = arith.constant 9.99999974E-6 : f32
    %352 = vector.broadcast %cst_140 : f32 to vector<1x16xf32>
    %353 = arith.addf %351, %352 : vector<1x16xf32>
    %354 = math.rsqrt %353 : vector<1x16xf32>
    %355 = vector.broadcast %354 : vector<1x16xf32> to vector<32x16xf32>
    %356 = arith.mulf %346, %355 : vector<32x16xf32>
    %357 = vector.broadcast %295 : vector<32x1xf32> to vector<32x16xf32>
    %358 = arith.mulf %356, %357 : vector<32x16xf32>
    %359 = vector.broadcast %296 : vector<32x1xf32> to vector<32x16xf32>
    %360 = arith.addf %358, %359 : vector<32x16xf32>
    %c5 = arith.constant 5 : index
    %c0_141 = arith.constant 0 : index
    %c0_142 = arith.constant 0 : index
    %361 = vector.load %arg5[%c5, %c0_141, %c0_142] : memref<6x32x8xf32, #tpu.memory_space<vmem>>, vector<1x32x8xf32>
    %362 = vector.shape_cast %361 : vector<1x32x8xf32> to vector<32x8xf32>
    %363 = vector.extract_strided_slice %362 {offsets = [0, 0], sizes = [32, 1], strides = [1, 1]} : vector<32x8xf32> to vector<32x1xf32>
    %364 = vector.extract_strided_slice %362 {offsets = [0, 1], sizes = [32, 1], strides = [1, 1]} : vector<32x8xf32> to vector<32x1xf32>
    %365 = vector.extract_strided_slice %362 {offsets = [0, 2], sizes = [32, 1], strides = [1, 1]} : vector<32x8xf32> to vector<32x1xf32>
    %366 = vector.extract_strided_slice %362 {offsets = [0, 3], sizes = [32, 1], strides = [1, 1]} : vector<32x8xf32> to vector<32x1xf32>
    %367 = vector.extract_strided_slice %362 {offsets = [0, 4], sizes = [32, 1], strides = [1, 1]} : vector<32x8xf32> to vector<32x1xf32>
    %368 = vector.extract_strided_slice %362 {offsets = [0, 5], sizes = [32, 1], strides = [1, 1]} : vector<32x8xf32> to vector<32x1xf32>
    %c5_143 = arith.constant 5 : index
    %c0_144 = arith.constant 0 : index
    %c0_145 = arith.constant 0 : index
    %369 = vector.load %arg2[%c5_143, %c0_144, %c0_145] : memref<6x32x32xbf16, #tpu.memory_space<vmem>>, vector<1x32x32xbf16>
    %370 = vector.shape_cast %369 : vector<1x32x32xbf16> to vector<32x32xbf16>
    %371 = arith.truncf %360 : vector<32x16xf32> to vector<32x16xbf16>
    %cst_146 = arith.constant dense<0.000000e+00> : vector<32x16xf32>
    %372 = tpu.matmul %370, %371, %cst_146 {dimension_numbers = #tpu.dot_dimension_numbers<[1], [0], [0], [1], [0, 0, 1, 1], [], []>} : vector<32x32xbf16>, vector<32x16xbf16>, vector<32x16xf32> -> vector<32x16xf32>
    %373 = vector.broadcast %363 : vector<32x1xf32> to vector<32x16xf32>
    %374 = arith.addf %372, %373 : vector<32x16xf32>
    %375 = arith.addf %360, %374 : vector<32x16xf32>
    %cst_147 = arith.constant dense<0.000000e+00> : vector<16xf32>
    %376 = vector.multi_reduction <add>, %375, %cst_147 [0] : vector<32x16xf32> to vector<16xf32>
    %377 = vector.shape_cast %376 : vector<16xf32> to vector<1x16xf32>
    %cst_148 = arith.constant 3.200000e+01 : f32
    %378 = vector.broadcast %cst_148 : f32 to vector<1x16xf32>
    %379 = arith.divf %377, %378 : vector<1x16xf32>
    %380 = vector.broadcast %379 : vector<1x16xf32> to vector<32x16xf32>
    %381 = arith.subf %375, %380 : vector<32x16xf32>
    %382 = arith.mulf %381, %381 : vector<32x16xf32>
    %cst_149 = arith.constant dense<0.000000e+00> : vector<16xf32>
    %383 = vector.multi_reduction <add>, %382, %cst_149 [0] : vector<32x16xf32> to vector<16xf32>
    %384 = vector.shape_cast %383 : vector<16xf32> to vector<1x16xf32>
    %cst_150 = arith.constant 3.200000e+01 : f32
    %385 = vector.broadcast %cst_150 : f32 to vector<1x16xf32>
    %386 = arith.divf %384, %385 : vector<1x16xf32>
    %cst_151 = arith.constant 9.99999974E-6 : f32
    %387 = vector.broadcast %cst_151 : f32 to vector<1x16xf32>
    %388 = arith.addf %386, %387 : vector<1x16xf32>
    %389 = math.rsqrt %388 : vector<1x16xf32>
    %390 = vector.broadcast %389 : vector<1x16xf32> to vector<32x16xf32>
    %391 = arith.mulf %381, %390 : vector<32x16xf32>
    %392 = vector.broadcast %365 : vector<32x1xf32> to vector<32x16xf32>
    %393 = arith.mulf %391, %392 : vector<32x16xf32>
    %394 = vector.broadcast %366 : vector<32x1xf32> to vector<32x16xf32>
    %395 = arith.addf %393, %394 : vector<32x16xf32>
    %c5_152 = arith.constant 5 : index
    %c0_153 = arith.constant 0 : index
    %c0_154 = arith.constant 0 : index
    %396 = vector.load %arg3[%c5_152, %c0_153, %c0_154] : memref<6x64x32xbf16, #tpu.memory_space<vmem>>, vector<1x64x32xbf16>
    %397 = vector.shape_cast %396 : vector<1x64x32xbf16> to vector<64x32xbf16>
    %398 = arith.truncf %395 : vector<32x16xf32> to vector<32x16xbf16>
    %cst_155 = arith.constant dense<0.000000e+00> : vector<64x16xf32>
    %399 = tpu.matmul %397, %398, %cst_155 {dimension_numbers = #tpu.dot_dimension_numbers<[1], [0], [0], [1], [0, 0, 1, 1], [], []>} : vector<64x32xbf16>, vector<32x16xbf16>, vector<64x16xf32> -> vector<64x16xf32>
    %c5_156 = arith.constant 5 : index
    %c0_157 = arith.constant 0 : index
    %c0_158 = arith.constant 0 : index
    %400 = vector.load %arg6[%c5_156, %c0_157, %c0_158] : memref<6x64x1xf32, #tpu.memory_space<vmem>>, vector<1x64x1xf32>
    %401 = vector.shape_cast %400 : vector<1x64x1xf32> to vector<64x1xf32>
    %402 = vector.broadcast %401 : vector<64x1xf32> to vector<64x16xf32>
    %403 = arith.addf %399, %402 : vector<64x16xf32>
    %cst_159 = arith.constant 0.000000e+00 : f32
    %404 = vector.broadcast %cst_159 : f32 to vector<64x16xf32>
    %405 = arith.maximumf %403, %404 : vector<64x16xf32>
    %c5_160 = arith.constant 5 : index
    %c0_161 = arith.constant 0 : index
    %c0_162 = arith.constant 0 : index
    %406 = vector.load %arg4[%c5_160, %c0_161, %c0_162] : memref<6x32x64xbf16, #tpu.memory_space<vmem>>, vector<1x32x64xbf16>
    %407 = vector.shape_cast %406 : vector<1x32x64xbf16> to vector<32x64xbf16>
    %408 = arith.truncf %405 : vector<64x16xf32> to vector<64x16xbf16>
    %cst_163 = arith.constant dense<0.000000e+00> : vector<32x16xf32>
    %409 = tpu.matmul %407, %408, %cst_163 {dimension_numbers = #tpu.dot_dimension_numbers<[1], [0], [0], [1], [0, 0, 1, 1], [], []>} : vector<32x64xbf16>, vector<64x16xbf16>, vector<32x16xf32> -> vector<32x16xf32>
    %410 = vector.broadcast %364 : vector<32x1xf32> to vector<32x16xf32>
    %411 = arith.addf %409, %410 : vector<32x16xf32>
    %412 = arith.addf %395, %411 : vector<32x16xf32>
    %cst_164 = arith.constant dense<0.000000e+00> : vector<16xf32>
    %413 = vector.multi_reduction <add>, %412, %cst_164 [0] : vector<32x16xf32> to vector<16xf32>
    %414 = vector.shape_cast %413 : vector<16xf32> to vector<1x16xf32>
    %cst_165 = arith.constant 3.200000e+01 : f32
    %415 = vector.broadcast %cst_165 : f32 to vector<1x16xf32>
    %416 = arith.divf %414, %415 : vector<1x16xf32>
    %417 = vector.broadcast %416 : vector<1x16xf32> to vector<32x16xf32>
    %418 = arith.subf %412, %417 : vector<32x16xf32>
    %419 = arith.mulf %418, %418 : vector<32x16xf32>
    %cst_166 = arith.constant dense<0.000000e+00> : vector<16xf32>
    %420 = vector.multi_reduction <add>, %419, %cst_166 [0] : vector<32x16xf32> to vector<16xf32>
    %421 = vector.shape_cast %420 : vector<16xf32> to vector<1x16xf32>
    %cst_167 = arith.constant 3.200000e+01 : f32
    %422 = vector.broadcast %cst_167 : f32 to vector<1x16xf32>
    %423 = arith.divf %421, %422 : vector<1x16xf32>
    %cst_168 = arith.constant 9.99999974E-6 : f32
    %424 = vector.broadcast %cst_168 : f32 to vector<1x16xf32>
    %425 = arith.addf %423, %424 : vector<1x16xf32>
    %426 = math.rsqrt %425 : vector<1x16xf32>
    %427 = vector.broadcast %426 : vector<1x16xf32> to vector<32x16xf32>
    %428 = arith.mulf %418, %427 : vector<32x16xf32>
    %429 = vector.broadcast %367 : vector<32x1xf32> to vector<32x16xf32>
    %430 = arith.mulf %428, %429 : vector<32x16xf32>
    %431 = vector.broadcast %368 : vector<32x1xf32> to vector<32x16xf32>
    %432 = arith.addf %430, %431 : vector<32x16xf32>
    %c0_169 = arith.constant 0 : index
    %c0_170 = arith.constant 0 : index
    %433 = vector.load %arg7[%c0_169, %c0_170] : memref<8x32xbf16, #tpu.memory_space<vmem>>, vector<8x32xbf16>
    %434 = arith.truncf %432 : vector<32x16xf32> to vector<32x16xbf16>
    %cst_171 = arith.constant dense<0.000000e+00> : vector<8x16xf32>
    %435 = tpu.matmul %433, %434, %cst_171 {dimension_numbers = #tpu.dot_dimension_numbers<[1], [0], [0], [1], [0, 0, 1, 1], [], []>} : vector<8x32xbf16>, vector<32x16xbf16>, vector<8x16xf32> -> vector<8x16xf32>
    %c0_172 = arith.constant 0 : index
    %c0_173 = arith.constant 0 : index
    %436 = vector.load %arg8[%c0_172, %c0_173] : memref<8x1xf32, #tpu.memory_space<vmem>>, vector<8x1xf32>
    %437 = vector.broadcast %436 : vector<8x1xf32> to vector<8x16xf32>
    %438 = arith.addf %435, %437 : vector<8x16xf32>
    %c0_174 = arith.constant 0 : index
    %c0_175 = arith.constant 0 : index
    %439 = vector.load %arg9[%c0_174, %c0_175] : memref<8x16xf32, #tpu.memory_space<vmem>>, vector<8x16xf32>
    tpu.vector_store %arg9[%c0_174, %c0_175], %438 {strides = array<i32>} : memref<8x16xf32, #tpu.memory_space<vmem>>, vector<8x16xf32>,
    return
  }
  func.func @transform_0(%arg0: i32) -> (i32, i32) {
    %c0_i32 = arith.constant 0 : i32
    %c0_i32_0 = arith.constant 0 : i32
    return %c0_i32, %arg0 : i32, i32
  }
  func.func @transform_1(%arg0: i32) -> (i32, i32, i32) {
    %c0_i32 = arith.constant 0 : i32
    %c0_i32_0 = arith.constant 0 : i32
    %c0_i32_1 = arith.constant 0 : i32
    %c0_i32_2 = arith.constant 0 : i32
    return %c0_i32, %c0_i32_0, %c0_i32_1 : i32, i32, i32
  }
  func.func @transform_2(%arg0: i32) -> (i32, i32, i32) {
    %c0_i32 = arith.constant 0 : i32
    %c0_i32_0 = arith.constant 0 : i32
    %c0_i32_1 = arith.constant 0 : i32
    %c0_i32_2 = arith.constant 0 : i32
    return %c0_i32, %c0_i32_0, %c0_i32_1 : i32, i32, i32
  }
  func.func @transform_3(%arg0: i32) -> (i32, i32, i32) {
    %c0_i32 = arith.constant 0 : i32
    %c0_i32_0 = arith.constant 0 : i32
    %c0_i32_1 = arith.constant 0 : i32
    %c0_i32_2 = arith.constant 0 : i32
    return %c0_i32, %c0_i32_0, %c0_i32_1 : i32, i32, i32
  }
  func.func @transform_4(%arg0: i32) -> (i32, i32, i32) {
    %c0_i32 = arith.constant 0 : i32
    %c0_i32_0 = arith.constant 0 : i32
    %c0_i32_1 = arith.constant 0 : i32
    %c0_i32_2 = arith.constant 0 : i32
    return %c0_i32, %c0_i32_0, %c0_i32_1 : i32, i32, i32
  }
  func.func @transform_5(%arg0: i32) -> (i32, i32, i32) {
    %c0_i32 = arith.constant 0 : i32
    %c0_i32_0 = arith.constant 0 : i32
    %c0_i32_1 = arith.constant 0 : i32
    %c0_i32_2 = arith.constant 0 : i32
    return %c0_i32, %c0_i32_0, %c0_i32_1 : i32, i32, i32
  }
  func.func @transform_6(%arg0: i32) -> (i32, i32) {
    %c0_i32 = arith.constant 0 : i32
    %c0_i32_0 = arith.constant 0 : i32
    %c0_i32_1 = arith.constant 0 : i32
    return %c0_i32, %c0_i32_0 : i32, i32
  }
  func.func @transform_7(%arg0: i32) -> (i32, i32) {
    %c0_i32 = arith.constant 0 : i32
    %c0_i32_0 = arith.constant 0 : i32
    %c0_i32_1 = arith.constant 0 : i32
    return %c0_i32, %c0_i32_0 : i32, i32
  }
  func.func @transform_8(%arg0: i32) -> (i32, i32) {
    %c0_i32 = arith.constant 0 : i32
    %c0_i32_0 = arith.constant 0 : i32
    return %c0_i32, %arg0 : i32, i32
  }
}

</mosaic_0001>

<llo_original>
// kernel: _forward.1
$region0: #{_forward.1}
  #allocation0 [shape = 'u32[]', space=smem, size = 0x4, offset = 0x4, fixed_abs, tag = 'smem constant byte address 0x4 - core index']
  #allocation1 [shape = 'u32[144,128]{1,0:T(1,128)}', space=vmem, size = 0x12000, scoped, tag = 'internal scratch']
  %s0 = inlined_call_operand.vmem [shape: f32[32,16], index: 0, kind: input, shape index: {}]
  %s1 = inlined_call_operand.vmem [shape: bf16[6,32,32], index: 1, kind: input, shape index: {}]
  %s2 = inlined_call_operand.vmem [shape: bf16[6,64,32], index: 2, kind: input, shape index: {}]
  %s3 = inlined_call_operand.vmem [shape: bf16[6,32,64], index: 3, kind: input, shape index: {}]
  %s4 = inlined_call_operand.vmem [shape: f32[6,32,8], index: 4, kind: input, shape index: {}]
  %s5 = inlined_call_operand.vmem [shape: f32[6,64,1], index: 5, kind: input, shape index: {}]
  %s6 = inlined_call_operand.vmem [shape: bf16[8,32], index: 6, kind: input, shape index: {}]
  %s7 = inlined_call_operand.vmem [shape: f32[8,1], index: 7, kind: input, shape index: {}]
  %s8 = inlined_call_operand.hbm [shape: f32[8,16], index: 8, kind: output, shape index: {}]
  %s9 = sld [smem:[#allocation0]]
  $region42: #{_forward.1} parent=0
    _
  %s11 = ssub.s32 1, %s9
  %s12 = scalar_select 0, %s11, %s9
  $region1: #{_forward.1} parent=0
    #allocation2 [shape = 'u8[4096]{0}', space=vmem, size = 0x1000, scoped, tag = 'output window, operand 0, single buffered']
    #allocation3 [shape = 's32[1]{0}', space=sflag, size = 0x4, scoped, tag = 'scoped memory for _forward.1']
    %13 = vsyncpa [#allocation3], 0
    // Predicated region
    $region2: #{_forward.1} parent=1 // pred_check
      _
    $region3: #{_forward.1} parent=1 // pred_check_branch
      %15 = sbr.rel (0) target = $region5
    $region4: #{_forward.1} parent=1 // pred_region
      _
    $region5: #{_forward.1} parent=1 // pred_fallthru
      _
    // Predicated region
    $region6: #{_forward.1} parent=1 // pred_check
      _
    $region7: #{_forward.1} parent=1 // pred_check_branch
      %17 = sbr.rel (0) target = $region9
    $region8: #{_forward.1} parent=1 // pred_region
      _
    $region9: #{_forward.1} parent=1 // pred_fallthru
      _
    // Predicated region
    $region10: #{_forward.1} parent=1 // pred_check
      _
    $region11: #{_forward.1} parent=1 // pred_check_branch
      %19 = sbr.rel (0) target = $region13
    $region12: #{_forward.1} parent=1 // pred_region
      _
    $region13: #{_forward.1} parent=1 // pred_fallthru
      _
    // Predicated region
    $region14: #{_forward.1} parent=1 // pred_check
      _
    $region15: #{_forward.1} parent=1 // pred_check_branch
      %21 = sbr.rel (0) target = $region17
    $region16: #{_forward.1} parent=1 // pred_region
      _
    $region17: #{_forward.1} parent=1 // pred_fallthru
      _
    // Predicated region
    $region18: #{_forward.1} parent=1 // pred_check
      _
    $region19: #{_forward.1} parent=1 // pred_check_branch
      %23 = sbr.rel (0) target = $region21
    $region20: #{_forward.1} parent=1 // pred_region
      _
    $region21: #{_forward.1} parent=1 // pred_fallthru
      _
    // Predicated region
    $region22: #{_forward.1} parent=1 // pred_check
      _
    $region23: #{_forward.1} parent=1 // pred_check_branch
      %25 = sbr.rel (0) target = $region25
    $region24: #{_forward.1} parent=1 // pred_region
      _
    $region25: #{_forward.1} parent=1 // pred_fallthru
      _
    // Predicated region
    $region26: #{_forward.1} parent=1 // pred_check
      _
    $region27: #{_forward.1} parent=1 // pred_check_branch
      %27 = sbr.rel (0) target = $region29
    $region28: #{_forward.1} parent=1 // pred_region
      _
    $region29: #{_forward.1} parent=1 // pred_fallthru
      _
    // Predicated region
    $region30: #{_forward.1} parent=1 // pred_check
      _
    $region31: #{_forward.1} parent=1 // pred_check_branch
      %29 = sbr.rel (0) target = $region33
    $region32: #{_forward.1} parent=1 // pred_region
      _
    $region33: #{_forward.1} parent=1 // pred_fallthru
      _
    %v31 = vld [vmem:[%s0] sm:$0xff]
    %v32 = vld [vmem:[%s0 + $0x8] sm:$0xff]
    %v33 = vld [vmem:[%s0 + $0x10] sm:$0xff]
    %v34 = vld [vmem:[%s0 + $0x18] sm:$0xff]
    %v35 = vld [vmem:[%s4] sm:$0xff]
    %v36 = vld [vmem:[%s4 + $0x8] sm:$0xff]
    %v37 = vld [vmem:[%s4 + $0x10] sm:$0xff]
    %v38 = vld [vmem:[%s4 + $0x18] sm:$0xff]
    %v39 = vld [vmem:[%s1] sm:$0xf]
    %v40 = vld [vmem:[%s1 + $0x4] sm:$0xf]
    %v41 = vld [vmem:[%s1 + $0x8] sm:$0xf]
    %v42 = vld [vmem:[%s1 + $0xc] sm:$0xf]
    %v43 = vpack.c.bf16 %v32, %v31
    %v44 = vpack.c.bf16 %v34, %v33
    %46 = vset.pattern.permute.xlu0 0
    %47 = vperm.xlu0 %46, %v35
    %v48 = vpop.permute.xlu0 %47
    %51 = vset.pattern.permute.xlu0 0
    %52 = vperm.xlu0 %51, %v36
    %v53 = vpop.permute.xlu0 %52
    %56 = vset.pattern.permute.xlu0 0
    %57 = vperm.xlu0 %56, %v37
    %v58 = vpop.permute.xlu0 %57
    %61 = vset.pattern.permute.xlu0 0
    %62 = vperm.xlu0 %61, %v38
    %v63 = vpop.permute.xlu0 %62
    %v69 = vunpack.c.l.b16 %v39
    %v70 = vunpack.c.l.b16 %v40
    %v71 = vunpack.c.l.b16 %v41
    %v72 = vunpack.c.l.b16 %v42
    %v73 = vpack.c.b16 %v70, %v69
    %v74 = vpack.c.b16 %v72, %v71
    %vm75 = vcmask 261120
    %v77 = vsel %vm75, %v73, 0
    %v80 = vsel %vm75, %v74, 0
    %82 = vmatprep.subr.bf16.mxu0 0
    %83 = vmatpush1.bf16.msra.mxu0 0
    %84 = vmatprep.subr.bf16.mxu0 0
    %85 = vmatpush1.bf16.msra.mxu0 0
    %86 = vmatprep.subr.bf16.mxu0 0
    %87 = vmatpush1.bf16.msra.mxu0 0
    %88 = vmatprep.subr.bf16.mxu0 0
    %89 = vmatpush1.bf16.msra.mxu0 0
    %90 = vmatprep.subr.bf16.mxu0 0
    %91 = vmatpush1.bf16.msra.mxu0 0
    %92 = vmatprep.subr.bf16.mxu0 0
    %93 = vmatpush1.bf16.msra.mxu0 0
    %94 = vmatprep.subr.bf16.mxu0 0
    %95 = vmatpush1.bf16.msra.mxu0 %v44
    %96 = vmatprep.subr.bf16.mxu0 0
    %97 = vmatpush1.bf16.msra.mxu0 %v43
    %98 = vmatprep.subr.bf16.mxu0 0
    %99 = vmatpush2.bf16.msra.mxu0 0
    %100 = vmatprep.subr.bf16.mxu0 0
    %101 = vmatpush2.bf16.msra.mxu0 0
    %102 = vmatprep.subr.bf16.mxu0 0
    %103 = vmatpush2.bf16.msra.mxu0 0
    %104 = vmatprep.subr.bf16.mxu0 0
    %105 = vmatpush2.bf16.msra.mxu0 0
    %106 = vmatprep.subr.bf16.mxu0 0
    %107 = vmatpush2.bf16.msra.mxu0 0
    %108 = vmatprep.subr.bf16.mxu0 0
    %109 = vmatpush2.bf16.msra.mxu0 0
    %110 = vmatprep.subr.bf16.mxu0 0
    %111 = vmatpush2.bf16.msra.mxu0 0
    %112 = vmatprep.subr.bf16.mxu0 0
    %113 = vmatpush2.bf16.msra.mxu0 0
    %114 = vmatprep.mubr.bf16.mxu0 0
    %115 = vmatmul.mubr.bf16.gmra.mxu0 %v77
    %v116 = vpop.f32.mrf.mxu0
    %v117 = vadd.f32 %v48, %v116
    %v118 = vpop.f32.mrf.mxu0
    %v119 = vpop.f32.mrf.mxu0
    %v120 = vadd.f32 %v53, %v119
    %v121 = vpop.f32.mrf.mxu0
    %122 = vmatprep.mubr.bf16.mxu0 0
    %123 = vmatmul.mubr.bf16.gmra.mxu0 %v80
    %v124 = vpop.f32.mrf.mxu0
    %v125 = vadd.f32 %v58, %v124
    %v126 = vpop.f32.mrf.mxu0
    %v127 = vpop.f32.mrf.mxu0
    %v128 = vadd.f32 %v63, %v127
    %v129 = vpop.f32.mrf.mxu0
    %130 = vdwg.mxu0
    %v131 = vadd.f32 %v31, %v117
    %v132 = vadd.f32 %v32, %v120
    %v133 = vadd.f32 %v33, %v125
    %v134 = vadd.f32 %v34, %v128
    %vm135 = vcmask 130048
    %v136 = vsel %vm135, %v131, 0.0
    %v137 = vsel %vm135, %v132, 0.0
    %v138 = vadd.f32 %v136, %v137
    %v139 = vsel %vm135, %v133, 0.0
    %v140 = vadd.f32 %v138, %v139
    %v141 = vsel %vm135, %v134, 0.0
    %v142 = vadd.f32 %v140, %v141
    %v143 = vrot.slane %v142, 4
    %v144 = vadd.f32 %v142, %v143
    %v145 = vrot.slane %v144, 2
    %v146 = vadd.f32 %v144, %v145
    %v147 = vrot.slane %v146, 1
    %v148 = vadd.f32 %v146, %v147
    %v149 = vrcp.pop 32.0
    %v150 = vmul.f32 %v148, %v149
    %v151 = vsub.f32 %v131, %v150
    %v152 = vsub.f32 %v132, %v150
    %v153 = vsub.f32 %v133, %v150
    %v154 = vsub.f32 %v134, %v150
    %v155 = vmul.f32 %v151, %v151
    %v156 = vmul.f32 %v152, %v152
    %v157 = vmul.f32 %v153, %v153
    %v158 = vmul.f32 %v154, %v154
    %v159 = vsel %vm135, %v155, 0.0
    %v160 = vsel %vm135, %v156, 0.0
    %v161 = vadd.f32 %v159, %v160
    %v162 = vsel %vm135, %v157, 0.0
    %v163 = vadd.f32 %v161, %v162
    %v164 = vsel %vm135, %v158, 0.0
    %v165 = vadd.f32 %v163, %v164
    %v166 = vrot.slane %v165, 4
    %v167 = vadd.f32 %v165, %v166
    %v168 = vrot.slane %v167, 2
    %v169 = vadd.f32 %v167, %v168
    %v170 = vrot.slane %v169, 1
    %v171 = vadd.f32 %v169, %v170
    %v172 = vmul.f32 %v171, %v149
    %v173 = vadd.f32 %v172, 1e-05
    %v174 = vrsqrt.pop %v173
    %v175 = vmul.f32 %v151, %v174
    %v176 = vmul.f32 %v152, %v174
    %v177 = vmul.f32 %v153, %v174
    %v178 = vmul.f32 %v154, %v174
    %179 = vset.pattern.permute.xlu0 2
    %180 = vperm.xlu0 %179, %v35
    %v181 = vpop.permute.xlu0 %180
    %183 = vset.pattern.permute.xlu0 2
    %184 = vperm.xlu0 %183, %v36
    %v185 = vpop.permute.xlu0 %184
    %187 = vset.pattern.permute.xlu0 2
    %188 = vperm.xlu0 %187, %v37
    %v189 = vpop.permute.xlu0 %188
    %191 = vset.pattern.permute.xlu0 2
    %192 = vperm.xlu0 %191, %v38
    %v193 = vpop.permute.xlu0 %192
    %v195 = vmul.f32 %v175, %v181
    %v196 = vmul.f32 %v176, %v185
    %v197 = vmul.f32 %v177, %v189
    %v198 = vmul.f32 %v178, %v193
    %199 = vset.pattern.permute.xlu0 3
    %200 = vperm.xlu0 %199, %v35
    %v201 = vpop.permute.xlu0 %200
    %203 = vset.pattern.permute.xlu0 3
    %204 = vperm.xlu0 %203, %v36
    %v205 = vpop.permute.xlu0 %204
    %207 = vset.pattern.permute.xlu0 3
    %208 = vperm.xlu0 %207, %v37
    %v209 = vpop.permute.xlu0 %208
    %211 = vset.pattern.permute.xlu0 3
    %212 = vperm.xlu0 %211, %v38
    %v213 = vpop.permute.xlu0 %212
    %v215 = vadd.f32 %v195, %v201
    %v216 = vadd.f32 %v196, %v205
    %v217 = vadd.f32 %v197, %v209
    %v218 = vadd.f32 %v198, %v213
    %v219 = vld [vmem:[%s2] sm:$0xf]
    %v220 = vld [vmem:[%s2 + $0x4] sm:$0xf]
    %v221 = vld [vmem:[%s2 + $0x8] sm:$0xf]
    %v222 = vld [vmem:[%s2 + $0xc] sm:$0xf]
    %v223 = vld [vmem:[%s2 + $0x10] sm:$0xf]
    %v224 = vld [vmem:[%s2 + $0x14] sm:$0xf]
    %v225 = vld [vmem:[%s2 + $0x18] sm:$0xf]
    %v226 = vld [vmem:[%s2 + $0x1c] sm:$0xf]
    %v227 = vpack.c.bf16 %v216, %v215
    %v228 = vpack.c.bf16 %v218, %v217
    %v229 = vld [vmem:[%s5] sm:$0xff]
    %v230 = vld [vmem:[%s5 + $0x8] sm:$0xff]
    %v231 = vld [vmem:[%s5 + $0x10] sm:$0xff]
    %v232 = vld [vmem:[%s5 + $0x18] sm:$0xff]
    %v233 = vld [vmem:[%s5 + $0x20] sm:$0xff]
    %v234 = vld [vmem:[%s5 + $0x28] sm:$0xff]
    %v235 = vld [vmem:[%s5 + $0x30] sm:$0xff]
    %v236 = vld [vmem:[%s5 + $0x38] sm:$0xff]
    %238 = vset.pattern.permute.xlu0 0
    %239 = vperm.xlu0 %238, %v229
    %v240 = vpop.permute.xlu0 %239
    %243 = vset.pattern.permute.xlu0 0
    %244 = vperm.xlu0 %243, %v230
    %v245 = vpop.permute.xlu0 %244
    %248 = vset.pattern.permute.xlu0 0
    %249 = vperm.xlu0 %248, %v231
    %v250 = vpop.permute.xlu0 %249
    %253 = vset.pattern.permute.xlu0 0
    %254 = vperm.xlu0 %253, %v232
    %v255 = vpop.permute.xlu0 %254
    %258 = vset.pattern.permute.xlu0 0
    %259 = vperm.xlu0 %258, %v233
    %v260 = vpop.permute.xlu0 %259
    %263 = vset.pattern.permute.xlu0 0
    %264 = vperm.xlu0 %263, %v234
    %v265 = vpop.permute.xlu0 %264
    %268 = vset.pattern.permute.xlu0 0
    %269 = vperm.xlu0 %268, %v235
    %v270 = vpop.permute.xlu0 %269
    %273 = vset.pattern.permute.xlu0 0
    %274 = vperm.xlu0 %273, %v236
    %v275 = vpop.permute.xlu0 %274
    %v285 = vunpack.c.l.b16 %v219
    %v286 = vunpack.c.l.b16 %v220
    %v287 = vunpack.c.l.b16 %v221
    %v288 = vunpack.c.l.b16 %v222
    %v289 = vunpack.c.l.b16 %v223
    %v290 = vunpack.c.l.b16 %v224
    %v291 = vunpack.c.l.b16 %v225
    %v292 = vunpack.c.l.b16 %v226
    %v293 = vpack.c.b16 %v286, %v285
    %v294 = vpack.c.b16 %v288, %v287
    %v295 = vpack.c.b16 %v290, %v289
    %v296 = vpack.c.b16 %v292, %v291
    %v298 = vsel %vm75, %v293, 0
    %v301 = vsel %vm75, %v294, 0
    %v304 = vsel %vm75, %v295, 0
    %v307 = vsel %vm75, %v296, 0
    %309 = vmatprep.subr.bf16.mxu0 0
    %310 = vmatpush1.bf16.msra.mxu0 0
    %311 = vmatprep.subr.bf16.mxu0 0
    %312 = vmatpush1.bf16.msra.mxu0 0
    %313 = vmatprep.subr.bf16.mxu0 0
    %314 = vmatpush1.bf16.msra.mxu0 0
    %315 = vmatprep.subr.bf16.mxu0 0
    %316 = vmatpush1.bf16.msra.mxu0 0
    %317 = vmatprep.subr.bf16.mxu0 0
    %318 = vmatpush1.bf16.msra.mxu0 0
    %319 = vmatprep.subr.bf16.mxu0 0
    %320 = vmatpush1.bf16.msra.mxu0 0
    %321 = vmatprep.subr.bf16.mxu0 0
    %322 = vmatpush1.bf16.msra.mxu0 %v228
    %323 = vmatprep.subr.bf16.mxu0 0
    %324 = vmatpush1.bf16.msra.mxu0 %v227
    %325 = vmatprep.subr.bf16.mxu0 0
    %326 = vmatpush2.bf16.msra.mxu0 0
    %327 = vmatprep.subr.bf16.mxu0 0
    %328 = vmatpush2.bf16.msra.mxu0 0
    %329 = vmatprep.subr.bf16.mxu0 0
    %330 = vmatpush2.bf16.msra.mxu0 0
    %331 = vmatprep.subr.bf16.mxu0 0
    %332 = vmatpush2.bf16.msra.mxu0 0
    %333 = vmatprep.subr.bf16.mxu0 0
    %334 = vmatpush2.bf16.msra.mxu0 0
    %335 = vmatprep.subr.bf16.mxu0 0
    %336 = vmatpush2.bf16.msra.mxu0 0
    %337 = vmatprep.subr.bf16.mxu0 0
    %338 = vmatpush2.bf16.msra.mxu0 0
    %339 = vmatprep.subr.bf16.mxu0 0
    %340 = vmatpush2.bf16.msra.mxu0 0
    %341 = vmatprep.mubr.bf16.mxu0 0
    %342 = vmatmul.mubr.bf16.gmra.mxu0 %v298
    %v343 = vpop.f32.mrf.mxu0
    %v344 = vadd.f32 %v240, %v343
    %v345 = vpop.f32.mrf.mxu0
    %v346 = vpop.f32.mrf.mxu0
    %v347 = vadd.f32 %v245, %v346
    %v348 = vpop.f32.mrf.mxu0
    %349 = vmatprep.mubr.bf16.mxu0 0
    %350 = vmatmul.mubr.bf16.gmra.mxu0 %v301
    %v351 = vpop.f32.mrf.mxu0
    %v352 = vadd.f32 %v250, %v351
    %v353 = vpop.f32.mrf.mxu0
    %v354 = vpop.f32.mrf.mxu0
    %v355 = vadd.f32 %v255, %v354
    %v356 = vpop.f32.mrf.mxu0
    %357 = vmatprep.mubr.bf16.mxu0 0
    %358 = vmatmul.mubr.bf16.gmra.mxu0 %v304
    %v359 = vpop.f32.mrf.mxu0
    %v360 = vadd.f32 %v260, %v359
    %v361 = vpop.f32.mrf.mxu0
    %v362 = vpop.f32.mrf.mxu0
    %v363 = vadd.f32 %v265, %v362
    %v364 = vpop.f32.mrf.mxu0
    %365 = vmatprep.mubr.bf16.mxu0 0
    %366 = vmatmul.mubr.bf16.gmra.mxu0 %v307
    %v367 = vpop.f32.mrf.mxu0
    %v368 = vadd.f32 %v270, %v367
    %v369 = vpop.f32.mrf.mxu0
    %v370 = vpop.f32.mrf.mxu0
    %v371 = vadd.f32 %v275, %v370
    %v372 = vpop.f32.mrf.mxu0
    %373 = vdwg.mxu0
    %v374 = vmax.f32 %v344, 0.0
    %v375 = vmax.f32 %v347, 0.0
    %v376 = vmax.f32 %v352, 0.0
    %v377 = vmax.f32 %v355, 0.0
    %v378 = vmax.f32 %v360, 0.0
    %v379 = vmax.f32 %v363, 0.0
    %v380 = vmax.f32 %v368, 0.0
    %v381 = vmax.f32 %v371, 0.0
    %v382 = vld [vmem:[%s3] sm:$0xf]
    %v383 = vld [vmem:[%s3 + $0x4] sm:$0xf]
    %v384 = vld [vmem:[%s3 + $0x8] sm:$0xf]
    %v385 = vld [vmem:[%s3 + $0xc] sm:$0xf]
    %v386 = vpack.c.bf16 %v375, %v374
    %v387 = vpack.c.bf16 %v377, %v376
    %v388 = vpack.c.bf16 %v379, %v378
    %v389 = vpack.c.bf16 %v381, %v380
    %390 = vset.pattern.permute.xlu0 1
    %391 = vperm.xlu0 %390, %v35
    %v392 = vpop.permute.xlu0 %391
    %394 = vset.pattern.permute.xlu0 1
    %395 = vperm.xlu0 %394, %v36
    %v396 = vpop.permute.xlu0 %395
    %398 = vset.pattern.permute.xlu0 1
    %399 = vperm.xlu0 %398, %v37
    %v400 = vpop.permute.xlu0 %399
    %402 = vset.pattern.permute.xlu0 1
    %403 = vperm.xlu0 %402, %v38
    %v404 = vpop.permute.xlu0 %403
    %v410 = vunpack.c.l.b16 %v382
    %v411 = vunpack.c.l.b16 %v383
    %v412 = vunpack.c.l.b16 %v384
    %v413 = vunpack.c.l.b16 %v385
    %v414 = vpack.c.b16 %v411, %v410
    %v415 = vpack.c.b16 %v413, %v412
    %vm416 = vcmask 523264
    %v418 = vsel %vm416, %v414, 0
    %v421 = vsel %vm416, %v415, 0
    %423 = vmatprep.subr.bf16.mxu0 0
    %424 = vmatpush1.bf16.msra.mxu0 0
    %425 = vmatprep.subr.bf16.mxu0 0
    %426 = vmatpush1.bf16.msra.mxu0 0
    %427 = vmatprep.subr.bf16.mxu0 0
    %428 = vmatpush1.bf16.msra.mxu0 0
    %429 = vmatprep.subr.bf16.mxu0 0
    %430 = vmatpush1.bf16.msra.mxu0 0
    %431 = vmatprep.subr.bf16.mxu0 0
    %432 = vmatpush1.bf16.msra.mxu0 %v389
    %433 = vmatprep.subr.bf16.mxu0 0
    %434 = vmatpush1.bf16.msra.mxu0 %v388
    %435 = vmatprep.subr.bf16.mxu0 0
    %436 = vmatpush1.bf16.msra.mxu0 %v387
    %437 = vmatprep.subr.bf16.mxu0 0
    %438 = vmatpush1.bf16.msra.mxu0 %v386
    %439 = vmatprep.subr.bf16.mxu0 0
    %440 = vmatpush2.bf16.msra.mxu0 0
    %441 = vmatprep.subr.bf16.mxu0 0
    %442 = vmatpush2.bf16.msra.mxu0 0
    %443 = vmatprep.subr.bf16.mxu0 0
    %444 = vmatpush2.bf16.msra.mxu0 0
    %445 = vmatprep.subr.bf16.mxu0 0
    %446 = vmatpush2.bf16.msra.mxu0 0
    %447 = vmatprep.subr.bf16.mxu0 0
    %448 = vmatpush2.bf16.msra.mxu0 0
    %449 = vmatprep.subr.bf16.mxu0 0
    %450 = vmatpush2.bf16.msra.mxu0 0
    %451 = vmatprep.subr.bf16.mxu0 0
    %452 = vmatpush2.bf16.msra.mxu0 0
    %453 = vmatprep.subr.bf16.mxu0 0
    %454 = vmatpush2.bf16.msra.mxu0 0
    %455 = vmatprep.mubr.bf16.mxu0 0
    %456 = vmatmul.mubr.bf16.gmra.mxu0 %v418
    %v457 = vpop.f32.mrf.mxu0
    %v458 = vadd.f32 %v392, %v457
    %v459 = vpop.f32.mrf.mxu0
    %v460 = vpop.f32.mrf.mxu0
    %v461 = vadd.f32 %v396, %v460
    %v462 = vpop.f32.mrf.mxu0
    %463 = vmatprep.mubr.bf16.mxu0 0
    %464 = vmatmul.mubr.bf16.gmra.mxu0 %v421
    %v465 = vpop.f32.mrf.mxu0
    %v466 = vadd.f32 %v400, %v465
    %v467 = vpop.f32.mrf.mxu0
    %v468 = vpop.f32.mrf.mxu0
    %v469 = vadd.f32 %v404, %v468
    %v470 = vpop.f32.mrf.mxu0
    %471 = vdwg.mxu0
    %v472 = vadd.f32 %v215, %v458
    %v473 = vadd.f32 %v216, %v461
    %v474 = vadd.f32 %v217, %v466
    %v475 = vadd.f32 %v218, %v469
    %v476 = vsel %vm135, %v472, 0.0
    %v477 = vsel %vm135, %v473, 0.0
    %v478 = vadd.f32 %v476, %v477
    %v479 = vsel %vm135, %v474, 0.0
    %v480 = vadd.f32 %v478, %v479
    %v481 = vsel %vm135, %v475, 0.0
    %v482 = vadd.f32 %v480, %v481
    %v483 = vrot.slane %v482, 4
    %v484 = vadd.f32 %v482, %v483
    %v485 = vrot.slane %v484, 2
    %v486 = vadd.f32 %v484, %v485
    %v487 = vrot.slane %v486, 1
    %v488 = vadd.f32 %v486, %v487
    %v489 = vmul.f32 %v488, %v149
    %v490 = vsub.f32 %v472, %v489
    %v491 = vsub.f32 %v473, %v489
    %v492 = vsub.f32 %v474, %v489
    %v493 = vsub.f32 %v475, %v489
    %v494 = vmul.f32 %v490, %v490
    %v495 = vmul.f32 %v491, %v491
    %v496 = vmul.f32 %v492, %v492
    %v497 = vmul.f32 %v493, %v493
    %v498 = vsel %vm135, %v494, 0.0
    %v499 = vsel %vm135, %v495, 0.0
    %v500 = vadd.f32 %v498, %v499
    %v501 = vsel %vm135, %v496, 0.0
    %v502 = vadd.f32 %v500, %v501
    %v503 = vsel %vm135, %v497, 0.0
    %v504 = vadd.f32 %v502, %v503
    %v505 = vrot.slane %v504, 4
    %v506 = vadd.f32 %v504, %v505
    %v507 = vrot.slane %v506, 2
    %v508 = vadd.f32 %v506, %v507
    %v509 = vrot.slane %v508, 1
    %v510 = vadd.f32 %v508, %v509
    %v511 = vmul.f32 %v510, %v149
    %v512 = vadd.f32 %v511, 1e-05
    %v513 = vrsqrt.pop %v512
    %v514 = vmul.f32 %v490, %v513
    %v515 = vmul.f32 %v491, %v513
    %v516 = vmul.f32 %v492, %v513
    %v517 = vmul.f32 %v493, %v513
    %518 = vset.pattern.permute.xlu0 4
    %519 = vperm.xlu0 %518, %v35
    %v520 = vpop.permute.xlu0 %519
    %522 = vset.pattern.permute.xlu0 4
    %523 = vperm.xlu0 %522, %v36
    %v524 = vpop.permute.xlu0 %523
    %526 = vset.pattern.permute.xlu0 4
    %527 = vperm.xlu0 %526, %v37
    %v528 = vpop.permute.xlu0 %527
    %530 = vset.pattern.permute.xlu0 4
    %531 = vperm.xlu0 %530, %v38
    %v532 = vpop.permute.xlu0 %531
    %v534 = vmul.f32 %v514, %v520
    %v535 = vmul.f32 %v515, %v524
    %v536 = vmul.f32 %v516, %v528
    %v537 = vmul.f32 %v517, %v532
    %538 = vset.pattern.permute.xlu0 5
    %539 = vperm.xlu0 %538, %v35
    %v540 = vpop.permute.xlu0 %539
    %542 = vset.pattern.permute.xlu0 5
    %543 = vperm.xlu0 %542, %v36
    %v544 = vpop.permute.xlu0 %543
    %546 = vset.pattern.permute.xlu0 5
    %547 = vperm.xlu0 %546, %v37
    %v548 = vpop.permute.xlu0 %547
    %550 = vset.pattern.permute.xlu0 5
    %551 = vperm.xlu0 %550, %v38
    %v552 = vpop.permute.xlu0 %551
    %v554 = vadd.f32 %v534, %v540
    %v555 = vadd.f32 %v535, %v544
    %v556 = vadd.f32 %v536, %v548
    %v557 = vadd.f32 %v537, %v552
    %s558 = scalar_lea.vmem %s4, 32
    %v559 = vld [vmem:[%s558] sm:$0xff]
    %v560 = vld [vmem:[%s558 + $0x8] sm:$0xff]
    %v561 = vld [vmem:[%s558 + $0x10] sm:$0xff]
    %v562 = vld [vmem:[%s558 + $0x18] sm:$0xff]
    %s563 = scalar_lea.vmem %s1, 16
    %v564 = vld [vmem:[%s563] sm:$0xf]
    %v565 = vld [vmem:[%s563 + $0x4] sm:$0xf]
    %v566 = vld [vmem:[%s563 + $0x8] sm:$0xf]
    %v567 = vld [vmem:[%s563 + $0xc] sm:$0xf]
    %v568 = vpack.c.bf16 %v555, %v554
    %v569 = vpack.c.bf16 %v557, %v556
    %571 = vset.pattern.permute.xlu0 0
    %572 = vperm.xlu0 %571, %v559
    %v573 = vpop.permute.xlu0 %572
    %576 = vset.pattern.permute.xlu0 0
    %577 = vperm.xlu0 %576, %v560
    %v578 = vpop.permute.xlu0 %577
    %581 = vset.pattern.permute.xlu0 0
    %582 = vperm.xlu0 %581, %v561
    %v583 = vpop.permute.xlu0 %582
    %586 = vset.pattern.permute.xlu0 0
    %587 = vperm.xlu0 %586, %v562
    %v588 = vpop.permute.xlu0 %587
    %v594 = vunpack.c.l.b16 %v564
    %v595 = vunpack.c.l.b16 %v565
    %v596 = vunpack.c.l.b16 %v566
    %v597 = vunpack.c.l.b16 %v567
    %v598 = vpack.c.b16 %v595, %v594
    %v599 = vpack.c.b16 %v597, %v596
    %v601 = vsel %vm75, %v598, 0
    %v604 = vsel %vm75, %v599, 0
    %606 = vmatprep.subr.bf16.mxu0 0
    %607 = vmatpush1.bf16.msra.mxu0 0
    %608 = vmatprep.subr.bf16.mxu0 0
    %609 = vmatpush1.bf16.msra.mxu0 0
    %610 = vmatprep.subr.bf16.mxu0 0
    %611 = vmatpush1.bf16.msra.mxu0 0
    %612 = vmatprep.subr.bf16.mxu0 0
    %613 = vmatpush1.bf16.msra.mxu0 0
    %614 = vmatprep.subr.bf16.mxu0 0
    %615 = vmatpush1.bf16.msra.mxu0 0
    %616 = vmatprep.subr.bf16.mxu0 0
    %617 = vmatpush1.bf16.msra.mxu0 0
    %618 = vmatprep.subr.bf16.mxu0 0
    %619 = vmatpush1.bf16.msra.mxu0 %v569
    %620 = vmatprep.subr.bf16.mxu0 0
    %621 = vmatpush1.bf16.msra.mxu0 %v568
    %622 = vmatprep.subr.bf16.mxu0 0
    %623 = vmatpush2.bf16.msra.mxu0 0
    %624 = vmatprep.subr.bf16.mxu0 0
    %625 = vmatpush2.bf16.msra.mxu0 0
    %626 = vmatprep.subr.bf16.mxu0 0
    %627 = vmatpush2.bf16.msra.mxu0 0
    %628 = vmatprep.subr.bf16.mxu0 0
    %629 = vmatpush2.bf16.msra.mxu0 0
    %630 = vmatprep.subr.bf16.mxu0 0
    %631 = vmatpush2.bf16.msra.mxu0 0
    %632 = vmatprep.subr.bf16.mxu0 0
    %633 = vmatpush2.bf16.msra.mxu0 0
    %634 = vmatprep.subr.bf16.mxu0 0
    %635 = vmatpush2.bf16.msra.mxu0 0
    %636 = vmatprep.subr.bf16.mxu0 0
    %637 = vmatpush2.bf16.msra.mxu0 0
    %638 = vmatprep.mubr.bf16.mxu0 0
    %639 = vmatmul.mubr.bf16.gmra.mxu0 %v601
    %v640 = vpop.f32.mrf.mxu0
    %v641 = vadd.f32 %v573, %v640
    %v642 = vpop.f32.mrf.mxu0
    %v643 = vpop.f32.mrf.mxu0
    %v644 = vadd.f32 %v578, %v643
    %v645 = vpop.f32.mrf.mxu0
    %646 = vmatprep.mubr.bf16.mxu0 0
    %647 = vmatmul.mubr.bf16.gmra.mxu0 %v604
    %v648 = vpop.f32.mrf.mxu0
    %v649 = vadd.f32 %v583, %v648
    %v650 = vpop.f32.mrf.mxu0
    %v651 = vpop.f32.mrf.mxu0
    %v652 = vadd.f32 %v588, %v651
    %v653 = vpop.f32.mrf.mxu0
    %654 = vdwg.mxu0
    %v655 = vadd.f32 %v554, %v641
    %v656 = vadd.f32 %v555, %v644
    %v657 = vadd.f32 %v556, %v649
    %v658 = vadd.f32 %v557, %v652
    %v659 = vsel %vm135, %v655, 0.0
    %v660 = vsel %vm135, %v656, 0.0
    %v661 = vadd.f32 %v659, %v660
    %v662 = vsel %vm135, %v657, 0.0
    %v663 = vadd.f32 %v661, %v662
    %v664 = vsel %vm135, %v658, 0.0
    %v665 = vadd.f32 %v663, %v664
    %v666 = vrot.slane %v665, 4
    %v667 = vadd.f32 %v665, %v666
    %v668 = vrot.slane %v667, 2
    %v669 = vadd.f32 %v667, %v668
    %v670 = vrot.slane %v669, 1
    %v671 = vadd.f32 %v669, %v670
    %v672 = vmul.f32 %v671, %v149
    %v673 = vsub.f32 %v655, %v672
    %v674 = vsub.f32 %v656, %v672
    %v675 = vsub.f32 %v657, %v672
    %v676 = vsub.f32 %v658, %v672
    %v677 = vmul.f32 %v673, %v673
    %v678 = vmul.f32 %v674, %v674
    %v679 = vmul.f32 %v675, %v675
    %v680 = vmul.f32 %v676, %v676
    %v681 = vsel %vm135, %v677, 0.0
    %v682 = vsel %vm135, %v678, 0.0
    %v683 = vadd.f32 %v681, %v682
    %v684 = vsel %vm135, %v679, 0.0
    %v685 = vadd.f32 %v683, %v684
    %v686 = vsel %vm135, %v680, 0.0
    %v687 = vadd.f32 %v685, %v686
    %v688 = vrot.slane %v687, 4
    %v689 = vadd.f32 %v687, %v688
    %v690 = vrot.slane %v689, 2
    %v691 = vadd.f32 %v689, %v690
    %v692 = vrot.slane %v691, 1
    %v693 = vadd.f32 %v691, %v692
    %v694 = vmul.f32 %v693, %v149
    %v695 = vadd.f32 %v694, 1e-05
    %v696 = vrsqrt.pop %v695
    %v697 = vmul.f32 %v673, %v696
    %v698 = vmul.f32 %v674, %v696
    %v699 = vmul.f32 %v675, %v696
    %v700 = vmul.f32 %v676, %v696
    %701 = vset.pattern.permute.xlu0 2
    %702 = vperm.xlu0 %701, %v559
    %v703 = vpop.permute.xlu0 %702
    %705 = vset.pattern.permute.xlu0 2
    %706 = vperm.xlu0 %705, %v560
    %v707 = vpop.permute.xlu0 %706
    %709 = vset.pattern.permute.xlu0 2
    %710 = vperm.xlu0 %709, %v561
    %v711 = vpop.permute.xlu0 %710
    %713 = vset.pattern.permute.xlu0 2
    %714 = vperm.xlu0 %713, %v562
    %v715 = vpop.permute.xlu0 %714
    %v717 = vmul.f32 %v697, %v703
    %v718 = vmul.f32 %v698, %v707
    %v719 = vmul.f32 %v699, %v711
    %v720 = vmul.f32 %v700, %v715
    %721 = vset.pattern.permute.xlu0 3
    %722 = vperm.xlu0 %721, %v559
    %v723 = vpop.permute.xlu0 %722
    %725 = vset.pattern.permute.xlu0 3
    %726 = vperm.xlu0 %725, %v560
    %v727 = vpop.permute.xlu0 %726
    %729 = vset.pattern.permute.xlu0 3
    %730 = vperm.xlu0 %729, %v561
    %v731 = vpop.permute.xlu0 %730
    %733 = vset.pattern.permute.xlu0 3
    %734 = vperm.xlu0 %733, %v562
    %v735 = vpop.permute.xlu0 %734
    %v737 = vadd.f32 %v717, %v723
    %v738 = vadd.f32 %v718, %v727
    %v739 = vadd.f32 %v719, %v731
    %v740 = vadd.f32 %v720, %v735
    %s741 = scalar_lea.vmem %s2, 32
    %v742 = vld [vmem:[%s741] sm:$0xf]
    %v743 = vld [vmem:[%s741 + $0x4] sm:$0xf]
    %v744 = vld [vmem:[%s741 + $0x8] sm:$0xf]
    %v745 = vld [vmem:[%s741 + $0xc] sm:$0xf]
    %v746 = vld [vmem:[%s741 + $0x10] sm:$0xf]
    %v747 = vld [vmem:[%s741 + $0x14] sm:$0xf]
    %v748 = vld [vmem:[%s741 + $0x18] sm:$0xf]
    %v749 = vld [vmem:[%s741 + $0x1c] sm:$0xf]
    %v750 = vpack.c.bf16 %v738, %v737
    %v751 = vpack.c.bf16 %v740, %v739
    %s752 = scalar_lea.vmem %s5, 64
    %v753 = vld [vmem:[%s752] sm:$0xff]
    %v754 = vld [vmem:[%s752 + $0x8] sm:$0xff]
    %v755 = vld [vmem:[%s752 + $0x10] sm:$0xff]
    %v756 = vld [vmem:[%s752 + $0x18] sm:$0xff]
    %v757 = vld [vmem:[%s752 + $0x20] sm:$0xff]
    %v758 = vld [vmem:[%s752 + $0x28] sm:$0xff]
    %v759 = vld [vmem:[%s752 + $0x30] sm:$0xff]
    %v760 = vld [vmem:[%s752 + $0x38] sm:$0xff]
    %762 = vset.pattern.permute.xlu0 0
    %763 = vperm.xlu0 %762, %v753
    %v764 = vpop.permute.xlu0 %763
    %767 = vset.pattern.permute.xlu0 0
    %768 = vperm.xlu0 %767, %v754
    %v769 = vpop.permute.xlu0 %768
    %772 = vset.pattern.permute.xlu0 0
    %773 = vperm.xlu0 %772, %v755
    %v774 = vpop.permute.xlu0 %773
    %777 = vset.pattern.permute.xlu0 0
    %778 = vperm.xlu0 %777, %v756
    %v779 = vpop.permute.xlu0 %778
    %782 = vset.pattern.permute.xlu0 0
    %783 = vperm.xlu0 %782, %v757
    %v784 = vpop.permute.xlu0 %783
    %787 = vset.pattern.permute.xlu0 0
    %788 = vperm.xlu0 %787, %v758
    %v789 = vpop.permute.xlu0 %788
    %792 = vset.pattern.permute.xlu0 0
    %793 = vperm.xlu0 %792, %v759
    %v794 = vpop.permute.xlu0 %793
    %797 = vset.pattern.permute.xlu0 0
    %798 = vperm.xlu0 %797, %v760
    %v799 = vpop.permute.xlu0 %798
    %v809 = vunpack.c.l.b16 %v742
    %v810 = vunpack.c.l.b16 %v743
    %v811 = vunpack.c.l.b16 %v744
    %v812 = vunpack.c.l.b16 %v745
    %v813 = vunpack.c.l.b16 %v746
    %v814 = vunpack.c.l.b16 %v747
    %v815 = vunpack.c.l.b16 %v748
    %v816 = vunpack.c.l.b16 %v749
    %v817 = vpack.c.b16 %v810, %v809
    %v818 = vpack.c.b16 %v812, %v811
    %v819 = vpack.c.b16 %v814, %v813
    %v820 = vpack.c.b16 %v816, %v815
    %v822 = vsel %vm75, %v817, 0
    %v825 = vsel %vm75, %v818, 0
    %v828 = vsel %vm75, %v819, 0
    %v831 = vsel %vm75, %v820, 0
    %833 = vmatprep.subr.bf16.mxu0 0
    %834 = vmatpush1.bf16.msra.mxu0 0
    %835 = vmatprep.subr.bf16.mxu0 0
    %836 = vmatpush1.bf16.msra.mxu0 0
    %837 = vmatprep.subr.bf16.mxu0 0
    %838 = vmatpush1.bf16.msra.mxu0 0
    %839 = vmatprep.subr.bf16.mxu0 0
    %840 = vmatpush1.bf16.msra.mxu0 0
    %841 = vmatprep.subr.bf16.mxu0 0
    %842 = vmatpush1.bf16.msra.mxu0 0
    %843 = vmatprep.subr.bf16.mxu0 0
    %844 = vmatpush1.bf16.msra.mxu0 0
    %845 = vmatprep.subr.bf16.mxu0 0
    %846 = vmatpush1.bf16.msra.mxu0 %v751
    %847 = vmatprep.subr.bf16.mxu0 0
    %848 = vmatpush1.bf16.msra.mxu0 %v750
    %849 = vmatprep.subr.bf16.mxu0 0
    %850 = vmatpush2.bf16.msra.mxu0 0
    %851 = vmatprep.subr.bf16.mxu0 0
    %852 = vmatpush2.bf16.msra.mxu0 0
    %853 = vmatprep.subr.bf16.mxu0 0
    %854 = vmatpush2.bf16.msra.mxu0 0
    %855 = vmatprep.subr.bf16.mxu0 0
    %856 = vmatpush2.bf16.msra.mxu0 0
    %857 = vmatprep.subr.bf16.mxu0 0
    %858 = vmatpush2.bf16.msra.mxu0 0
    %859 = vmatprep.subr.bf16.mxu0 0
    %860 = vmatpush2.bf16.msra.mxu0 0
    %861 = vmatprep.subr.bf16.mxu0 0
    %862 = vmatpush2.bf16.msra.mxu0 0
    %863 = vmatprep.subr.bf16.mxu0 0
    %864 = vmatpush2.bf16.msra.mxu0 0
    %865 = vmatprep.mubr.bf16.mxu0 0
    %866 = vmatmul.mubr.bf16.gmra.mxu0 %v822
    %v867 = vpop.f32.mrf.mxu0
    %v868 = vadd.f32 %v764, %v867
    %v869 = vpop.f32.mrf.mxu0
    %v870 = vpop.f32.mrf.mxu0
    %v871 = vadd.f32 %v769, %v870
    %v872 = vpop.f32.mrf.mxu0
    %873 = vmatprep.mubr.bf16.mxu0 0
    %874 = vmatmul.mubr.bf16.gmra.mxu0 %v825
    %v875 = vpop.f32.mrf.mxu0
    %v876 = vadd.f32 %v774, %v875
    %v877 = vpop.f32.mrf.mxu0
    %v878 = vpop.f32.mrf.mxu0
    %v879 = vadd.f32 %v779, %v878
    %v880 = vpop.f32.mrf.mxu0
    %881 = vmatprep.mubr.bf16.mxu0 0
    %882 = vmatmul.mubr.bf16.gmra.mxu0 %v828
    %v883 = vpop.f32.mrf.mxu0
    %v884 = vadd.f32 %v784, %v883
    %v885 = vpop.f32.mrf.mxu0
    %v886 = vpop.f32.mrf.mxu0
    %v887 = vadd.f32 %v789, %v886
    %v888 = vpop.f32.mrf.mxu0
    %889 = vmatprep.mubr.bf16.mxu0 0
    %890 = vmatmul.mubr.bf16.gmra.mxu0 %v831
    %v891 = vpop.f32.mrf.mxu0
    %v892 = vadd.f32 %v794, %v891
    %v893 = vpop.f32.mrf.mxu0
    %v894 = vpop.f32.mrf.mxu0
    %v895 = vadd.f32 %v799, %v894
    %v896 = vpop.f32.mrf.mxu0
    %897 = vdwg.mxu0
    %v898 = vmax.f32 %v868, 0.0
    %v899 = vmax.f32 %v871, 0.0
    %v900 = vmax.f32 %v876, 0.0
    %v901 = vmax.f32 %v879, 0.0
    %v902 = vmax.f32 %v884, 0.0
    %v903 = vmax.f32 %v887, 0.0
    %v904 = vmax.f32 %v892, 0.0
    %v905 = vmax.f32 %v895, 0.0
    %s906 = scalar_lea.vmem %s3, 16
    %v907 = vld [vmem:[%s906] sm:$0xf]
    %v908 = vld [vmem:[%s906 + $0x4] sm:$0xf]
    %v909 = vld [vmem:[%s906 + $0x8] sm:$0xf]
    %v910 = vld [vmem:[%s906 + $0xc] sm:$0xf]
    %v911 = vpack.c.bf16 %v899, %v898
    %v912 = vpack.c.bf16 %v901, %v900
    %v913 = vpack.c.bf16 %v903, %v902
    %v914 = vpack.c.bf16 %v905, %v904
    %915 = vset.pattern.permute.xlu0 1
    %916 = vperm.xlu0 %915, %v559
    %v917 = vpop.permute.xlu0 %916
    %919 = vset.pattern.permute.xlu0 1
    %920 = vperm.xlu0 %919, %v560
    %v921 = vpop.permute.xlu0 %920
    %923 = vset.pattern.permute.xlu0 1
    %924 = vperm.xlu0 %923, %v561
    %v925 = vpop.permute.xlu0 %924
    %927 = vset.pattern.permute.xlu0 1
    %928 = vperm.xlu0 %927, %v562
    %v929 = vpop.permute.xlu0 %928
    %v935 = vunpack.c.l.b16 %v907
    %v936 = vunpack.c.l.b16 %v908
    %v937 = vunpack.c.l.b16 %v909
    %v938 = vunpack.c.l.b16 %v910
    %v939 = vpack.c.b16 %v936, %v935
    %v940 = vpack.c.b16 %v938, %v937
    %v942 = vsel %vm416, %v939, 0
    %v945 = vsel %vm416, %v940, 0
    %947 = vmatprep.subr.bf16.mxu0 0
    %948 = vmatpush1.bf16.msra.mxu0 0
    %949 = vmatprep.subr.bf16.mxu0 0
    %950 = vmatpush1.bf16.msra.mxu0 0
    %951 = vmatprep.subr.bf16.mxu0 0
    %952 = vmatpush1.bf16.msra.mxu0 0
    %953 = vmatprep.subr.bf16.mxu0 0
    %954 = vmatpush1.bf16.msra.mxu0 0
    %955 = vmatprep.subr.bf16.mxu0 0
    %956 = vmatpush1.bf16.msra.mxu0 %v914
    %957 = vmatprep.subr.bf16.mxu0 0
    %958 = vmatpush1.bf16.msra.mxu0 %v913
    %959 = vmatprep.subr.bf16.mxu0 0
    %960 = vmatpush1.bf16.msra.mxu0 %v912
    %961 = vmatprep.subr.bf16.mxu0 0
    %962 = vmatpush1.bf16.msra.mxu0 %v911
    %963 = vmatprep.subr.bf16.mxu0 0
    %964 = vmatpush2.bf16.msra.mxu0 0
    %965 = vmatprep.subr.bf16.mxu0 0
    %966 = vmatpush2.bf16.msra.mxu0 0
    %967 = vmatprep.subr.bf16.mxu0 0
    %968 = vmatpush2.bf16.msra.mxu0 0
    %969 = vmatprep.subr.bf16.mxu0 0
    %970 = vmatpush2.bf16.msra.mxu0 0
    %971 = vmatprep.subr.bf16.mxu0 0
    %972 = vmatpush2.bf16.msra.mxu0 0
    %973 = vmatprep.subr.bf16.mxu0 0
    %974 = vmatpush2.bf16.msra.mxu0 0
    %975 = vmatprep.subr.bf16.mxu0 0
    %976 = vmatpush2.bf16.msra.mxu0 0
    %977 = vmatprep.subr.bf16.mxu0 0
    %978 = vmatpush2.bf16.msra.mxu0 0
    %979 = vmatprep.mubr.bf16.mxu0 0
    %980 = vmatmul.mubr.bf16.gmra.mxu0 %v942
    %v981 = vpop.f32.mrf.mxu0
    %v982 = vadd.f32 %v917, %v981
    %v983 = vpop.f32.mrf.mxu0
    %v984 = vpop.f32.mrf.mxu0
    %v985 = vadd.f32 %v921, %v984
    %v986 = vpop.f32.mrf.mxu0
    %987 = vmatprep.mubr.bf16.mxu0 0
    %988 = vmatmul.mubr.bf16.gmra.mxu0 %v945
    %v989 = vpop.f32.mrf.mxu0
    %v990 = vadd.f32 %v925, %v989
    %v991 = vpop.f32.mrf.mxu0
    %v992 = vpop.f32.mrf.mxu0
    %v993 = vadd.f32 %v929, %v992
    %v994 = vpop.f32.mrf.mxu0
    %995 = vdwg.mxu0
    %v996 = vadd.f32 %v737, %v982
    %v997 = vadd.f32 %v738, %v985
    %v998 = vadd.f32 %v739, %v990
    %v999 = vadd.f32 %v740, %v993
    %v1000 = vsel %vm135, %v996, 0.0
    %v1001 = vsel %vm135, %v997, 0.0
    %v1002 = vadd.f32 %v1000, %v1001
    %v1003 = vsel %vm135, %v998, 0.0
    %v1004 = vadd.f32 %v1002, %v1003
    %v1005 = vsel %vm135, %v999, 0.0
    %v1006 = vadd.f32 %v1004, %v1005
    %v1007 = vrot.slane %v1006, 4
    %v1008 = vadd.f32 %v1006, %v1007
    %v1009 = vrot.slane %v1008, 2
    %v1010 = vadd.f32 %v1008, %v1009
    %v1011 = vrot.slane %v1010, 1
    %v1012 = vadd.f32 %v1010, %v1011
    %v1013 = vmul.f32 %v1012, %v149
    %v1014 = vsub.f32 %v996, %v1013
    %v1015 = vsub.f32 %v997, %v1013
    %v1016 = vsub.f32 %v998, %v1013
    %v1017 = vsub.f32 %v999, %v1013
    %v1018 = vmul.f32 %v1014, %v1014
    %v1019 = vmul.f32 %v1015, %v1015
    %v1020 = vmul.f32 %v1016, %v1016
    %v1021 = vmul.f32 %v1017, %v1017
    %v1022 = vsel %vm135, %v1018, 0.0
    %v1023 = vsel %vm135, %v1019, 0.0
    %v1024 = vadd.f32 %v1022, %v1023
    %v1025 = vsel %vm135, %v1020, 0.0
    %v1026 = vadd.f32 %v1024, %v1025
    %v1027 = vsel %vm135, %v1021, 0.0
    %v1028 = vadd.f32 %v1026, %v1027
    %v1029 = vrot.slane %v1028, 4
    %v1030 = vadd.f32 %v1028, %v1029
    %v1031 = vrot.slane %v1030, 2
    %v1032 = vadd.f32 %v1030, %v1031
    %v1033 = vrot.slane %v1032, 1
    %v1034 = vadd.f32 %v1032, %v1033
    %v1035 = vmul.f32 %v1034, %v149
    %v1036 = vadd.f32 %v1035, 1e-05
    %v1037 = vrsqrt.pop %v1036
    %v1038 = vmul.f32 %v1014, %v1037
    %v1039 = vmul.f32 %v1015, %v1037
    %v1040 = vmul.f32 %v1016, %v1037
    %v1041 = vmul.f32 %v1017, %v1037
    %1042 = vset.pattern.permute.xlu0 4
    %1043 = vperm.xlu0 %1042, %v559
    %v1044 = vpop.permute.xlu0 %1043
    %1046 = vset.pattern.permute.xlu0 4
    %1047 = vperm.xlu0 %1046, %v560
    %v1048 = vpop.permute.xlu0 %1047
    %1050 = vset.pattern.permute.xlu0 4
    %1051 = vperm.xlu0 %1050, %v561
    %v1052 = vpop.permute.xlu0 %1051
    %1054 = vset.pattern.permute.xlu0 4
    %1055 = vperm.xlu0 %1054, %v562
    %v1056 = vpop.permute.xlu0 %1055
    %v1058 = vmul.f32 %v1038, %v1044
    %v1059 = vmul.f32 %v1039, %v1048
    %v1060 = vmul.f32 %v1040, %v1052
    %v1061 = vmul.f32 %v1041, %v1056
    %1062 = vset.pattern.permute.xlu0 5
    %1063 = vperm.xlu0 %1062, %v559
    %v1064 = vpop.permute.xlu0 %1063
    %1066 = vset.pattern.permute.xlu0 5
    %1067 = vperm.xlu0 %1066, %v560
    %v1068 = vpop.permute.xlu0 %1067
    %1070 = vset.pattern.permute.xlu0 5
    %1071 = vperm.xlu0 %1070, %v561
    %v1072 = vpop.permute.xlu0 %1071
    %1074 = vset.pattern.permute.xlu0 5
    %1075 = vperm.xlu0 %1074, %v562
    %v1076 = vpop.permute.xlu0 %1075
    %v1078 = vadd.f32 %v1058, %v1064
    %v1079 = vadd.f32 %v1059, %v1068
    %v1080 = vadd.f32 %v1060, %v1072
    %v1081 = vadd.f32 %v1061, %v1076
    %s1082 = scalar_lea.vmem %s4, 64
    %v1083 = vld [vmem:[%s1082] sm:$0xff]
    %v1084 = vld [vmem:[%s1082 + $0x8] sm:$0xff]
    %v1085 = vld [vmem:[%s1082 + $0x10] sm:$0xff]
    %v1086 = vld [vmem:[%s1082 + $0x18] sm:$0xff]
    %s1087 = scalar_lea.vmem %s1, 32
    %v1088 = vld [vmem:[%s1087] sm:$0xf]
    %v1089 = vld [vmem:[%s1087 + $0x4] sm:$0xf]
    %v1090 = vld [vmem:[%s1087 + $0x8] sm:$0xf]
    %v1091 = vld [vmem:[%s1087 + $0xc] sm:$0xf]
    %v1092 = vpack.c.bf16 %v1079, %v1078
    %v1093 = vpack.c.bf16 %v1081, %v1080
    %1095 = vset.pattern.permute.xlu0 0
    %1096 = vperm.xlu0 %1095, %v1083
    %v1097 = vpop.permute.xlu0 %1096
    %1100 = vset.pattern.permute.xlu0 0
    %1101 = vperm.xlu0 %1100, %v1084
    %v1102 = vpop.permute.xlu0 %1101
    %1105 = vset.pattern.permute.xlu0 0
    %1106 = vperm.xlu0 %1105, %v1085
    %v1107 = vpop.permute.xlu0 %1106
    %1110 = vset.pattern.permute.xlu0 0
    %1111 = vperm.xlu0 %1110, %v1086
    %v1112 = vpop.permute.xlu0 %1111
    %v1118 = vunpack.c.l.b16 %v1088
    %v1119 = vunpack.c.l.b16 %v1089
    %v1120 = vunpack.c.l.b16 %v1090
    %v1121 = vunpack.c.l.b16 %v1091
    %v1122 = vpack.c.b16 %v1119, %v1118
    %v1123 = vpack.c.b16 %v1121, %v1120
    %v1125 = vsel %vm75, %v1122, 0
    %v1128 = vsel %vm75, %v1123, 0
    %1130 = vmatprep.subr.bf16.mxu0 0
    %1131 = vmatpush1.bf16.msra.mxu0 0
    %1132 = vmatprep.subr.bf16.mxu0 0
    %1133 = vmatpush1.bf16.msra.mxu0 0
    %1134 = vmatprep.subr.bf16.mxu0 0
    %1135 = vmatpush1.bf16.msra.mxu0 0
    %1136 = vmatprep.subr.bf16.mxu0 0
    %1137 = vmatpush1.bf16.msra.mxu0 0
    %1138 = vmatprep.subr.bf16.mxu0 0
    %1139 = vmatpush1.bf16.msra.mxu0 0
    %1140 = vmatprep.subr.bf16.mxu0 0
    %1141 = vmatpush1.bf16.msra.mxu0 0
    %1142 = vmatprep.subr.bf16.mxu0 0
    %1143 = vmatpush1.bf16.msra.mxu0 %v1093
    %1144 = vmatprep.subr.bf16.mxu0 0
    %1145 = vmatpush1.bf16.msra.mxu0 %v1092
    %1146 = vmatprep.subr.bf16.mxu0 0
    %1147 = vmatpush2.bf16.msra.mxu0 0
    %1148 = vmatprep.subr.bf16.mxu0 0
    %1149 = vmatpush2.bf16.msra.mxu0 0
    %1150 = vmatprep.subr.bf16.mxu0 0
    %1151 = vmatpush2.bf16.msra.mxu0 0
    %1152 = vmatprep.subr.bf16.mxu0 0
    %1153 = vmatpush2.bf16.msra.mxu0 0
    %1154 = vmatprep.subr.bf16.mxu0 0
    %1155 = vmatpush2.bf16.msra.mxu0 0
    %1156 = vmatprep.subr.bf16.mxu0 0
    %1157 = vmatpush2.bf16.msra.mxu0 0
    %1158 = vmatprep.subr.bf16.mxu0 0
    %1159 = vmatpush2.bf16.msra.mxu0 0
    %1160 = vmatprep.subr.bf16.mxu0 0
    %1161 = vmatpush2.bf16.msra.mxu0 0
    %1162 = vmatprep.mubr.bf16.mxu0 0
    %1163 = vmatmul.mubr.bf16.gmra.mxu0 %v1125
    %v1164 = vpop.f32.mrf.mxu0
    %v1165 = vadd.f32 %v1097, %v1164
    %v1166 = vpop.f32.mrf.mxu0
    %v1167 = vpop.f32.mrf.mxu0
    %v1168 = vadd.f32 %v1102, %v1167
    %v1169 = vpop.f32.mrf.mxu0
    %1170 = vmatprep.mubr.bf16.mxu0 0
    %1171 = vmatmul.mubr.bf16.gmra.mxu0 %v1128
    %v1172 = vpop.f32.mrf.mxu0
    %v1173 = vadd.f32 %v1107, %v1172
    %v1174 = vpop.f32.mrf.mxu0
    %v1175 = vpop.f32.mrf.mxu0
    %v1176 = vadd.f32 %v1112, %v1175
    %v1177 = vpop.f32.mrf.mxu0
    %1178 = vdwg.mxu0
    %v1179 = vadd.f32 %v1078, %v1165
    %v1180 = vadd.f32 %v1079, %v1168
    %v1181 = vadd.f32 %v1080, %v1173
    %v1182 = vadd.f32 %v1081, %v1176
    %v1183 = vsel %vm135, %v1179, 0.0
    %v1184 = vsel %vm135, %v1180, 0.0
    %v1185 = vadd.f32 %v1183, %v1184
    %v1186 = vsel %vm135, %v1181, 0.0
    %v1187 = vadd.f32 %v1185, %v1186
    %v1188 = vsel %vm135, %v1182, 0.0
    %v1189 = vadd.f32 %v1187, %v1188
    %v1190 = vrot.slane %v1189, 4
    %v1191 = vadd.f32 %v1189, %v1190
    %v1192 = vrot.slane %v1191, 2
    %v1193 = vadd.f32 %v1191, %v1192
    %v1194 = vrot.slane %v1193, 1
    %v1195 = vadd.f32 %v1193, %v1194
    %v1196 = vmul.f32 %v1195, %v149
    %v1197 = vsub.f32 %v1179, %v1196
    %v1198 = vsub.f32 %v1180, %v1196
    %v1199 = vsub.f32 %v1181, %v1196
    %v1200 = vsub.f32 %v1182, %v1196
    %v1201 = vmul.f32 %v1197, %v1197
    %v1202 = vmul.f32 %v1198, %v1198
    %v1203 = vmul.f32 %v1199, %v1199
    %v1204 = vmul.f32 %v1200, %v1200
    %v1205 = vsel %vm135, %v1201, 0.0
    %v1206 = vsel %vm135, %v1202, 0.0
    %v1207 = vadd.f32 %v1205, %v1206
    %v1208 = vsel %vm135, %v1203, 0.0
    %v1209 = vadd.f32 %v1207, %v1208
    %v1210 = vsel %vm135, %v1204, 0.0
    %v1211 = vadd.f32 %v1209, %v1210
    %v1212 = vrot.slane %v1211, 4
    %v1213 = vadd.f32 %v1211, %v1212
    %v1214 = vrot.slane %v1213, 2
    %v1215 = vadd.f32 %v1213, %v1214
    %v1216 = vrot.slane %v1215, 1
    %v1217 = vadd.f32 %v1215, %v1216
    %v1218 = vmul.f32 %v1217, %v149
    %v1219 = vadd.f32 %v1218, 1e-05
    %v1220 = vrsqrt.pop %v1219
    %v1221 = vmul.f32 %v1197, %v1220
    %v1222 = vmul.f32 %v1198, %v1220
    %v1223 = vmul.f32 %v1199, %v1220
    %v1224 = vmul.f32 %v1200, %v1220
    %1225 = vset.pattern.permute.xlu0 2
    %1226 = vperm.xlu0 %1225, %v1083
    %v1227 = vpop.permute.xlu0 %1226
    %1229 = vset.pattern.permute.xlu0 2
    %1230 = vperm.xlu0 %1229, %v1084
    %v1231 = vpop.permute.xlu0 %1230
    %1233 = vset.pattern.permute.xlu0 2
    %1234 = vperm.xlu0 %1233, %v1085
    %v1235 = vpop.permute.xlu0 %1234
    %1237 = vset.pattern.permute.xlu0 2
    %1238 = vperm.xlu0 %1237, %v1086
    %v1239 = vpop.permute.xlu0 %1238
    %v1241 = vmul.f32 %v1221, %v1227
    %v1242 = vmul.f32 %v1222, %v1231
    %v1243 = vmul.f32 %v1223, %v1235
    %v1244 = vmul.f32 %v1224, %v1239
    %1245 = vset.pattern.permute.xlu0 3
    %1246 = vperm.xlu0 %1245, %v1083
    %v1247 = vpop.permute.xlu0 %1246
    %1249 = vset.pattern.permute.xlu0 3
    %1250 = vperm.xlu0 %1249, %v1084
    %v1251 = vpop.permute.xlu0 %1250
    %1253 = vset.pattern.permute.xlu0 3
    %1254 = vperm.xlu0 %1253, %v1085
    %v1255 = vpop.permute.xlu0 %1254
    %1257 = vset.pattern.permute.xlu0 3
    %1258 = vperm.xlu0 %1257, %v1086
    %v1259 = vpop.permute.xlu0 %1258
    %v1261 = vadd.f32 %v1241, %v1247
    %v1262 = vadd.f32 %v1242, %v1251
    %v1263 = vadd.f32 %v1243, %v1255
    %v1264 = vadd.f32 %v1244, %v1259
    %s1265 = scalar_lea.vmem %s2, 64
    %v1266 = vld [vmem:[%s1265] sm:$0xf]
    %v1267 = vld [vmem:[%s1265 + $0x4] sm:$0xf]
    %v1268 = vld [vmem:[%s1265 + $0x8] sm:$0xf]
    %v1269 = vld [vmem:[%s1265 + $0xc] sm:$0xf]
    %v1270 = vld [vmem:[%s1265 + $0x10] sm:$0xf]
    %v1271 = vld [vmem:[%s1265 + $0x14] sm:$0xf]
    %v1272 = vld [vmem:[%s1265 + $0x18] sm:$0xf]
    %v1273 = vld [vmem:[%s1265 + $0x1c] sm:$0xf]
    %v1274 = vpack.c.bf16 %v1262, %v1261
    %v1275 = vpack.c.bf16 %v1264, %v1263
    %s1276 = scalar_lea.vmem %s5, 128
    %v1277 = vld [vmem:[%s1276] sm:$0xff]
    %v1278 = vld [vmem:[%s1276 + $0x8] sm:$0xff]
    %v1279 = vld [vmem:[%s1276 + $0x10] sm:$0xff]
    %v1280 = vld [vmem:[%s1276 + $0x18] sm:$0xff]
    %v1281 = vld [vmem:[%s1276 + $0x20] sm:$0xff]
    %v1282 = vld [vmem:[%s1276 + $0x28] sm:$0xff]
    %v1283 = vld [vmem:[%s1276 + $0x30] sm:$0xff]
    %v1284 = vld [vmem:[%s1276 + $0x38] sm:$0xff]
    %1286 = vset.pattern.permute.xlu0 0
    %1287 = vperm.xlu0 %1286, %v1277
    %v1288 = vpop.permute.xlu0 %1287
    %1291 = vset.pattern.permute.xlu0 0
    %1292 = vperm.xlu0 %1291, %v1278
    %v1293 = vpop.permute.xlu0 %1292
    %1296 = vset.pattern.permute.xlu0 0
    %1297 = vperm.xlu0 %1296, %v1279
    %v1298 = vpop.permute.xlu0 %1297
    %1301 = vset.pattern.permute.xlu0 0
    %1302 = vperm.xlu0 %1301, %v1280
    %v1303 = vpop.permute.xlu0 %1302
    %1306 = vset.pattern.permute.xlu0 0
    %1307 = vperm.xlu0 %1306, %v1281
    %v1308 = vpop.permute.xlu0 %1307
    %1311 = vset.pattern.permute.xlu0 0
    %1312 = vperm.xlu0 %1311, %v1282
    %v1313 = vpop.permute.xlu0 %1312
    %1316 = vset.pattern.permute.xlu0 0
    %1317 = vperm.xlu0 %1316, %v1283
    %v1318 = vpop.permute.xlu0 %1317
    %1321 = vset.pattern.permute.xlu0 0
    %1322 = vperm.xlu0 %1321, %v1284
    %v1323 = vpop.permute.xlu0 %1322
    %v1333 = vunpack.c.l.b16 %v1266
    %v1334 = vunpack.c.l.b16 %v1267
    %v1335 = vunpack.c.l.b16 %v1268
    %v1336 = vunpack.c.l.b16 %v1269
    %v1337 = vunpack.c.l.b16 %v1270
    %v1338 = vunpack.c.l.b16 %v1271
    %v1339 = vunpack.c.l.b16 %v1272
    %v1340 = vunpack.c.l.b16 %v1273
    %v1341 = vpack.c.b16 %v1334, %v1333
    %v1342 = vpack.c.b16 %v1336, %v1335
    %v1343 = vpack.c.b16 %v1338, %v1337
    %v1344 = vpack.c.b16 %v1340, %v1339
    %v1346 = vsel %vm75, %v1341, 0
    %v1349 = vsel %vm75, %v1342, 0
    %v1352 = vsel %vm75, %v1343, 0
    %v1355 = vsel %vm75, %v1344, 0
    %1357 = vmatprep.subr.bf16.mxu0 0
    %1358 = vmatpush1.bf16.msra.mxu0 0
    %1359 = vmatprep.subr.bf16.mxu0 0
    %1360 = vmatpush1.bf16.msra.mxu0 0
    %1361 = vmatprep.subr.bf16.mxu0 0
    %1362 = vmatpush1.bf16.msra.mxu0 0
    %1363 = vmatprep.subr.bf16.mxu0 0
    %1364 = vmatpush1.bf16.msra.mxu0 0
    %1365 = vmatprep.subr.bf16.mxu0 0
    %1366 = vmatpush1.bf16.msra.mxu0 0
    %1367 = vmatprep.subr.bf16.mxu0 0
    %1368 = vmatpush1.bf16.msra.mxu0 0
    %1369 = vmatprep.subr.bf16.mxu0 0
    %1370 = vmatpush1.bf16.msra.mxu0 %v1275
    %1371 = vmatprep.subr.bf16.mxu0 0
    %1372 = vmatpush1.bf16.msra.mxu0 %v1274
    %1373 = vmatprep.subr.bf16.mxu0 0
    %1374 = vmatpush2.bf16.msra.mxu0 0
    %1375 = vmatprep.subr.bf16.mxu0 0
    %1376 = vmatpush2.bf16.msra.mxu0 0
    %1377 = vmatprep.subr.bf16.mxu0 0
    %1378 = vmatpush2.bf16.msra.mxu0 0
    %1379 = vmatprep.subr.bf16.mxu0 0
    %1380 = vmatpush2.bf16.msra.mxu0 0
    %1381 = vmatprep.subr.bf16.mxu0 0
    %1382 = vmatpush2.bf16.msra.mxu0 0
    %1383 = vmatprep.subr.bf16.mxu0 0
    %1384 = vmatpush2.bf16.msra.mxu0 0
    %1385 = vmatprep.subr.bf16.mxu0 0
    %1386 = vmatpush2.bf16.msra.mxu0 0
    %1387 = vmatprep.subr.bf16.mxu0 0
    %1388 = vmatpush2.bf16.msra.mxu0 0
    %1389 = vmatprep.mubr.bf16.mxu0 0
    %1390 = vmatmul.mubr.bf16.gmra.mxu0 %v1346
    %v1391 = vpop.f32.mrf.mxu0
    %v1392 = vadd.f32 %v1288, %v1391
    %v1393 = vpop.f32.mrf.mxu0
    %v1394 = vpop.f32.mrf.mxu0
    %v1395 = vadd.f32 %v1293, %v1394
    %v1396 = vpop.f32.mrf.mxu0
    %1397 = vmatprep.mubr.bf16.mxu0 0
    %1398 = vmatmul.mubr.bf16.gmra.mxu0 %v1349
    %v1399 = vpop.f32.mrf.mxu0
    %v1400 = vadd.f32 %v1298, %v1399
    %v1401 = vpop.f32.mrf.mxu0
    %v1402 = vpop.f32.mrf.mxu0
    %v1403 = vadd.f32 %v1303, %v1402
    %v1404 = vpop.f32.mrf.mxu0
    %1405 = vmatprep.mubr.bf16.mxu0 0
    %1406 = vmatmul.mubr.bf16.gmra.mxu0 %v1352
    %v1407 = vpop.f32.mrf.mxu0
    %v1408 = vadd.f32 %v1308, %v1407
    %v1409 = vpop.f32.mrf.mxu0
    %v1410 = vpop.f32.mrf.mxu0
    %v1411 = vadd.f32 %v1313, %v1410
    %v1412 = vpop.f32.mrf.mxu0
    %1413 = vmatprep.mubr.bf16.mxu0 0
    %1414 = vmatmul.mubr.bf16.gmra.mxu0 %v1355
    %v1415 = vpop.f32.mrf.mxu0
    %v1416 = vadd.f32 %v1318, %v1415
    %v1417 = vpop.f32.mrf.mxu0
    %v1418 = vpop.f32.mrf.mxu0
    %v1419 = vadd.f32 %v1323, %v1418
    %v1420 = vpop.f32.mrf.mxu0
    %1421 = vdwg.mxu0
    %v1422 = vmax.f32 %v1392, 0.0
    %v1423 = vmax.f32 %v1395, 0.0
    %v1424 = vmax.f32 %v1400, 0.0
    %v1425 = vmax.f32 %v1403, 0.0
    %v1426 = vmax.f32 %v1408, 0.0
    %v1427 = vmax.f32 %v1411, 0.0
    %v1428 = vmax.f32 %v1416, 0.0
    %v1429 = vmax.f32 %v1419, 0.0
    %s1430 = scalar_lea.vmem %s3, 32
    %v1431 = vld [vmem:[%s1430] sm:$0xf]
    %v1432 = vld [vmem:[%s1430 + $0x4] sm:$0xf]
    %v1433 = vld [vmem:[%s1430 + $0x8] sm:$0xf]
    %v1434 = vld [vmem:[%s1430 + $0xc] sm:$0xf]
    %v1435 = vpack.c.bf16 %v1423, %v1422
    %v1436 = vpack.c.bf16 %v1425, %v1424
    %v1437 = vpack.c.bf16 %v1427, %v1426
    %v1438 = vpack.c.bf16 %v1429, %v1428
    %1439 = vset.pattern.permute.xlu0 1
    %1440 = vperm.xlu0 %1439, %v1083
    %v1441 = vpop.permute.xlu0 %1440
    %1443 = vset.pattern.permute.xlu0 1
    %1444 = vperm.xlu0 %1443, %v1084
    %v1445 = vpop.permute.xlu0 %1444
    %1447 = vset.pattern.permute.xlu0 1
    %1448 = vperm.xlu0 %1447, %v1085
    %v1449 = vpop.permute.xlu0 %1448
    %1451 = vset.pattern.permute.xlu0 1
    %1452 = vperm.xlu0 %1451, %v1086
    %v1453 = vpop.permute.xlu0 %1452
    %v1459 = vunpack.c.l.b16 %v1431
    %v1460 = vunpack.c.l.b16 %v1432
    %v1461 = vunpack.c.l.b16 %v1433
    %v1462 = vunpack.c.l.b16 %v1434
    %v1463 = vpack.c.b16 %v1460, %v1459
    %v1464 = vpack.c.b16 %v1462, %v1461
    %v1466 = vsel %vm416, %v1463, 0
    %v1469 = vsel %vm416, %v1464, 0
    %1471 = vmatprep.subr.bf16.mxu0 0
    %1472 = vmatpush1.bf16.msra.mxu0 0
    %1473 = vmatprep.subr.bf16.mxu0 0
    %1474 = vmatpush1.bf16.msra.mxu0 0
    %1475 = vmatprep.subr.bf16.mxu0 0
    %1476 = vmatpush1.bf16.msra.mxu0 0
    %1477 = vmatprep.subr.bf16.mxu0 0
    %1478 = vmatpush1.bf16.msra.mxu0 0
    %1479 = vmatprep.subr.bf16.mxu0 0
    %1480 = vmatpush1.bf16.msra.mxu0 %v1438
    %1481 = vmatprep.subr.bf16.mxu0 0
    %1482 = vmatpush1.bf16.msra.mxu0 %v1437
    %1483 = vmatprep.subr.bf16.mxu0 0
    %1484 = vmatpush1.bf16.msra.mxu0 %v1436
    %1485 = vmatprep.subr.bf16.mxu0 0
    %1486 = vmatpush1.bf16.msra.mxu0 %v1435
    %1487 = vmatprep.subr.bf16.mxu0 0
    %1488 = vmatpush2.bf16.msra.mxu0 0
    %1489 = vmatprep.subr.bf16.mxu0 0
    %1490 = vmatpush2.bf16.msra.mxu0 0
    %1491 = vmatprep.subr.bf16.mxu0 0
    %1492 = vmatpush2.bf16.msra.mxu0 0
    %1493 = vmatprep.subr.bf16.mxu0 0
    %1494 = vmatpush2.bf16.msra.mxu0 0
    %1495 = vmatprep.subr.bf16.mxu0 0
    %1496 = vmatpush2.bf16.msra.mxu0 0
    %1497 = vmatprep.subr.bf16.mxu0 0
    %1498 = vmatpush2.bf16.msra.mxu0 0
    %1499 = vmatprep.subr.bf16.mxu0 0
    %1500 = vmatpush2.bf16.msra.mxu0 0
    %1501 = vmatprep.subr.bf16.mxu0 0
    %1502 = vmatpush2.bf16.msra.mxu0 0
    %1503 = vmatprep.mubr.bf16.mxu0 0
    %1504 = vmatmul.mubr.bf16.gmra.mxu0 %v1466
    %v1505 = vpop.f32.mrf.mxu0
    %v1506 = vadd.f32 %v1441, %v1505
    %v1507 = vpop.f32.mrf.mxu0
    %v1508 = vpop.f32.mrf.mxu0
    %v1509 = vadd.f32 %v1445, %v1508
    %v1510 = vpop.f32.mrf.mxu0
    %1511 = vmatprep.mubr.bf16.mxu0 0
    %1512 = vmatmul.mubr.bf16.gmra.mxu0 %v1469
    %v1513 = vpop.f32.mrf.mxu0
    %v1514 = vadd.f32 %v1449, %v1513
    %v1515 = vpop.f32.mrf.mxu0
    %v1516 = vpop.f32.mrf.mxu0
    %v1517 = vadd.f32 %v1453, %v1516
    %v1518 = vpop.f32.mrf.mxu0
    %1519 = vdwg.mxu0
    %v1520 = vadd.f32 %v1261, %v1506
    %v1521 = vadd.f32 %v1262, %v1509
    %v1522 = vadd.f32 %v1263, %v1514
    %v1523 = vadd.f32 %v1264, %v1517
    %v1524 = vsel %vm135, %v1520, 0.0
    %v1525 = vsel %vm135, %v1521, 0.0
    %v1526 = vadd.f32 %v1524, %v1525
    %v1527 = vsel %vm135, %v1522, 0.0
    %v1528 = vadd.f32 %v1526, %v1527
    %v1529 = vsel %vm135, %v1523, 0.0
    %v1530 = vadd.f32 %v1528, %v1529
    %v1531 = vrot.slane %v1530, 4
    %v1532 = vadd.f32 %v1530, %v1531
    %v1533 = vrot.slane %v1532, 2
    %v1534 = vadd.f32 %v1532, %v1533
    %v1535 = vrot.slane %v1534, 1
    %v1536 = vadd.f32 %v1534, %v1535
    %v1537 = vmul.f32 %v1536, %v149
    %v1538 = vsub.f32 %v1520, %v1537
    %v1539 = vsub.f32 %v1521, %v1537
    %v1540 = vsub.f32 %v1522, %v1537
    %v1541 = vsub.f32 %v1523, %v1537
    %v1542 = vmul.f32 %v1538, %v1538
    %v1543 = vmul.f32 %v1539, %v1539
    %v1544 = vmul.f32 %v1540, %v1540
    %v1545 = vmul.f32 %v1541, %v1541
    %v1546 = vsel %vm135, %v1542, 0.0
    %v1547 = vsel %vm135, %v1543, 0.0
    %v1548 = vadd.f32 %v1546, %v1547
    %v1549 = vsel %vm135, %v1544, 0.0
    %v1550 = vadd.f32 %v1548, %v1549
    %v1551 = vsel %vm135, %v1545, 0.0
    %v1552 = vadd.f32 %v1550, %v1551
    %v1553 = vrot.slane %v1552, 4
    %v1554 = vadd.f32 %v1552, %v1553
    %v1555 = vrot.slane %v1554, 2
    %v1556 = vadd.f32 %v1554, %v1555
    %v1557 = vrot.slane %v1556, 1
    %v1558 = vadd.f32 %v1556, %v1557
    %v1559 = vmul.f32 %v1558, %v149
    %v1560 = vadd.f32 %v1559, 1e-05
    %v1561 = vrsqrt.pop %v1560
    %v1562 = vmul.f32 %v1538, %v1561
    %v1563 = vmul.f32 %v1539, %v1561
    %v1564 = vmul.f32 %v1540, %v1561
    %v1565 = vmul.f32 %v1541, %v1561
    %1566 = vset.pattern.permute.xlu0 4
    %1567 = vperm.xlu0 %1566, %v1083
    %v1568 = vpop.permute.xlu0 %1567
    %1570 = vset.pattern.permute.xlu0 4
    %1571 = vperm.xlu0 %1570, %v1084
    %v1572 = vpop.permute.xlu0 %1571
    %1574 = vset.pattern.permute.xlu0 4
    %1575 = vperm.xlu0 %1574, %v1085
    %v1576 = vpop.permute.xlu0 %1575
    %1578 = vset.pattern.permute.xlu0 4
    %1579 = vperm.xlu0 %1578, %v1086
    %v1580 = vpop.permute.xlu0 %1579
    %v1582 = vmul.f32 %v1562, %v1568
    %v1583 = vmul.f32 %v1563, %v1572
    %v1584 = vmul.f32 %v1564, %v1576
    %v1585 = vmul.f32 %v1565, %v1580
    %1586 = vset.pattern.permute.xlu0 5
    %1587 = vperm.xlu0 %1586, %v1083
    %v1588 = vpop.permute.xlu0 %1587
    %1590 = vset.pattern.permute.xlu0 5
    %1591 = vperm.xlu0 %1590, %v1084
    %v1592 = vpop.permute.xlu0 %1591
    %1594 = vset.pattern.permute.xlu0 5
    %1595 = vperm.xlu0 %1594, %v1085
    %v1596 = vpop.permute.xlu0 %1595
    %1598 = vset.pattern.permute.xlu0 5
    %1599 = vperm.xlu0 %1598, %v1086
    %v1600 = vpop.permute.xlu0 %1599
    %v1602 = vadd.f32 %v1582, %v1588
    %v1603 = vadd.f32 %v1583, %v1592
    %v1604 = vadd.f32 %v1584, %v1596
    %v1605 = vadd.f32 %v1585, %v1600
    %s1606 = scalar_lea.vmem %s4, 96
    %v1607 = vld [vmem:[%s1606] sm:$0xff]
    %v1608 = vld [vmem:[%s1606 + $0x8] sm:$0xff]
    %v1609 = vld [vmem:[%s1606 + $0x10] sm:$0xff]
    %v1610 = vld [vmem:[%s1606 + $0x18] sm:$0xff]
    %s1611 = scalar_lea.vmem %s1, 48
    %v1612 = vld [vmem:[%s1611] sm:$0xf]
    %v1613 = vld [vmem:[%s1611 + $0x4] sm:$0xf]
    %v1614 = vld [vmem:[%s1611 + $0x8] sm:$0xf]
    %v1615 = vld [vmem:[%s1611 + $0xc] sm:$0xf]
    %v1616 = vpack.c.bf16 %v1603, %v1602
    %v1617 = vpack.c.bf16 %v1605, %v1604
    %1619 = vset.pattern.permute.xlu0 0
    %1620 = vperm.xlu0 %1619, %v1607
    %v1621 = vpop.permute.xlu0 %1620
    %1624 = vset.pattern.permute.xlu0 0
    %1625 = vperm.xlu0 %1624, %v1608
    %v1626 = vpop.permute.xlu0 %1625
    %1629 = vset.pattern.permute.xlu0 0
    %1630 = vperm.xlu0 %1629, %v1609
    %v1631 = vpop.permute.xlu0 %1630
    %1634 = vset.pattern.permute.xlu0 0
    %1635 = vperm.xlu0 %1634, %v1610
    %v1636 = vpop.permute.xlu0 %1635
    %v1642 = vunpack.c.l.b16 %v1612
    %v1643 = vunpack.c.l.b16 %v1613
    %v1644 = vunpack.c.l.b16 %v1614
    %v1645 = vunpack.c.l.b16 %v1615
    %v1646 = vpack.c.b16 %v1643, %v1642
    %v1647 = vpack.c.b16 %v1645, %v1644
    %v1649 = vsel %vm75, %v1646, 0
    %v1652 = vsel %vm75, %v1647, 0
    %1654 = vmatprep.subr.bf16.mxu0 0
    %1655 = vmatpush1.bf16.msra.mxu0 0
    %1656 = vmatprep.subr.bf16.mxu0 0
    %1657 = vmatpush1.bf16.msra.mxu0 0
    %1658 = vmatprep.subr.bf16.mxu0 0
    %1659 = vmatpush1.bf16.msra.mxu0 0
    %1660 = vmatprep.subr.bf16.mxu0 0
    %1661 = vmatpush1.bf16.msra.mxu0 0
    %1662 = vmatprep.subr.bf16.mxu0 0
    %1663 = vmatpush1.bf16.msra.mxu0 0
    %1664 = vmatprep.subr.bf16.mxu0 0
    %1665 = vmatpush1.bf16.msra.mxu0 0
    %1666 = vmatprep.subr.bf16.mxu0 0
    %1667 = vmatpush1.bf16.msra.mxu0 %v1617
    %1668 = vmatprep.subr.bf16.mxu0 0
    %1669 = vmatpush1.bf16.msra.mxu0 %v1616
    %1670 = vmatprep.subr.bf16.mxu0 0
    %1671 = vmatpush2.bf16.msra.mxu0 0
    %1672 = vmatprep.subr.bf16.mxu0 0
    %1673 = vmatpush2.bf16.msra.mxu0 0
    %1674 = vmatprep.subr.bf16.mxu0 0
    %1675 = vmatpush2.bf16.msra.mxu0 0
    %1676 = vmatprep.subr.bf16.mxu0 0
    %1677 = vmatpush2.bf16.msra.mxu0 0
    %1678 = vmatprep.subr.bf16.mxu0 0
    %1679 = vmatpush2.bf16.msra.mxu0 0
    %1680 = vmatprep.subr.bf16.mxu0 0
    %1681 = vmatpush2.bf16.msra.mxu0 0
    %1682 = vmatprep.subr.bf16.mxu0 0
    %1683 = vmatpush2.bf16.msra.mxu0 0
    %1684 = vmatprep.subr.bf16.mxu0 0
    %1685 = vmatpush2.bf16.msra.mxu0 0
    %1686 = vmatprep.mubr.bf16.mxu0 0
    %1687 = vmatmul.mubr.bf16.gmra.mxu0 %v1649
    %v1688 = vpop.f32.mrf.mxu0
    %v1689 = vadd.f32 %v1621, %v1688
    %v1690 = vpop.f32.mrf.mxu0
    %v1691 = vpop.f32.mrf.mxu0
    %v1692 = vadd.f32 %v1626, %v1691
    %v1693 = vpop.f32.mrf.mxu0
    %1694 = vmatprep.mubr.bf16.mxu0 0
    %1695 = vmatmul.mubr.bf16.gmra.mxu0 %v1652
    %v1696 = vpop.f32.mrf.mxu0
    %v1697 = vadd.f32 %v1631, %v1696
    %v1698 = vpop.f32.mrf.mxu0
    %v1699 = vpop.f32.mrf.mxu0
    %v1700 = vadd.f32 %v1636, %v1699
    %v1701 = vpop.f32.mrf.mxu0
    %1702 = vdwg.mxu0
    %v1703 = vadd.f32 %v1602, %v1689
    %v1704 = vadd.f32 %v1603, %v1692
    %v1705 = vadd.f32 %v1604, %v1697
    %v1706 = vadd.f32 %v1605, %v1700
    %v1707 = vsel %vm135, %v1703, 0.0
    %v1708 = vsel %vm135, %v1704, 0.0
    %v1709 = vadd.f32 %v1707, %v1708
    %v1710 = vsel %vm135, %v1705, 0.0
    %v1711 = vadd.f32 %v1709, %v1710
    %v1712 = vsel %vm135, %v1706, 0.0
    %v1713 = vadd.f32 %v1711, %v1712
    %v1714 = vrot.slane %v1713, 4
    %v1715 = vadd.f32 %v1713, %v1714
    %v1716 = vrot.slane %v1715, 2
    %v1717 = vadd.f32 %v1715, %v1716
    %v1718 = vrot.slane %v1717, 1
    %v1719 = vadd.f32 %v1717, %v1718
    %v1720 = vmul.f32 %v1719, %v149
    %v1721 = vsub.f32 %v1703, %v1720
    %v1722 = vsub.f32 %v1704, %v1720
    %v1723 = vsub.f32 %v1705, %v1720
    %v1724 = vsub.f32 %v1706, %v1720
    %v1725 = vmul.f32 %v1721, %v1721
    %v1726 = vmul.f32 %v1722, %v1722
    %v1727 = vmul.f32 %v1723, %v1723
    %v1728 = vmul.f32 %v1724, %v1724
    %v1729 = vsel %vm135, %v1725, 0.0
    %v1730 = vsel %vm135, %v1726, 0.0
    %v1731 = vadd.f32 %v1729, %v1730
    %v1732 = vsel %vm135, %v1727, 0.0
    %v1733 = vadd.f32 %v1731, %v1732
    %v1734 = vsel %vm135, %v1728, 0.0
    %v1735 = vadd.f32 %v1733, %v1734
    %v1736 = vrot.slane %v1735, 4
    %v1737 = vadd.f32 %v1735, %v1736
    %v1738 = vrot.slane %v1737, 2
    %v1739 = vadd.f32 %v1737, %v1738
    %v1740 = vrot.slane %v1739, 1
    %v1741 = vadd.f32 %v1739, %v1740
    %v1742 = vmul.f32 %v1741, %v149
    %v1743 = vadd.f32 %v1742, 1e-05
    %v1744 = vrsqrt.pop %v1743
    %v1745 = vmul.f32 %v1721, %v1744
    %v1746 = vmul.f32 %v1722, %v1744
    %v1747 = vmul.f32 %v1723, %v1744
    %v1748 = vmul.f32 %v1724, %v1744
    %1749 = vset.pattern.permute.xlu0 2
    %1750 = vperm.xlu0 %1749, %v1607
    %v1751 = vpop.permute.xlu0 %1750
    %1753 = vset.pattern.permute.xlu0 2
    %1754 = vperm.xlu0 %1753, %v1608
    %v1755 = vpop.permute.xlu0 %1754
    %1757 = vset.pattern.permute.xlu0 2
    %1758 = vperm.xlu0 %1757, %v1609
    %v1759 = vpop.permute.xlu0 %1758
    %1761 = vset.pattern.permute.xlu0 2
    %1762 = vperm.xlu0 %1761, %v1610
    %v1763 = vpop.permute.xlu0 %1762
    %v1765 = vmul.f32 %v1745, %v1751
    %v1766 = vmul.f32 %v1746, %v1755
    %v1767 = vmul.f32 %v1747, %v1759
    %v1768 = vmul.f32 %v1748, %v1763
    %1769 = vset.pattern.permute.xlu0 3
    %1770 = vperm.xlu0 %1769, %v1607
    %v1771 = vpop.permute.xlu0 %1770
    %1773 = vset.pattern.permute.xlu0 3
    %1774 = vperm.xlu0 %1773, %v1608
    %v1775 = vpop.permute.xlu0 %1774
    %1777 = vset.pattern.permute.xlu0 3
    %1778 = vperm.xlu0 %1777, %v1609
    %v1779 = vpop.permute.xlu0 %1778
    %1781 = vset.pattern.permute.xlu0 3
    %1782 = vperm.xlu0 %1781, %v1610
    %v1783 = vpop.permute.xlu0 %1782
    %v1785 = vadd.f32 %v1765, %v1771
    %v1786 = vadd.f32 %v1766, %v1775
    %v1787 = vadd.f32 %v1767, %v1779
    %v1788 = vadd.f32 %v1768, %v1783
    %s1789 = scalar_lea.vmem %s2, 96
    %v1790 = vld [vmem:[%s1789] sm:$0xf]
    %v1791 = vld [vmem:[%s1789 + $0x4] sm:$0xf]
    %v1792 = vld [vmem:[%s1789 + $0x8] sm:$0xf]
    %v1793 = vld [vmem:[%s1789 + $0xc] sm:$0xf]
    %v1794 = vld [vmem:[%s1789 + $0x10] sm:$0xf]
    %v1795 = vld [vmem:[%s1789 + $0x14] sm:$0xf]
    %v1796 = vld [vmem:[%s1789 + $0x18] sm:$0xf]
    %v1797 = vld [vmem:[%s1789 + $0x1c] sm:$0xf]
    %v1798 = vpack.c.bf16 %v1786, %v1785
    %v1799 = vpack.c.bf16 %v1788, %v1787
    %s1800 = scalar_lea.vmem %s5, 192
    %v1801 = vld [vmem:[%s1800] sm:$0xff]
    %v1802 = vld [vmem:[%s1800 + $0x8] sm:$0xff]
    %v1803 = vld [vmem:[%s1800 + $0x10] sm:$0xff]
    %v1804 = vld [vmem:[%s1800 + $0x18] sm:$0xff]
    %v1805 = vld [vmem:[%s1800 + $0x20] sm:$0xff]
    %v1806 = vld [vmem:[%s1800 + $0x28] sm:$0xff]
    %v1807 = vld [vmem:[%s1800 + $0x30] sm:$0xff]
    %v1808 = vld [vmem:[%s1800 + $0x38] sm:$0xff]
    %1810 = vset.pattern.permute.xlu0 0
    %1811 = vperm.xlu0 %1810, %v1801
    %v1812 = vpop.permute.xlu0 %1811
    %1815 = vset.pattern.permute.xlu0 0
    %1816 = vperm.xlu0 %1815, %v1802
    %v1817 = vpop.permute.xlu0 %1816
    %1820 = vset.pattern.permute.xlu0 0
    %1821 = vperm.xlu0 %1820, %v1803
    %v1822 = vpop.permute.xlu0 %1821
    %1825 = vset.pattern.permute.xlu0 0
    %1826 = vperm.xlu0 %1825, %v1804
    %v1827 = vpop.permute.xlu0 %1826
    %1830 = vset.pattern.permute.xlu0 0
    %1831 = vperm.xlu0 %1830, %v1805
    %v1832 = vpop.permute.xlu0 %1831
    %1835 = vset.pattern.permute.xlu0 0
    %1836 = vperm.xlu0 %1835, %v1806
    %v1837 = vpop.permute.xlu0 %1836
    %1840 = vset.pattern.permute.xlu0 0
    %1841 = vperm.xlu0 %1840, %v1807
    %v1842 = vpop.permute.xlu0 %1841
    %1845 = vset.pattern.permute.xlu0 0
    %1846 = vperm.xlu0 %1845, %v1808
    %v1847 = vpop.permute.xlu0 %1846
    %v1857 = vunpack.c.l.b16 %v1790
    %v1858 = vunpack.c.l.b16 %v1791
    %v1859 = vunpack.c.l.b16 %v1792
    %v1860 = vunpack.c.l.b16 %v1793
    %v1861 = vunpack.c.l.b16 %v1794
    %v1862 = vunpack.c.l.b16 %v1795
    %v1863 = vunpack.c.l.b16 %v1796
    %v1864 = vunpack.c.l.b16 %v1797
    %v1865 = vpack.c.b16 %v1858, %v1857
    %v1866 = vpack.c.b16 %v1860, %v1859
    %v1867 = vpack.c.b16 %v1862, %v1861
    %v1868 = vpack.c.b16 %v1864, %v1863
    %v1870 = vsel %vm75, %v1865, 0
    %v1873 = vsel %vm75, %v1866, 0
    %v1876 = vsel %vm75, %v1867, 0
    %v1879 = vsel %vm75, %v1868, 0
    %1881 = vmatprep.subr.bf16.mxu0 0
    %1882 = vmatpush1.bf16.msra.mxu0 0
    %1883 = vmatprep.subr.bf16.mxu0 0
    %1884 = vmatpush1.bf16.msra.mxu0 0
    %1885 = vmatprep.subr.bf16.mxu0 0
    %1886 = vmatpush1.bf16.msra.mxu0 0
    %1887 = vmatprep.subr.bf16.mxu0 0
    %1888 = vmatpush1.bf16.msra.mxu0 0
    %1889 = vmatprep.subr.bf16.mxu0 0
    %1890 = vmatpush1.bf16.msra.mxu0 0
    %1891 = vmatprep.subr.bf16.mxu0 0
    %1892 = vmatpush1.bf16.msra.mxu0 0
    %1893 = vmatprep.subr.bf16.mxu0 0
    %1894 = vmatpush1.bf16.msra.mxu0 %v1799
    %1895 = vmatprep.subr.bf16.mxu0 0
    %1896 = vmatpush1.bf16.msra.mxu0 %v1798
    %1897 = vmatprep.subr.bf16.mxu0 0
    %1898 = vmatpush2.bf16.msra.mxu0 0
    %1899 = vmatprep.subr.bf16.mxu0 0
    %1900 = vmatpush2.bf16.msra.mxu0 0
    %1901 = vmatprep.subr.bf16.mxu0 0
    %1902 = vmatpush2.bf16.msra.mxu0 0
    %1903 = vmatprep.subr.bf16.mxu0 0
    %1904 = vmatpush2.bf16.msra.mxu0 0
    %1905 = vmatprep.subr.bf16.mxu0 0
    %1906 = vmatpush2.bf16.msra.mxu0 0
    %1907 = vmatprep.subr.bf16.mxu0 0
    %1908 = vmatpush2.bf16.msra.mxu0 0
    %1909 = vmatprep.subr.bf16.mxu0 0
    %1910 = vmatpush2.bf16.msra.mxu0 0
    %1911 = vmatprep.subr.bf16.mxu0 0
    %1912 = vmatpush2.bf16.msra.mxu0 0
    %1913 = vmatprep.mubr.bf16.mxu0 0
    %1914 = vmatmul.mubr.bf16.gmra.mxu0 %v1870
    %v1915 = vpop.f32.mrf.mxu0
    %v1916 = vadd.f32 %v1812, %v1915
    %v1917 = vpop.f32.mrf.mxu0
    %v1918 = vpop.f32.mrf.mxu0
    %v1919 = vadd.f32 %v1817, %v1918
    %v1920 = vpop.f32.mrf.mxu0
    %1921 = vmatprep.mubr.bf16.mxu0 0
    %1922 = vmatmul.mubr.bf16.gmra.mxu0 %v1873
    %v1923 = vpop.f32.mrf.mxu0
    %v1924 = vadd.f32 %v1822, %v1923
    %v1925 = vpop.f32.mrf.mxu0
    %v1926 = vpop.f32.mrf.mxu0
    %v1927 = vadd.f32 %v1827, %v1926
    %v1928 = vpop.f32.mrf.mxu0
    %1929 = vmatprep.mubr.bf16.mxu0 0
    %1930 = vmatmul.mubr.bf16.gmra.mxu0 %v1876
    %v1931 = vpop.f32.mrf.mxu0
    %v1932 = vadd.f32 %v1832, %v1931
    %v1933 = vpop.f32.mrf.mxu0
    %v1934 = vpop.f32.mrf.mxu0
    %v1935 = vadd.f32 %v1837, %v1934
    %v1936 = vpop.f32.mrf.mxu0
    %1937 = vmatprep.mubr.bf16.mxu0 0
    %1938 = vmatmul.mubr.bf16.gmra.mxu0 %v1879
    %v1939 = vpop.f32.mrf.mxu0
    %v1940 = vadd.f32 %v1842, %v1939
    %v1941 = vpop.f32.mrf.mxu0
    %v1942 = vpop.f32.mrf.mxu0
    %v1943 = vadd.f32 %v1847, %v1942
    %v1944 = vpop.f32.mrf.mxu0
    %1945 = vdwg.mxu0
    %v1946 = vmax.f32 %v1916, 0.0
    %v1947 = vmax.f32 %v1919, 0.0
    %v1948 = vmax.f32 %v1924, 0.0
    %v1949 = vmax.f32 %v1927, 0.0
    %v1950 = vmax.f32 %v1932, 0.0
    %v1951 = vmax.f32 %v1935, 0.0
    %v1952 = vmax.f32 %v1940, 0.0
    %v1953 = vmax.f32 %v1943, 0.0
    %s1954 = scalar_lea.vmem %s3, 48
    %v1955 = vld [vmem:[%s1954] sm:$0xf]
    %v1956 = vld [vmem:[%s1954 + $0x4] sm:$0xf]
    %v1957 = vld [vmem:[%s1954 + $0x8] sm:$0xf]
    %v1958 = vld [vmem:[%s1954 + $0xc] sm:$0xf]
    %v1959 = vpack.c.bf16 %v1947, %v1946
    %v1960 = vpack.c.bf16 %v1949, %v1948
    %v1961 = vpack.c.bf16 %v1951, %v1950
    %v1962 = vpack.c.bf16 %v1953, %v1952
    %1963 = vset.pattern.permute.xlu0 1
    %1964 = vperm.xlu0 %1963, %v1607
    %v1965 = vpop.permute.xlu0 %1964
    %1967 = vset.pattern.permute.xlu0 1
    %1968 = vperm.xlu0 %1967, %v1608
    %v1969 = vpop.permute.xlu0 %1968
    %1971 = vset.pattern.permute.xlu0 1
    %1972 = vperm.xlu0 %1971, %v1609
    %v1973 = vpop.permute.xlu0 %1972
    %1975 = vset.pattern.permute.xlu0 1
    %1976 = vperm.xlu0 %1975, %v1610
    %v1977 = vpop.permute.xlu0 %1976
    %v1983 = vunpack.c.l.b16 %v1955
    %v1984 = vunpack.c.l.b16 %v1956
    %v1985 = vunpack.c.l.b16 %v1957
    %v1986 = vunpack.c.l.b16 %v1958
    %v1987 = vpack.c.b16 %v1984, %v1983
    %v1988 = vpack.c.b16 %v1986, %v1985
    %v1990 = vsel %vm416, %v1987, 0
    %v1993 = vsel %vm416, %v1988, 0
    %1995 = vmatprep.subr.bf16.mxu0 0
    %1996 = vmatpush1.bf16.msra.mxu0 0
    %1997 = vmatprep.subr.bf16.mxu0 0
    %1998 = vmatpush1.bf16.msra.mxu0 0
    %1999 = vmatprep.subr.bf16.mxu0 0
    %2000 = vmatpush1.bf16.msra.mxu0 0
    %2001 = vmatprep.subr.bf16.mxu0 0
    %2002 = vmatpush1.bf16.msra.mxu0 0
    %2003 = vmatprep.subr.bf16.mxu0 0
    %2004 = vmatpush1.bf16.msra.mxu0 %v1962
    %2005 = vmatprep.subr.bf16.mxu0 0
    %2006 = vmatpush1.bf16.msra.mxu0 %v1961
    %2007 = vmatprep.subr.bf16.mxu0 0
    %2008 = vmatpush1.bf16.msra.mxu0 %v1960
    %2009 = vmatprep.subr.bf16.mxu0 0
    %2010 = vmatpush1.bf16.msra.mxu0 %v1959
    %2011 = vmatprep.subr.bf16.mxu0 0
    %2012 = vmatpush2.bf16.msra.mxu0 0
    %2013 = vmatprep.subr.bf16.mxu0 0
    %2014 = vmatpush2.bf16.msra.mxu0 0
    %2015 = vmatprep.subr.bf16.mxu0 0
    %2016 = vmatpush2.bf16.msra.mxu0 0
    %2017 = vmatprep.subr.bf16.mxu0 0
    %2018 = vmatpush2.bf16.msra.mxu0 0
    %2019 = vmatprep.subr.bf16.mxu0 0
    %2020 = vmatpush2.bf16.msra.mxu0 0
    %2021 = vmatprep.subr.bf16.mxu0 0
    %2022 = vmatpush2.bf16.msra.mxu0 0
    %2023 = vmatprep.subr.bf16.mxu0 0
    %2024 = vmatpush2.bf16.msra.mxu0 0
    %2025 = vmatprep.subr.bf16.mxu0 0
    %2026 = vmatpush2.bf16.msra.mxu0 0
    %2027 = vmatprep.mubr.bf16.mxu0 0
    %2028 = vmatmul.mubr.bf16.gmra.mxu0 %v1990
    %v2029 = vpop.f32.mrf.mxu0
    %v2030 = vadd.f32 %v1965, %v2029
    %v2031 = vpop.f32.mrf.mxu0
    %v2032 = vpop.f32.mrf.mxu0
    %v2033 = vadd.f32 %v1969, %v2032
    %v2034 = vpop.f32.mrf.mxu0
    %2035 = vmatprep.mubr.bf16.mxu0 0
    %2036 = vmatmul.mubr.bf16.gmra.mxu0 %v1993
    %v2037 = vpop.f32.mrf.mxu0
    %v2038 = vadd.f32 %v1973, %v2037
    %v2039 = vpop.f32.mrf.mxu0
    %v2040 = vpop.f32.mrf.mxu0
    %v2041 = vadd.f32 %v1977, %v2040
    %v2042 = vpop.f32.mrf.mxu0
    %2043 = vdwg.mxu0
    %v2044 = vadd.f32 %v1785, %v2030
    %v2045 = vadd.f32 %v1786, %v2033
    %v2046 = vadd.f32 %v1787, %v2038
    %v2047 = vadd.f32 %v1788, %v2041
    %v2048 = vsel %vm135, %v2044, 0.0
    %v2049 = vsel %vm135, %v2045, 0.0
    %v2050 = vadd.f32 %v2048, %v2049
    %v2051 = vsel %vm135, %v2046, 0.0
    %v2052 = vadd.f32 %v2050, %v2051
    %v2053 = vsel %vm135, %v2047, 0.0
    %v2054 = vadd.f32 %v2052, %v2053
    %v2055 = vrot.slane %v2054, 4
    %v2056 = vadd.f32 %v2054, %v2055
    %v2057 = vrot.slane %v2056, 2
    %v2058 = vadd.f32 %v2056, %v2057
    %v2059 = vrot.slane %v2058, 1
    %v2060 = vadd.f32 %v2058, %v2059
    %v2061 = vmul.f32 %v2060, %v149
    %v2062 = vsub.f32 %v2044, %v2061
    %v2063 = vsub.f32 %v2045, %v2061
    %v2064 = vsub.f32 %v2046, %v2061
    %v2065 = vsub.f32 %v2047, %v2061
    %v2066 = vmul.f32 %v2062, %v2062
    %v2067 = vmul.f32 %v2063, %v2063
    %v2068 = vmul.f32 %v2064, %v2064
    %v2069 = vmul.f32 %v2065, %v2065
    %v2070 = vsel %vm135, %v2066, 0.0
    %v2071 = vsel %vm135, %v2067, 0.0
    %v2072 = vadd.f32 %v2070, %v2071
    %v2073 = vsel %vm135, %v2068, 0.0
    %v2074 = vadd.f32 %v2072, %v2073
    %v2075 = vsel %vm135, %v2069, 0.0
    %v2076 = vadd.f32 %v2074, %v2075
    %v2077 = vrot.slane %v2076, 4
    %v2078 = vadd.f32 %v2076, %v2077
    %v2079 = vrot.slane %v2078, 2
    %v2080 = vadd.f32 %v2078, %v2079
    %v2081 = vrot.slane %v2080, 1
    %v2082 = vadd.f32 %v2080, %v2081
    %v2083 = vmul.f32 %v2082, %v149
    %v2084 = vadd.f32 %v2083, 1e-05
    %v2085 = vrsqrt.pop %v2084
    %v2086 = vmul.f32 %v2062, %v2085
    %v2087 = vmul.f32 %v2063, %v2085
    %v2088 = vmul.f32 %v2064, %v2085
    %v2089 = vmul.f32 %v2065, %v2085
    %2090 = vset.pattern.permute.xlu0 4
    %2091 = vperm.xlu0 %2090, %v1607
    %v2092 = vpop.permute.xlu0 %2091
    %2094 = vset.pattern.permute.xlu0 4
    %2095 = vperm.xlu0 %2094, %v1608
    %v2096 = vpop.permute.xlu0 %2095
    %2098 = vset.pattern.permute.xlu0 4
    %2099 = vperm.xlu0 %2098, %v1609
    %v2100 = vpop.permute.xlu0 %2099
    %2102 = vset.pattern.permute.xlu0 4
    %2103 = vperm.xlu0 %2102, %v1610
    %v2104 = vpop.permute.xlu0 %2103
    %v2106 = vmul.f32 %v2086, %v2092
    %v2107 = vmul.f32 %v2087, %v2096
    %v2108 = vmul.f32 %v2088, %v2100
    %v2109 = vmul.f32 %v2089, %v2104
    %2110 = vset.pattern.permute.xlu0 5
    %2111 = vperm.xlu0 %2110, %v1607
    %v2112 = vpop.permute.xlu0 %2111
    %2114 = vset.pattern.permute.xlu0 5
    %2115 = vperm.xlu0 %2114, %v1608
    %v2116 = vpop.permute.xlu0 %2115
    %2118 = vset.pattern.permute.xlu0 5
    %2119 = vperm.xlu0 %2118, %v1609
    %v2120 = vpop.permute.xlu0 %2119
    %2122 = vset.pattern.permute.xlu0 5
    %2123 = vperm.xlu0 %2122, %v1610
    %v2124 = vpop.permute.xlu0 %2123
    %v2126 = vadd.f32 %v2106, %v2112
    %v2127 = vadd.f32 %v2107, %v2116
    %v2128 = vadd.f32 %v2108, %v2120
    %v2129 = vadd.f32 %v2109, %v2124
    %s2130 = scalar_lea.vmem %s4, 128
    %v2131 = vld [vmem:[%s2130] sm:$0xff]
    %v2132 = vld [vmem:[%s2130 + $0x8] sm:$0xff]
    %v2133 = vld [vmem:[%s2130 + $0x10] sm:$0xff]
    %v2134 = vld [vmem:[%s2130 + $0x18] sm:$0xff]
    %s2135 = scalar_lea.vmem %s1, 64
    %v2136 = vld [vmem:[%s2135] sm:$0xf]
    %v2137 = vld [vmem:[%s2135 + $0x4] sm:$0xf]
    %v2138 = vld [vmem:[%s2135 + $0x8] sm:$0xf]
    %v2139 = vld [vmem:[%s2135 + $0xc] sm:$0xf]
    %v2140 = vpack.c.bf16 %v2127, %v2126
    %v2141 = vpack.c.bf16 %v2129, %v2128
    %2143 = vset.pattern.permute.xlu0 0
    %2144 = vperm.xlu0 %2143, %v2131
    %v2145 = vpop.permute.xlu0 %2144
    %2148 = vset.pattern.permute.xlu0 0
    %2149 = vperm.xlu0 %2148, %v2132
    %v2150 = vpop.permute.xlu0 %2149
    %2153 = vset.pattern.permute.xlu0 0
    %2154 = vperm.xlu0 %2153, %v2133
    %v2155 = vpop.permute.xlu0 %2154
    %2158 = vset.pattern.permute.xlu0 0
    %2159 = vperm.xlu0 %2158, %v2134
    %v2160 = vpop.permute.xlu0 %2159
    %v2166 = vunpack.c.l.b16 %v2136
    %v2167 = vunpack.c.l.b16 %v2137
    %v2168 = vunpack.c.l.b16 %v2138
    %v2169 = vunpack.c.l.b16 %v2139
    %v2170 = vpack.c.b16 %v2167, %v2166
    %v2171 = vpack.c.b16 %v2169, %v2168
    %v2173 = vsel %vm75, %v2170, 0
    %v2176 = vsel %vm75, %v2171, 0
    %2178 = vmatprep.subr.bf16.mxu0 0
    %2179 = vmatpush1.bf16.msra.mxu0 0
    %2180 = vmatprep.subr.bf16.mxu0 0
    %2181 = vmatpush1.bf16.msra.mxu0 0
    %2182 = vmatprep.subr.bf16.mxu0 0
    %2183 = vmatpush1.bf16.msra.mxu0 0
    %2184 = vmatprep.subr.bf16.mxu0 0
    %2185 = vmatpush1.bf16.msra.mxu0 0
    %2186 = vmatprep.subr.bf16.mxu0 0
    %2187 = vmatpush1.bf16.msra.mxu0 0
    %2188 = vmatprep.subr.bf16.mxu0 0
    %2189 = vmatpush1.bf16.msra.mxu0 0
    %2190 = vmatprep.subr.bf16.mxu0 0
    %2191 = vmatpush1.bf16.msra.mxu0 %v2141
    %2192 = vmatprep.subr.bf16.mxu0 0
    %2193 = vmatpush1.bf16.msra.mxu0 %v2140
    %2194 = vmatprep.subr.bf16.mxu0 0
    %2195 = vmatpush2.bf16.msra.mxu0 0
    %2196 = vmatprep.subr.bf16.mxu0 0
    %2197 = vmatpush2.bf16.msra.mxu0 0
    %2198 = vmatprep.subr.bf16.mxu0 0
    %2199 = vmatpush2.bf16.msra.mxu0 0
    %2200 = vmatprep.subr.bf16.mxu0 0
    %2201 = vmatpush2.bf16.msra.mxu0 0
    %2202 = vmatprep.subr.bf16.mxu0 0
    %2203 = vmatpush2.bf16.msra.mxu0 0
    %2204 = vmatprep.subr.bf16.mxu0 0
    %2205 = vmatpush2.bf16.msra.mxu0 0
    %2206 = vmatprep.subr.bf16.mxu0 0
    %2207 = vmatpush2.bf16.msra.mxu0 0
    %2208 = vmatprep.subr.bf16.mxu0 0
    %2209 = vmatpush2.bf16.msra.mxu0 0
    %2210 = vmatprep.mubr.bf16.mxu0 0
    %2211 = vmatmul.mubr.bf16.gmra.mxu0 %v2173
    %v2212 = vpop.f32.mrf.mxu0
    %v2213 = vadd.f32 %v2145, %v2212
    %v2214 = vpop.f32.mrf.mxu0
    %v2215 = vpop.f32.mrf.mxu0
    %v2216 = vadd.f32 %v2150, %v2215
    %v2217 = vpop.f32.mrf.mxu0
    %2218 = vmatprep.mubr.bf16.mxu0 0
    %2219 = vmatmul.mubr.bf16.gmra.mxu0 %v2176
    %v2220 = vpop.f32.mrf.mxu0
    %v2221 = vadd.f32 %v2155, %v2220
    %v2222 = vpop.f32.mrf.mxu0
    %v2223 = vpop.f32.mrf.mxu0
    %v2224 = vadd.f32 %v2160, %v2223
    %v2225 = vpop.f32.mrf.mxu0
    %2226 = vdwg.mxu0
    %v2227 = vadd.f32 %v2126, %v2213
    %v2228 = vadd.f32 %v2127, %v2216
    %v2229 = vadd.f32 %v2128, %v2221
    %v2230 = vadd.f32 %v2129, %v2224
    %v2231 = vsel %vm135, %v2227, 0.0
    %v2232 = vsel %vm135, %v2228, 0.0
    %v2233 = vadd.f32 %v2231, %v2232
    %v2234 = vsel %vm135, %v2229, 0.0
    %v2235 = vadd.f32 %v2233, %v2234
    %v2236 = vsel %vm135, %v2230, 0.0
    %v2237 = vadd.f32 %v2235, %v2236
    %v2238 = vrot.slane %v2237, 4
    %v2239 = vadd.f32 %v2237, %v2238
    %v2240 = vrot.slane %v2239, 2
    %v2241 = vadd.f32 %v2239, %v2240
    %v2242 = vrot.slane %v2241, 1
    %v2243 = vadd.f32 %v2241, %v2242
    %v2244 = vmul.f32 %v2243, %v149
    %v2245 = vsub.f32 %v2227, %v2244
    %v2246 = vsub.f32 %v2228, %v2244
    %v2247 = vsub.f32 %v2229, %v2244
    %v2248 = vsub.f32 %v2230, %v2244
    %v2249 = vmul.f32 %v2245, %v2245
    %v2250 = vmul.f32 %v2246, %v2246
    %v2251 = vmul.f32 %v2247, %v2247
    %v2252 = vmul.f32 %v2248, %v2248
    %v2253 = vsel %vm135, %v2249, 0.0
    %v2254 = vsel %vm135, %v2250, 0.0
    %v2255 = vadd.f32 %v2253, %v2254
    %v2256 = vsel %vm135, %v2251, 0.0
    %v2257 = vadd.f32 %v2255, %v2256
    %v2258 = vsel %vm135, %v2252, 0.0
    %v2259 = vadd.f32 %v2257, %v2258
    %v2260 = vrot.slane %v2259, 4
    %v2261 = vadd.f32 %v2259, %v2260
    %v2262 = vrot.slane %v2261, 2
    %v2263 = vadd.f32 %v2261, %v2262
    %v2264 = vrot.slane %v2263, 1
    %v2265 = vadd.f32 %v2263, %v2264
    %v2266 = vmul.f32 %v2265, %v149
    %v2267 = vadd.f32 %v2266, 1e-05
    %v2268 = vrsqrt.pop %v2267
    %v2269 = vmul.f32 %v2245, %v2268
    %v2270 = vmul.f32 %v2246, %v2268
    %v2271 = vmul.f32 %v2247, %v2268
    %v2272 = vmul.f32 %v2248, %v2268
    %2273 = vset.pattern.permute.xlu0 2
    %2274 = vperm.xlu0 %2273, %v2131
    %v2275 = vpop.permute.xlu0 %2274
    %2277 = vset.pattern.permute.xlu0 2
    %2278 = vperm.xlu0 %2277, %v2132
    %v2279 = vpop.permute.xlu0 %2278
    %2281 = vset.pattern.permute.xlu0 2
    %2282 = vperm.xlu0 %2281, %v2133
    %v2283 = vpop.permute.xlu0 %2282
    %2285 = vset.pattern.permute.xlu0 2
    %2286 = vperm.xlu0 %2285, %v2134
    %v2287 = vpop.permute.xlu0 %2286
    %v2289 = vmul.f32 %v2269, %v2275
    %v2290 = vmul.f32 %v2270, %v2279
    %v2291 = vmul.f32 %v2271, %v2283
    %v2292 = vmul.f32 %v2272, %v2287
    %2293 = vset.pattern.permute.xlu0 3
    %2294 = vperm.xlu0 %2293, %v2131
    %v2295 = vpop.permute.xlu0 %2294
    %2297 = vset.pattern.permute.xlu0 3
    %2298 = vperm.xlu0 %2297, %v2132
    %v2299 = vpop.permute.xlu0 %2298
    %2301 = vset.pattern.permute.xlu0 3
    %2302 = vperm.xlu0 %2301, %v2133
    %v2303 = vpop.permute.xlu0 %2302
    %2305 = vset.pattern.permute.xlu0 3
    %2306 = vperm.xlu0 %2305, %v2134
    %v2307 = vpop.permute.xlu0 %2306
    %v2309 = vadd.f32 %v2289, %v2295
    %v2310 = vadd.f32 %v2290, %v2299
    %v2311 = vadd.f32 %v2291, %v2303
    %v2312 = vadd.f32 %v2292, %v2307
    %s2313 = scalar_lea.vmem %s2, 128
    %v2314 = vld [vmem:[%s2313] sm:$0xf]
    %v2315 = vld [vmem:[%s2313 + $0x4] sm:$0xf]
    %v2316 = vld [vmem:[%s2313 + $0x8] sm:$0xf]
    %v2317 = vld [vmem:[%s2313 + $0xc] sm:$0xf]
    %v2318 = vld [vmem:[%s2313 + $0x10] sm:$0xf]
    %v2319 = vld [vmem:[%s2313 + $0x14] sm:$0xf]
    %v2320 = vld [vmem:[%s2313 + $0x18] sm:$0xf]
    %v2321 = vld [vmem:[%s2313 + $0x1c] sm:$0xf]
    %v2322 = vpack.c.bf16 %v2310, %v2309
    %v2323 = vpack.c.bf16 %v2312, %v2311
    %s2324 = scalar_lea.vmem %s5, 256
    %v2325 = vld [vmem:[%s2324] sm:$0xff]
    %v2326 = vld [vmem:[%s2324 + $0x8] sm:$0xff]
    %v2327 = vld [vmem:[%s2324 + $0x10] sm:$0xff]
    %v2328 = vld [vmem:[%s2324 + $0x18] sm:$0xff]
    %v2329 = vld [vmem:[%s2324 + $0x20] sm:$0xff]
    %v2330 = vld [vmem:[%s2324 + $0x28] sm:$0xff]
    %v2331 = vld [vmem:[%s2324 + $0x30] sm:$0xff]
    %v2332 = vld [vmem:[%s2324 + $0x38] sm:$0xff]
    %2334 = vset.pattern.permute.xlu0 0
    %2335 = vperm.xlu0 %2334, %v2325
    %v2336 = vpop.permute.xlu0 %2335
    %2339 = vset.pattern.permute.xlu0 0
    %2340 = vperm.xlu0 %2339, %v2326
    %v2341 = vpop.permute.xlu0 %2340
    %2344 = vset.pattern.permute.xlu0 0
    %2345 = vperm.xlu0 %2344, %v2327
    %v2346 = vpop.permute.xlu0 %2345
    %2349 = vset.pattern.permute.xlu0 0
    %2350 = vperm.xlu0 %2349, %v2328
    %v2351 = vpop.permute.xlu0 %2350
    %2354 = vset.pattern.permute.xlu0 0
    %2355 = vperm.xlu0 %2354, %v2329
    %v2356 = vpop.permute.xlu0 %2355
    %2359 = vset.pattern.permute.xlu0 0
    %2360 = vperm.xlu0 %2359, %v2330
    %v2361 = vpop.permute.xlu0 %2360
    %2364 = vset.pattern.permute.xlu0 0
    %2365 = vperm.xlu0 %2364, %v2331
    %v2366 = vpop.permute.xlu0 %2365
    %2369 = vset.pattern.permute.xlu0 0
    %2370 = vperm.xlu0 %2369, %v2332
    %v2371 = vpop.permute.xlu0 %2370
    %v2381 = vunpack.c.l.b16 %v2314
    %v2382 = vunpack.c.l.b16 %v2315
    %v2383 = vunpack.c.l.b16 %v2316
    %v2384 = vunpack.c.l.b16 %v2317
    %v2385 = vunpack.c.l.b16 %v2318
    %v2386 = vunpack.c.l.b16 %v2319
    %v2387 = vunpack.c.l.b16 %v2320
    %v2388 = vunpack.c.l.b16 %v2321
    %v2389 = vpack.c.b16 %v2382, %v2381
    %v2390 = vpack.c.b16 %v2384, %v2383
    %v2391 = vpack.c.b16 %v2386, %v2385
    %v2392 = vpack.c.b16 %v2388, %v2387
    %v2394 = vsel %vm75, %v2389, 0
    %v2397 = vsel %vm75, %v2390, 0
    %v2400 = vsel %vm75, %v2391, 0
    %v2403 = vsel %vm75, %v2392, 0
    %2405 = vmatprep.subr.bf16.mxu0 0
    %2406 = vmatpush1.bf16.msra.mxu0 0
    %2407 = vmatprep.subr.bf16.mxu0 0
    %2408 = vmatpush1.bf16.msra.mxu0 0
    %2409 = vmatprep.subr.bf16.mxu0 0
    %2410 = vmatpush1.bf16.msra.mxu0 0
    %2411 = vmatprep.subr.bf16.mxu0 0
    %2412 = vmatpush1.bf16.msra.mxu0 0
    %2413 = vmatprep.subr.bf16.mxu0 0
    %2414 = vmatpush1.bf16.msra.mxu0 0
    %2415 = vmatprep.subr.bf16.mxu0 0
    %2416 = vmatpush1.bf16.msra.mxu0 0
    %2417 = vmatprep.subr.bf16.mxu0 0
    %2418 = vmatpush1.bf16.msra.mxu0 %v2323
    %2419 = vmatprep.subr.bf16.mxu0 0
    %2420 = vmatpush1.bf16.msra.mxu0 %v2322
    %2421 = vmatprep.subr.bf16.mxu0 0
    %2422 = vmatpush2.bf16.msra.mxu0 0
    %2423 = vmatprep.subr.bf16.mxu0 0
    %2424 = vmatpush2.bf16.msra.mxu0 0
    %2425 = vmatprep.subr.bf16.mxu0 0
    %2426 = vmatpush2.bf16.msra.mxu0 0
    %2427 = vmatprep.subr.bf16.mxu0 0
    %2428 = vmatpush2.bf16.msra.mxu0 0
    %2429 = vmatprep.subr.bf16.mxu0 0
    %2430 = vmatpush2.bf16.msra.mxu0 0
    %2431 = vmatprep.subr.bf16.mxu0 0
    %2432 = vmatpush2.bf16.msra.mxu0 0
    %2433 = vmatprep.subr.bf16.mxu0 0
    %2434 = vmatpush2.bf16.msra.mxu0 0
    %2435 = vmatprep.subr.bf16.mxu0 0
    %2436 = vmatpush2.bf16.msra.mxu0 0
    %2437 = vmatprep.mubr.bf16.mxu0 0
    %2438 = vmatmul.mubr.bf16.gmra.mxu0 %v2394
    %v2439 = vpop.f32.mrf.mxu0
    %v2440 = vadd.f32 %v2336, %v2439
    %v2441 = vpop.f32.mrf.mxu0
    %v2442 = vpop.f32.mrf.mxu0
    %v2443 = vadd.f32 %v2341, %v2442
    %v2444 = vpop.f32.mrf.mxu0
    %2445 = vmatprep.mubr.bf16.mxu0 0
    %2446 = vmatmul.mubr.bf16.gmra.mxu0 %v2397
    %v2447 = vpop.f32.mrf.mxu0
    %v2448 = vadd.f32 %v2346, %v2447
    %v2449 = vpop.f32.mrf.mxu0
    %v2450 = vpop.f32.mrf.mxu0
    %v2451 = vadd.f32 %v2351, %v2450
    %v2452 = vpop.f32.mrf.mxu0
    %2453 = vmatprep.mubr.bf16.mxu0 0
    %2454 = vmatmul.mubr.bf16.gmra.mxu0 %v2400
    %v2455 = vpop.f32.mrf.mxu0
    %v2456 = vadd.f32 %v2356, %v2455
    %v2457 = vpop.f32.mrf.mxu0
    %v2458 = vpop.f32.mrf.mxu0
    %v2459 = vadd.f32 %v2361, %v2458
    %v2460 = vpop.f32.mrf.mxu0
    %2461 = vmatprep.mubr.bf16.mxu0 0
    %2462 = vmatmul.mubr.bf16.gmra.mxu0 %v2403
    %v2463 = vpop.f32.mrf.mxu0
    %v2464 = vadd.f32 %v2366, %v2463
    %v2465 = vpop.f32.mrf.mxu0
    %v2466 = vpop.f32.mrf.mxu0
    %v2467 = vadd.f32 %v2371, %v2466
    %v2468 = vpop.f32.mrf.mxu0
    %2469 = vdwg.mxu0
    %v2470 = vmax.f32 %v2440, 0.0
    %v2471 = vmax.f32 %v2443, 0.0
    %v2472 = vmax.f32 %v2448, 0.0
    %v2473 = vmax.f32 %v2451, 0.0
    %v2474 = vmax.f32 %v2456, 0.0
    %v2475 = vmax.f32 %v2459, 0.0
    %v2476 = vmax.f32 %v2464, 0.0
    %v2477 = vmax.f32 %v2467, 0.0
    %s2478 = scalar_lea.vmem %s3, 64
    %v2479 = vld [vmem:[%s2478] sm:$0xf]
    %v2480 = vld [vmem:[%s2478 + $0x4] sm:$0xf]
    %v2481 = vld [vmem:[%s2478 + $0x8] sm:$0xf]
    %v2482 = vld [vmem:[%s2478 + $0xc] sm:$0xf]
    %v2483 = vpack.c.bf16 %v2471, %v2470
    %v2484 = vpack.c.bf16 %v2473, %v2472
    %v2485 = vpack.c.bf16 %v2475, %v2474
    %v2486 = vpack.c.bf16 %v2477, %v2476
    %2487 = vset.pattern.permute.xlu0 1
    %2488 = vperm.xlu0 %2487, %v2131
    %v2489 = vpop.permute.xlu0 %2488
    %2491 = vset.pattern.permute.xlu0 1
    %2492 = vperm.xlu0 %2491, %v2132
    %v2493 = vpop.permute.xlu0 %2492
    %2495 = vset.pattern.permute.xlu0 1
    %2496 = vperm.xlu0 %2495, %v2133
    %v2497 = vpop.permute.xlu0 %2496
    %2499 = vset.pattern.permute.xlu0 1
    %2500 = vperm.xlu0 %2499, %v2134
    %v2501 = vpop.permute.xlu0 %2500
    %v2507 = vunpack.c.l.b16 %v2479
    %v2508 = vunpack.c.l.b16 %v2480
    %v2509 = vunpack.c.l.b16 %v2481
    %v2510 = vunpack.c.l.b16 %v2482
    %v2511 = vpack.c.b16 %v2508, %v2507
    %v2512 = vpack.c.b16 %v2510, %v2509
    %v2514 = vsel %vm416, %v2511, 0
    %v2517 = vsel %vm416, %v2512, 0
    %2519 = vmatprep.subr.bf16.mxu0 0
    %2520 = vmatpush1.bf16.msra.mxu0 0
    %2521 = vmatprep.subr.bf16.mxu0 0
    %2522 = vmatpush1.bf16.msra.mxu0 0
    %2523 = vmatprep.subr.bf16.mxu0 0
    %2524 = vmatpush1.bf16.msra.mxu0 0
    %2525 = vmatprep.subr.bf16.mxu0 0
    %2526 = vmatpush1.bf16.msra.mxu0 0
    %2527 = vmatprep.subr.bf16.mxu0 0
    %2528 = vmatpush1.bf16.msra.mxu0 %v2486
    %2529 = vmatprep.subr.bf16.mxu0 0
    %2530 = vmatpush1.bf16.msra.mxu0 %v2485
    %2531 = vmatprep.subr.bf16.mxu0 0
    %2532 = vmatpush1.bf16.msra.mxu0 %v2484
    %2533 = vmatprep.subr.bf16.mxu0 0
    %2534 = vmatpush1.bf16.msra.mxu0 %v2483
    %2535 = vmatprep.subr.bf16.mxu0 0
    %2536 = vmatpush2.bf16.msra.mxu0 0
    %2537 = vmatprep.subr.bf16.mxu0 0
    %2538 = vmatpush2.bf16.msra.mxu0 0
    %2539 = vmatprep.subr.bf16.mxu0 0
    %2540 = vmatpush2.bf16.msra.mxu0 0
    %2541 = vmatprep.subr.bf16.mxu0 0
    %2542 = vmatpush2.bf16.msra.mxu0 0
    %2543 = vmatprep.subr.bf16.mxu0 0
    %2544 = vmatpush2.bf16.msra.mxu0 0
    %2545 = vmatprep.subr.bf16.mxu0 0
    %2546 = vmatpush2.bf16.msra.mxu0 0
    %2547 = vmatprep.subr.bf16.mxu0 0
    %2548 = vmatpush2.bf16.msra.mxu0 0
    %2549 = vmatprep.subr.bf16.mxu0 0
    %2550 = vmatpush2.bf16.msra.mxu0 0
    %2551 = vmatprep.mubr.bf16.mxu0 0
    %2552 = vmatmul.mubr.bf16.gmra.mxu0 %v2514
    %v2553 = vpop.f32.mrf.mxu0
    %v2554 = vadd.f32 %v2489, %v2553
    %v2555 = vpop.f32.mrf.mxu0
    %v2556 = vpop.f32.mrf.mxu0
    %v2557 = vadd.f32 %v2493, %v2556
    %v2558 = vpop.f32.mrf.mxu0
    %2559 = vmatprep.mubr.bf16.mxu0 0
    %2560 = vmatmul.mubr.bf16.gmra.mxu0 %v2517
    %v2561 = vpop.f32.mrf.mxu0
    %v2562 = vadd.f32 %v2497, %v2561
    %v2563 = vpop.f32.mrf.mxu0
    %v2564 = vpop.f32.mrf.mxu0
    %v2565 = vadd.f32 %v2501, %v2564
    %v2566 = vpop.f32.mrf.mxu0
    %2567 = vdwg.mxu0
    %v2568 = vadd.f32 %v2309, %v2554
    %v2569 = vadd.f32 %v2310, %v2557
    %v2570 = vadd.f32 %v2311, %v2562
    %v2571 = vadd.f32 %v2312, %v2565
    %v2572 = vsel %vm135, %v2568, 0.0
    %v2573 = vsel %vm135, %v2569, 0.0
    %v2574 = vadd.f32 %v2572, %v2573
    %v2575 = vsel %vm135, %v2570, 0.0
    %v2576 = vadd.f32 %v2574, %v2575
    %v2577 = vsel %vm135, %v2571, 0.0
    %v2578 = vadd.f32 %v2576, %v2577
    %v2579 = vrot.slane %v2578, 4
    %v2580 = vadd.f32 %v2578, %v2579
    %v2581 = vrot.slane %v2580, 2
    %v2582 = vadd.f32 %v2580, %v2581
    %v2583 = vrot.slane %v2582, 1
    %v2584 = vadd.f32 %v2582, %v2583
    %v2585 = vmul.f32 %v2584, %v149
    %v2586 = vsub.f32 %v2568, %v2585
    %v2587 = vsub.f32 %v2569, %v2585
    %v2588 = vsub.f32 %v2570, %v2585
    %v2589 = vsub.f32 %v2571, %v2585
    %v2590 = vmul.f32 %v2586, %v2586
    %v2591 = vmul.f32 %v2587, %v2587
    %v2592 = vmul.f32 %v2588, %v2588
    %v2593 = vmul.f32 %v2589, %v2589
    %v2594 = vsel %vm135, %v2590, 0.0
    %v2595 = vsel %vm135, %v2591, 0.0
    %v2596 = vadd.f32 %v2594, %v2595
    %v2597 = vsel %vm135, %v2592, 0.0
    %v2598 = vadd.f32 %v2596, %v2597
    %v2599 = vsel %vm135, %v2593, 0.0
    %v2600 = vadd.f32 %v2598, %v2599
    %v2601 = vrot.slane %v2600, 4
    %v2602 = vadd.f32 %v2600, %v2601
    %v2603 = vrot.slane %v2602, 2
    %v2604 = vadd.f32 %v2602, %v2603
    %v2605 = vrot.slane %v2604, 1
    %v2606 = vadd.f32 %v2604, %v2605
    %v2607 = vmul.f32 %v2606, %v149
    %v2608 = vadd.f32 %v2607, 1e-05
    %v2609 = vrsqrt.pop %v2608
    %v2610 = vmul.f32 %v2586, %v2609
    %v2611 = vmul.f32 %v2587, %v2609
    %v2612 = vmul.f32 %v2588, %v2609
    %v2613 = vmul.f32 %v2589, %v2609
    %2614 = vset.pattern.permute.xlu0 4
    %2615 = vperm.xlu0 %2614, %v2131
    %v2616 = vpop.permute.xlu0 %2615
    %2618 = vset.pattern.permute.xlu0 4
    %2619 = vperm.xlu0 %2618, %v2132
    %v2620 = vpop.permute.xlu0 %2619
    %2622 = vset.pattern.permute.xlu0 4
    %2623 = vperm.xlu0 %2622, %v2133
    %v2624 = vpop.permute.xlu0 %2623
    %2626 = vset.pattern.permute.xlu0 4
    %2627 = vperm.xlu0 %2626, %v2134
    %v2628 = vpop.permute.xlu0 %2627
    %v2630 = vmul.f32 %v2610, %v2616
    %v2631 = vmul.f32 %v2611, %v2620
    %v2632 = vmul.f32 %v2612, %v2624
    %v2633 = vmul.f32 %v2613, %v2628
    %2634 = vset.pattern.permute.xlu0 5
    %2635 = vperm.xlu0 %2634, %v2131
    %v2636 = vpop.permute.xlu0 %2635
    %2638 = vset.pattern.permute.xlu0 5
    %2639 = vperm.xlu0 %2638, %v2132
    %v2640 = vpop.permute.xlu0 %2639
    %2642 = vset.pattern.permute.xlu0 5
    %2643 = vperm.xlu0 %2642, %v2133
    %v2644 = vpop.permute.xlu0 %2643
    %2646 = vset.pattern.permute.xlu0 5
    %2647 = vperm.xlu0 %2646, %v2134
    %v2648 = vpop.permute.xlu0 %2647
    %v2650 = vadd.f32 %v2630, %v2636
    %v2651 = vadd.f32 %v2631, %v2640
    %v2652 = vadd.f32 %v2632, %v2644
    %v2653 = vadd.f32 %v2633, %v2648
    %s2654 = scalar_lea.vmem %s4, 160
    %v2655 = vld [vmem:[%s2654] sm:$0xff]
    %v2656 = vld [vmem:[%s2654 + $0x8] sm:$0xff]
    %v2657 = vld [vmem:[%s2654 + $0x10] sm:$0xff]
    %v2658 = vld [vmem:[%s2654 + $0x18] sm:$0xff]
    %s2659 = scalar_lea.vmem %s1, 80
    %v2660 = vld [vmem:[%s2659] sm:$0xf]
    %v2661 = vld [vmem:[%s2659 + $0x4] sm:$0xf]
    %v2662 = vld [vmem:[%s2659 + $0x8] sm:$0xf]
    %v2663 = vld [vmem:[%s2659 + $0xc] sm:$0xf]
    %v2664 = vpack.c.bf16 %v2651, %v2650
    %v2665 = vpack.c.bf16 %v2653, %v2652
    %2667 = vset.pattern.permute.xlu0 0
    %2668 = vperm.xlu0 %2667, %v2655
    %v2669 = vpop.permute.xlu0 %2668
    %2672 = vset.pattern.permute.xlu0 0
    %2673 = vperm.xlu0 %2672, %v2656
    %v2674 = vpop.permute.xlu0 %2673
    %2677 = vset.pattern.permute.xlu0 0
    %2678 = vperm.xlu0 %2677, %v2657
    %v2679 = vpop.permute.xlu0 %2678
    %2682 = vset.pattern.permute.xlu0 0
    %2683 = vperm.xlu0 %2682, %v2658
    %v2684 = vpop.permute.xlu0 %2683
    %v2690 = vunpack.c.l.b16 %v2660
    %v2691 = vunpack.c.l.b16 %v2661
    %v2692 = vunpack.c.l.b16 %v2662
    %v2693 = vunpack.c.l.b16 %v2663
    %v2694 = vpack.c.b16 %v2691, %v2690
    %v2695 = vpack.c.b16 %v2693, %v2692
    %v2697 = vsel %vm75, %v2694, 0
    %v2700 = vsel %vm75, %v2695, 0
    %2702 = vmatprep.subr.bf16.mxu0 0
    %2703 = vmatpush1.bf16.msra.mxu0 0
    %2704 = vmatprep.subr.bf16.mxu0 0
    %2705 = vmatpush1.bf16.msra.mxu0 0
    %2706 = vmatprep.subr.bf16.mxu0 0
    %2707 = vmatpush1.bf16.msra.mxu0 0
    %2708 = vmatprep.subr.bf16.mxu0 0
    %2709 = vmatpush1.bf16.msra.mxu0 0
    %2710 = vmatprep.subr.bf16.mxu0 0
    %2711 = vmatpush1.bf16.msra.mxu0 0
    %2712 = vmatprep.subr.bf16.mxu0 0
    %2713 = vmatpush1.bf16.msra.mxu0 0
    %2714 = vmatprep.subr.bf16.mxu0 0
    %2715 = vmatpush1.bf16.msra.mxu0 %v2665
    %2716 = vmatprep.subr.bf16.mxu0 0
    %2717 = vmatpush1.bf16.msra.mxu0 %v2664
    %2718 = vmatprep.subr.bf16.mxu0 0
    %2719 = vmatpush2.bf16.msra.mxu0 0
    %2720 = vmatprep.subr.bf16.mxu0 0
    %2721 = vmatpush2.bf16.msra.mxu0 0
    %2722 = vmatprep.subr.bf16.mxu0 0
    %2723 = vmatpush2.bf16.msra.mxu0 0
    %2724 = vmatprep.subr.bf16.mxu0 0
    %2725 = vmatpush2.bf16.msra.mxu0 0
    %2726 = vmatprep.subr.bf16.mxu0 0
    %2727 = vmatpush2.bf16.msra.mxu0 0
    %2728 = vmatprep.subr.bf16.mxu0 0
    %2729 = vmatpush2.bf16.msra.mxu0 0
    %2730 = vmatprep.subr.bf16.mxu0 0
    %2731 = vmatpush2.bf16.msra.mxu0 0
    %2732 = vmatprep.subr.bf16.mxu0 0
    %2733 = vmatpush2.bf16.msra.mxu0 0
    %2734 = vmatprep.mubr.bf16.mxu0 0
    %2735 = vmatmul.mubr.bf16.gmra.mxu0 %v2697
    %v2736 = vpop.f32.mrf.mxu0
    %v2737 = vadd.f32 %v2669, %v2736
    %v2738 = vpop.f32.mrf.mxu0
    %v2739 = vpop.f32.mrf.mxu0
    %v2740 = vadd.f32 %v2674, %v2739
    %v2741 = vpop.f32.mrf.mxu0
    %2742 = vmatprep.mubr.bf16.mxu0 0
    %2743 = vmatmul.mubr.bf16.gmra.mxu0 %v2700
    %v2744 = vpop.f32.mrf.mxu0
    %v2745 = vadd.f32 %v2679, %v2744
    %v2746 = vpop.f32.mrf.mxu0
    %v2747 = vpop.f32.mrf.mxu0
    %v2748 = vadd.f32 %v2684, %v2747
    %v2749 = vpop.f32.mrf.mxu0
    %2750 = vdwg.mxu0
    %v2751 = vadd.f32 %v2650, %v2737
    %v2752 = vadd.f32 %v2651, %v2740
    %v2753 = vadd.f32 %v2652, %v2745
    %v2754 = vadd.f32 %v2653, %v2748
    %v2755 = vsel %vm135, %v2751, 0.0
    %v2756 = vsel %vm135, %v2752, 0.0
    %v2757 = vadd.f32 %v2755, %v2756
    %v2758 = vsel %vm135, %v2753, 0.0
    %v2759 = vadd.f32 %v2757, %v2758
    %v2760 = vsel %vm135, %v2754, 0.0
    %v2761 = vadd.f32 %v2759, %v2760
    %v2762 = vrot.slane %v2761, 4
    %v2763 = vadd.f32 %v2761, %v2762
    %v2764 = vrot.slane %v2763, 2
    %v2765 = vadd.f32 %v2763, %v2764
    %v2766 = vrot.slane %v2765, 1
    %v2767 = vadd.f32 %v2765, %v2766
    %v2768 = vmul.f32 %v2767, %v149
    %v2769 = vsub.f32 %v2751, %v2768
    %v2770 = vsub.f32 %v2752, %v2768
    %v2771 = vsub.f32 %v2753, %v2768
    %v2772 = vsub.f32 %v2754, %v2768
    %v2773 = vmul.f32 %v2769, %v2769
    %v2774 = vmul.f32 %v2770, %v2770
    %v2775 = vmul.f32 %v2771, %v2771
    %v2776 = vmul.f32 %v2772, %v2772
    %v2777 = vsel %vm135, %v2773, 0.0
    %v2778 = vsel %vm135, %v2774, 0.0
    %v2779 = vadd.f32 %v2777, %v2778
    %v2780 = vsel %vm135, %v2775, 0.0
    %v2781 = vadd.f32 %v2779, %v2780
    %v2782 = vsel %vm135, %v2776, 0.0
    %v2783 = vadd.f32 %v2781, %v2782
    %v2784 = vrot.slane %v2783, 4
    %v2785 = vadd.f32 %v2783, %v2784
    %v2786 = vrot.slane %v2785, 2
    %v2787 = vadd.f32 %v2785, %v2786
    %v2788 = vrot.slane %v2787, 1
    %v2789 = vadd.f32 %v2787, %v2788
    %v2790 = vmul.f32 %v2789, %v149
    %v2791 = vadd.f32 %v2790, 1e-05
    %v2792 = vrsqrt.pop %v2791
    %v2793 = vmul.f32 %v2769, %v2792
    %v2794 = vmul.f32 %v2770, %v2792
    %v2795 = vmul.f32 %v2771, %v2792
    %v2796 = vmul.f32 %v2772, %v2792
    %2797 = vset.pattern.permute.xlu0 2
    %2798 = vperm.xlu0 %2797, %v2655
    %v2799 = vpop.permute.xlu0 %2798
    %2801 = vset.pattern.permute.xlu0 2
    %2802 = vperm.xlu0 %2801, %v2656
    %v2803 = vpop.permute.xlu0 %2802
    %2805 = vset.pattern.permute.xlu0 2
    %2806 = vperm.xlu0 %2805, %v2657
    %v2807 = vpop.permute.xlu0 %2806
    %2809 = vset.pattern.permute.xlu0 2
    %2810 = vperm.xlu0 %2809, %v2658
    %v2811 = vpop.permute.xlu0 %2810
    %v2813 = vmul.f32 %v2793, %v2799
    %v2814 = vmul.f32 %v2794, %v2803
    %v2815 = vmul.f32 %v2795, %v2807
    %v2816 = vmul.f32 %v2796, %v2811
    %2817 = vset.pattern.permute.xlu0 3
    %2818 = vperm.xlu0 %2817, %v2655
    %v2819 = vpop.permute.xlu0 %2818
    %2821 = vset.pattern.permute.xlu0 3
    %2822 = vperm.xlu0 %2821, %v2656
    %v2823 = vpop.permute.xlu0 %2822
    %2825 = vset.pattern.permute.xlu0 3
    %2826 = vperm.xlu0 %2825, %v2657
    %v2827 = vpop.permute.xlu0 %2826
    %2829 = vset.pattern.permute.xlu0 3
    %2830 = vperm.xlu0 %2829, %v2658
    %v2831 = vpop.permute.xlu0 %2830
    %v2833 = vadd.f32 %v2813, %v2819
    %v2834 = vadd.f32 %v2814, %v2823
    %v2835 = vadd.f32 %v2815, %v2827
    %v2836 = vadd.f32 %v2816, %v2831
    %s2837 = scalar_lea.vmem %s2, 160
    %v2838 = vld [vmem:[%s2837] sm:$0xf]
    %v2839 = vld [vmem:[%s2837 + $0x4] sm:$0xf]
    %v2840 = vld [vmem:[%s2837 + $0x8] sm:$0xf]
    %v2841 = vld [vmem:[%s2837 + $0xc] sm:$0xf]
    %v2842 = vld [vmem:[%s2837 + $0x10] sm:$0xf]
    %v2843 = vld [vmem:[%s2837 + $0x14] sm:$0xf]
    %v2844 = vld [vmem:[%s2837 + $0x18] sm:$0xf]
    %v2845 = vld [vmem:[%s2837 + $0x1c] sm:$0xf]
    %v2846 = vpack.c.bf16 %v2834, %v2833
    %v2847 = vpack.c.bf16 %v2836, %v2835
    %s2848 = scalar_lea.vmem %s5, 320
    %v2849 = vld [vmem:[%s2848] sm:$0xff]
    %v2850 = vld [vmem:[%s2848 + $0x8] sm:$0xff]
    %v2851 = vld [vmem:[%s2848 + $0x10] sm:$0xff]
    %v2852 = vld [vmem:[%s2848 + $0x18] sm:$0xff]
    %v2853 = vld [vmem:[%s2848 + $0x20] sm:$0xff]
    %v2854 = vld [vmem:[%s2848 + $0x28] sm:$0xff]
    %v2855 = vld [vmem:[%s2848 + $0x30] sm:$0xff]
    %v2856 = vld [vmem:[%s2848 + $0x38] sm:$0xff]
    %2858 = vset.pattern.permute.xlu0 0
    %2859 = vperm.xlu0 %2858, %v2849
    %v2860 = vpop.permute.xlu0 %2859
    %2863 = vset.pattern.permute.xlu0 0
    %2864 = vperm.xlu0 %2863, %v2850
    %v2865 = vpop.permute.xlu0 %2864
    %2868 = vset.pattern.permute.xlu0 0
    %2869 = vperm.xlu0 %2868, %v2851
    %v2870 = vpop.permute.xlu0 %2869
    %2873 = vset.pattern.permute.xlu0 0
    %2874 = vperm.xlu0 %2873, %v2852
    %v2875 = vpop.permute.xlu0 %2874
    %2878 = vset.pattern.permute.xlu0 0
    %2879 = vperm.xlu0 %2878, %v2853
    %v2880 = vpop.permute.xlu0 %2879
    %2883 = vset.pattern.permute.xlu0 0
    %2884 = vperm.xlu0 %2883, %v2854
    %v2885 = vpop.permute.xlu0 %2884
    %2888 = vset.pattern.permute.xlu0 0
    %2889 = vperm.xlu0 %2888, %v2855
    %v2890 = vpop.permute.xlu0 %2889
    %2893 = vset.pattern.permute.xlu0 0
    %2894 = vperm.xlu0 %2893, %v2856
    %v2895 = vpop.permute.xlu0 %2894
    %v2905 = vunpack.c.l.b16 %v2838
    %v2906 = vunpack.c.l.b16 %v2839
    %v2907 = vunpack.c.l.b16 %v2840
    %v2908 = vunpack.c.l.b16 %v2841
    %v2909 = vunpack.c.l.b16 %v2842
    %v2910 = vunpack.c.l.b16 %v2843
    %v2911 = vunpack.c.l.b16 %v2844
    %v2912 = vunpack.c.l.b16 %v2845
    %v2913 = vpack.c.b16 %v2906, %v2905
    %v2914 = vpack.c.b16 %v2908, %v2907
    %v2915 = vpack.c.b16 %v2910, %v2909
    %v2916 = vpack.c.b16 %v2912, %v2911
    %v2918 = vsel %vm75, %v2913, 0
    %v2921 = vsel %vm75, %v2914, 0
    %v2924 = vsel %vm75, %v2915, 0
    %v2927 = vsel %vm75, %v2916, 0
    %2929 = vmatprep.subr.bf16.mxu0 0
    %2930 = vmatpush1.bf16.msra.mxu0 0
    %2931 = vmatprep.subr.bf16.mxu0 0
    %2932 = vmatpush1.bf16.msra.mxu0 0
    %2933 = vmatprep.subr.bf16.mxu0 0
    %2934 = vmatpush1.bf16.msra.mxu0 0
    %2935 = vmatprep.subr.bf16.mxu0 0
    %2936 = vmatpush1.bf16.msra.mxu0 0
    %2937 = vmatprep.subr.bf16.mxu0 0
    %2938 = vmatpush1.bf16.msra.mxu0 0
    %2939 = vmatprep.subr.bf16.mxu0 0
    %2940 = vmatpush1.bf16.msra.mxu0 0
    %2941 = vmatprep.subr.bf16.mxu0 0
    %2942 = vmatpush1.bf16.msra.mxu0 %v2847
    %2943 = vmatprep.subr.bf16.mxu0 0
    %2944 = vmatpush1.bf16.msra.mxu0 %v2846
    %2945 = vmatprep.subr.bf16.mxu0 0
    %2946 = vmatpush2.bf16.msra.mxu0 0
    %2947 = vmatprep.subr.bf16.mxu0 0
    %2948 = vmatpush2.bf16.msra.mxu0 0
    %2949 = vmatprep.subr.bf16.mxu0 0
    %2950 = vmatpush2.bf16.msra.mxu0 0
    %2951 = vmatprep.subr.bf16.mxu0 0
    %2952 = vmatpush2.bf16.msra.mxu0 0
    %2953 = vmatprep.subr.bf16.mxu0 0
    %2954 = vmatpush2.bf16.msra.mxu0 0
    %2955 = vmatprep.subr.bf16.mxu0 0
    %2956 = vmatpush2.bf16.msra.mxu0 0
    %2957 = vmatprep.subr.bf16.mxu0 0
    %2958 = vmatpush2.bf16.msra.mxu0 0
    %2959 = vmatprep.subr.bf16.mxu0 0
    %2960 = vmatpush2.bf16.msra.mxu0 0
    %2961 = vmatprep.mubr.bf16.mxu0 0
    %2962 = vmatmul.mubr.bf16.gmra.mxu0 %v2918
    %v2963 = vpop.f32.mrf.mxu0
    %v2964 = vadd.f32 %v2860, %v2963
    %v2965 = vpop.f32.mrf.mxu0
    %v2966 = vpop.f32.mrf.mxu0
    %v2967 = vadd.f32 %v2865, %v2966
    %v2968 = vpop.f32.mrf.mxu0
    %2969 = vmatprep.mubr.bf16.mxu0 0
    %2970 = vmatmul.mubr.bf16.gmra.mxu0 %v2921
    %v2971 = vpop.f32.mrf.mxu0
    %v2972 = vadd.f32 %v2870, %v2971
    %v2973 = vpop.f32.mrf.mxu0
    %v2974 = vpop.f32.mrf.mxu0
    %v2975 = vadd.f32 %v2875, %v2974
    %v2976 = vpop.f32.mrf.mxu0
    %2977 = vmatprep.mubr.bf16.mxu0 0
    %2978 = vmatmul.mubr.bf16.gmra.mxu0 %v2924
    %v2979 = vpop.f32.mrf.mxu0
    %v2980 = vadd.f32 %v2880, %v2979
    %v2981 = vpop.f32.mrf.mxu0
    %v2982 = vpop.f32.mrf.mxu0
    %v2983 = vadd.f32 %v2885, %v2982
    %v2984 = vpop.f32.mrf.mxu0
    %2985 = vmatprep.mubr.bf16.mxu0 0
    %2986 = vmatmul.mubr.bf16.gmra.mxu0 %v2927
    %v2987 = vpop.f32.mrf.mxu0
    %v2988 = vadd.f32 %v2890, %v2987
    %v2989 = vpop.f32.mrf.mxu0
    %v2990 = vpop.f32.mrf.mxu0
    %v2991 = vadd.f32 %v2895, %v2990
    %v2992 = vpop.f32.mrf.mxu0
    %2993 = vdwg.mxu0
    %v2994 = vmax.f32 %v2964, 0.0
    %v2995 = vmax.f32 %v2967, 0.0
    %v2996 = vmax.f32 %v2972, 0.0
    %v2997 = vmax.f32 %v2975, 0.0
    %v2998 = vmax.f32 %v2980, 0.0
    %v2999 = vmax.f32 %v2983, 0.0
    %v3000 = vmax.f32 %v2988, 0.0
    %v3001 = vmax.f32 %v2991, 0.0
    %s3002 = scalar_lea.vmem %s3, 80
    %v3003 = vld [vmem:[%s3002] sm:$0xf]
    %v3004 = vld [vmem:[%s3002 + $0x4] sm:$0xf]
    %v3005 = vld [vmem:[%s3002 + $0x8] sm:$0xf]
    %v3006 = vld [vmem:[%s3002 + $0xc] sm:$0xf]
    %v3007 = vpack.c.bf16 %v2995, %v2994
    %v3008 = vpack.c.bf16 %v2997, %v2996
    %v3009 = vpack.c.bf16 %v2999, %v2998
    %v3010 = vpack.c.bf16 %v3001, %v3000
    %3011 = vset.pattern.permute.xlu0 1
    %3012 = vperm.xlu0 %3011, %v2655
    %v3013 = vpop.permute.xlu0 %3012
    %3015 = vset.pattern.permute.xlu0 1
    %3016 = vperm.xlu0 %3015, %v2656
    %v3017 = vpop.permute.xlu0 %3016
    %3019 = vset.pattern.permute.xlu0 1
    %3020 = vperm.xlu0 %3019, %v2657
    %v3021 = vpop.permute.xlu0 %3020
    %3023 = vset.pattern.permute.xlu0 1
    %3024 = vperm.xlu0 %3023, %v2658
    %v3025 = vpop.permute.xlu0 %3024
    %v3031 = vunpack.c.l.b16 %v3003
    %v3032 = vunpack.c.l.b16 %v3004
    %v3033 = vunpack.c.l.b16 %v3005
    %v3034 = vunpack.c.l.b16 %v3006
    %v3035 = vpack.c.b16 %v3032, %v3031
    %v3036 = vpack.c.b16 %v3034, %v3033
    %v3038 = vsel %vm416, %v3035, 0
    %v3041 = vsel %vm416, %v3036, 0
    %3043 = vmatprep.subr.bf16.mxu0 0
    %3044 = vmatpush1.bf16.msra.mxu0 0
    %3045 = vmatprep.subr.bf16.mxu0 0
    %3046 = vmatpush1.bf16.msra.mxu0 0
    %3047 = vmatprep.subr.bf16.mxu0 0
    %3048 = vmatpush1.bf16.msra.mxu0 0
    %3049 = vmatprep.subr.bf16.mxu0 0
    %3050 = vmatpush1.bf16.msra.mxu0 0
    %3051 = vmatprep.subr.bf16.mxu0 0
    %3052 = vmatpush1.bf16.msra.mxu0 %v3010
    %3053 = vmatprep.subr.bf16.mxu0 0
    %3054 = vmatpush1.bf16.msra.mxu0 %v3009
    %3055 = vmatprep.subr.bf16.mxu0 0
    %3056 = vmatpush1.bf16.msra.mxu0 %v3008
    %3057 = vmatprep.subr.bf16.mxu0 0
    %3058 = vmatpush1.bf16.msra.mxu0 %v3007
    %3059 = vmatprep.subr.bf16.mxu0 0
    %3060 = vmatpush2.bf16.msra.mxu0 0
    %3061 = vmatprep.subr.bf16.mxu0 0
    %3062 = vmatpush2.bf16.msra.mxu0 0
    %3063 = vmatprep.subr.bf16.mxu0 0
    %3064 = vmatpush2.bf16.msra.mxu0 0
    %3065 = vmatprep.subr.bf16.mxu0 0
    %3066 = vmatpush2.bf16.msra.mxu0 0
    %3067 = vmatprep.subr.bf16.mxu0 0
    %3068 = vmatpush2.bf16.msra.mxu0 0
    %3069 = vmatprep.subr.bf16.mxu0 0
    %3070 = vmatpush2.bf16.msra.mxu0 0
    %3071 = vmatprep.subr.bf16.mxu0 0
    %3072 = vmatpush2.bf16.msra.mxu0 0
    %3073 = vmatprep.subr.bf16.mxu0 0
    %3074 = vmatpush2.bf16.msra.mxu0 0
    %3075 = vmatprep.mubr.bf16.mxu0 0
    %3076 = vmatmul.mubr.bf16.gmra.mxu0 %v3038
    %v3077 = vpop.f32.mrf.mxu0
    %v3078 = vadd.f32 %v3013, %v3077
    %v3079 = vpop.f32.mrf.mxu0
    %v3080 = vpop.f32.mrf.mxu0
    %v3081 = vadd.f32 %v3017, %v3080
    %v3082 = vpop.f32.mrf.mxu0
    %3083 = vmatprep.mubr.bf16.mxu0 0
    %3084 = vmatmul.mubr.bf16.gmra.mxu0 %v3041
    %v3085 = vpop.f32.mrf.mxu0
    %v3086 = vadd.f32 %v3021, %v3085
    %v3087 = vpop.f32.mrf.mxu0
    %v3088 = vpop.f32.mrf.mxu0
    %v3089 = vadd.f32 %v3025, %v3088
    %v3090 = vpop.f32.mrf.mxu0
    %3091 = vdwg.mxu0
    %v3092 = vadd.f32 %v2833, %v3078
    %v3093 = vadd.f32 %v2834, %v3081
    %v3094 = vadd.f32 %v2835, %v3086
    %v3095 = vadd.f32 %v2836, %v3089
    %v3096 = vsel %vm135, %v3092, 0.0
    %v3097 = vsel %vm135, %v3093, 0.0
    %v3098 = vadd.f32 %v3096, %v3097
    %v3099 = vsel %vm135, %v3094, 0.0
    %v3100 = vadd.f32 %v3098, %v3099
    %v3101 = vsel %vm135, %v3095, 0.0
    %v3102 = vadd.f32 %v3100, %v3101
    %v3103 = vrot.slane %v3102, 4
    %v3104 = vadd.f32 %v3102, %v3103
    %v3105 = vrot.slane %v3104, 2
    %v3106 = vadd.f32 %v3104, %v3105
    %v3107 = vrot.slane %v3106, 1
    %v3108 = vadd.f32 %v3106, %v3107
    %v3109 = vmul.f32 %v3108, %v149
    %v3110 = vsub.f32 %v3092, %v3109
    %v3111 = vsub.f32 %v3093, %v3109
    %v3112 = vsub.f32 %v3094, %v3109
    %v3113 = vsub.f32 %v3095, %v3109
    %v3114 = vmul.f32 %v3110, %v3110
    %v3115 = vmul.f32 %v3111, %v3111
    %v3116 = vmul.f32 %v3112, %v3112
    %v3117 = vmul.f32 %v3113, %v3113
    %v3118 = vsel %vm135, %v3114, 0.0
    %v3119 = vsel %vm135, %v3115, 0.0
    %v3120 = vadd.f32 %v3118, %v3119
    %v3121 = vsel %vm135, %v3116, 0.0
    %v3122 = vadd.f32 %v3120, %v3121
    %v3123 = vsel %vm135, %v3117, 0.0
    %v3124 = vadd.f32 %v3122, %v3123
    %v3125 = vrot.slane %v3124, 4
    %v3126 = vadd.f32 %v3124, %v3125
    %v3127 = vrot.slane %v3126, 2
    %v3128 = vadd.f32 %v3126, %v3127
    %v3129 = vrot.slane %v3128, 1
    %v3130 = vadd.f32 %v3128, %v3129
    %v3131 = vmul.f32 %v3130, %v149
    %v3132 = vadd.f32 %v3131, 1e-05
    %v3133 = vrsqrt.pop %v3132
    %v3134 = vmul.f32 %v3110, %v3133
    %v3135 = vmul.f32 %v3111, %v3133
    %v3136 = vmul.f32 %v3112, %v3133
    %v3137 = vmul.f32 %v3113, %v3133
    %3138 = vset.pattern.permute.xlu0 4
    %3139 = vperm.xlu0 %3138, %v2655
    %v3140 = vpop.permute.xlu0 %3139
    %3142 = vset.pattern.permute.xlu0 4
    %3143 = vperm.xlu0 %3142, %v2656
    %v3144 = vpop.permute.xlu0 %3143
    %3146 = vset.pattern.permute.xlu0 4
    %3147 = vperm.xlu0 %3146, %v2657
    %v3148 = vpop.permute.xlu0 %3147
    %3150 = vset.pattern.permute.xlu0 4
    %3151 = vperm.xlu0 %3150, %v2658
    %v3152 = vpop.permute.xlu0 %3151
    %v3154 = vmul.f32 %v3134, %v3140
    %v3155 = vmul.f32 %v3135, %v3144
    %v3156 = vmul.f32 %v3136, %v3148
    %v3157 = vmul.f32 %v3137, %v3152
    %3158 = vset.pattern.permute.xlu0 5
    %3159 = vperm.xlu0 %3158, %v2655
    %v3160 = vpop.permute.xlu0 %3159
    %3162 = vset.pattern.permute.xlu0 5
    %3163 = vperm.xlu0 %3162, %v2656
    %v3164 = vpop.permute.xlu0 %3163
    %3166 = vset.pattern.permute.xlu0 5
    %3167 = vperm.xlu0 %3166, %v2657
    %v3168 = vpop.permute.xlu0 %3167
    %3170 = vset.pattern.permute.xlu0 5
    %3171 = vperm.xlu0 %3170, %v2658
    %v3172 = vpop.permute.xlu0 %3171
    %v3174 = vadd.f32 %v3154, %v3160
    %v3175 = vadd.f32 %v3155, %v3164
    %v3176 = vadd.f32 %v3156, %v3168
    %v3177 = vadd.f32 %v3157, %v3172
    %v3178 = vld [vmem:[%s6] sm:$0xf]
    %v3179 = vpack.c.bf16 %v3175, %v3174
    %v3180 = vpack.c.bf16 %v3177, %v3176
    %v3181 = vld [vmem:[%s7] sm:$0xff]
    %3183 = vset.pattern.permute.xlu0 0
    %3184 = vperm.xlu0 %3183, %v3181
    %v3185 = vpop.permute.xlu0 %3184
    %v3188 = vsel %vm75, %v3178, 0
    %3190 = vmatprep.subr.bf16.mxu0 0
    %3191 = vmatpush1.bf16.msra.mxu0 0
    %3192 = vmatprep.subr.bf16.mxu0 0
    %3193 = vmatpush1.bf16.msra.mxu0 0
    %3194 = vmatprep.subr.bf16.mxu0 0
    %3195 = vmatpush1.bf16.msra.mxu0 0
    %3196 = vmatprep.subr.bf16.mxu0 0
    %3197 = vmatpush1.bf16.msra.mxu0 0
    %3198 = vmatprep.subr.bf16.mxu0 0
    %3199 = vmatpush1.bf16.msra.mxu0 0
    %3200 = vmatprep.subr.bf16.mxu0 0
    %3201 = vmatpush1.bf16.msra.mxu0 0
    %3202 = vmatprep.subr.bf16.mxu0 0
    %3203 = vmatpush1.bf16.msra.mxu0 %v3180
    %3204 = vmatprep.subr.bf16.mxu0 0
    %3205 = vmatpush1.bf16.msra.mxu0 %v3179
    %3206 = vmatprep.subr.bf16.mxu0 0
    %3207 = vmatpush2.bf16.msra.mxu0 0
    %3208 = vmatprep.subr.bf16.mxu0 0
    %3209 = vmatpush2.bf16.msra.mxu0 0
    %3210 = vmatprep.subr.bf16.mxu0 0
    %3211 = vmatpush2.bf16.msra.mxu0 0
    %3212 = vmatprep.subr.bf16.mxu0 0
    %3213 = vmatpush2.bf16.msra.mxu0 0
    %3214 = vmatprep.subr.bf16.mxu0 0
    %3215 = vmatpush2.bf16.msra.mxu0 0
    %3216 = vmatprep.subr.bf16.mxu0 0
    %3217 = vmatpush2.bf16.msra.mxu0 0
    %3218 = vmatprep.subr.bf16.mxu0 0
    %3219 = vmatpush2.bf16.msra.mxu0 0
    %3220 = vmatprep.subr.bf16.mxu0 0
    %3221 = vmatpush2.bf16.msra.mxu0 0
    %3222 = vmatprep.mubr.bf16.mxu0 0
    %3223 = vmatmul.mubr.bf16.gmra.mxu0 %v3188
    %v3224 = vpop.f32.mrf.mxu0
    %v3225 = vadd.f32 %v3185, %v3224
    %v3226 = vpop.f32.mrf.mxu0
    %v3227 = vpop.f32.mrf.mxu0
    %v3228 = vpop.f32.mrf.mxu0
    %3229 = vdwg.mxu0
    %3230 = vst.msk [vmem:[#allocation2] sm:$0xff] %vm135, %v3225
    // Predicated region
    $region34: #{_forward.1} parent=1 // pred_check
      _
    $region35: #{_forward.1} parent=1 // pred_check_branch
      %3232 = sbr.rel (0) target = $region37
    $region36: #{_forward.1} parent=1 // pred_region
      %s3234 = ssub.s32 128, 128
      %3235 = vsyncadd [#allocation3], %s3234
      %s3237 = sshll.u32 [#allocation2], 4
      %s3238 = int_to_ptr.vmem [resolvable:$true] %s3237
      %3240 = dma.vmem_to_hbm [thread:$0]  %s3238, 128, %s8, [#allocation3]
    $region37: #{_forward.1} parent=1 // pred_fallthru
      _
    // Predicated region
    $region38: #{_forward.1} parent=1 // pred_check
      _
    $region39: #{_forward.1} parent=1 // pred_check_branch
      %3242 = sbr.rel (0) target = $region41
    $region40: #{_forward.1} parent=1 // pred_region
      %3243 = dma.done [#allocation3], 128
    $region41: #{_forward.1} parent=1 // pred_fallthru
      _
    %3244 = vsyncpa [#allocation3], 1

</llo_original>
